<compile_context>
chip_gen: v6e
topology: v6e:2x2x1
jax: 0.10.0
libtpu: 0.0.40
codegen_flags: <defaults>
</compile_context>

<pallas_src>
import functools

import jax
import jax.numpy as jnp
import numpy as np
from jax.experimental import pallas as pl
from jax.experimental.pallas import tpu as pltpu

LEAKY_SLOPE = 0.01   # nn.LeakyReLU default
IN_EPS = 1e-5        # nn.InstanceNorm3d default (affine=False, no running stats)


def _round_up(x, m):
    return ((x + m - 1) // m) * m


def sse_conv2_kernel(params_ref, mask_ref, x_ref, e0_ref, e1_ref, *,
                     nb, cin, cout1, cout2, D, H, W, Wp, Lxp, Lc,
                     w1_off, wse_off, wse2_off, w2_off, b2_off):
    mask = mask_ref[...]                     # (1, Lc); 1.0 on valid voxels
    inv_cnt = 1.0 / float(D * H * W)

    for b in range(nb):                      # samples packed in this block
        # ---- conv1: 3x3x3, stride 1, pad 1 (b1 dropped: cancelled by IN) ---
        # Each of the cin*27 windows is built once (one lane-rotate + aligned
        # slice) and feeds cout1 independent accumulator chains.
        # TODO(synk): if the bundle dump shows the 216 scalar-weight splats
        # co-binding with the VALU MACs, pre-broadcast w1 into a small VMEM
        # array and use stride-0 sublane-broadcast loads instead.
        accs = [jnp.zeros((D, Lc), jnp.float32) for _ in range(cout1)]
        for ci in range(cin):
            for kd in range(3):
                # Sublane-offset ref load (kd = 1, 2 unaligned) is cheap at
                # this size; revisit with sublane rolls once D is tiled.
                plane = x_ref[b, ci, kd:kd + D, :]            # (D, Lxp)
                for kh in range(3):
                    for kw in range(3):
                        s = kh * Wp + kw                      # flat lane offset
                        if s == 0:
                            win = plane[:, :Lc]
                        else:
                            # win[q] = plane[q + s]; wrap garbage only lands at
                            # lanes >= Lxp - s >= Lc for valid output lanes.
                            win = pltpu.roll(plane, Lxp - s, axis=1)[:, :Lc]
                        base = w1_off + ci * 27 + kd * 9 + kh * 3 + kw
                        for co in range(cout1):
                            w = params_ref[base + co * cin * 27]
                            accs[co] = accs[co] + w * win

        # ---- InstanceNorm3d (two-pass masked stats) + LeakyReLU ------------
        e0ch = []
        for co in range(cout1):
            mean = jnp.sum(accs[co] * mask) * inv_cnt
            cm = (accs[co] - mean) * mask
            var = jnp.sum(cm * cm) * inv_cnt
            y = (accs[co] - mean) * jax.lax.rsqrt(var + IN_EPS)
            y = jnp.where(y >= 0, y, LEAKY_SLOPE * y)
            e0ch.append(y)

        # ---- fused spatial-SE gates -----------------------------------------
        # se  = sigmoid(sum_c wse[c]  * e0[c])
        # se2 = sigmoid(sum_c wse2[c] * (e0[c]*se)) = sigmoid(se * s2)
        # e0_out = e0 * se * se2   (exact rewrite of the module)
        s1 = jnp.zeros((D, Lc), jnp.float32)
        s2 = jnp.zeros((D, Lc), jnp.float32)
        for co in range(cout1):
            s1 = s1 + params_ref[wse_off + co] * e0ch[co]
            s2 = s2 + params_ref[wse2_off + co] * e0ch[co]
        se = jax.nn.sigmoid(s1)
        se2 = jax.nn.sigmoid(se * s2)
        gate = se * se2
        for co in range(cout1):
            e0ch[co] = e0ch[co] * gate
            e0_ref[b, co] = e0ch[co]

        # ---- conv2 (1x1x1) + bias --------------------------------------------
        # nn.Upsample(scale_factor=1, trilinear, align_corners=True) == identity.
        for c2 in range(cout2):
            acc2 = jnp.zeros((D, Lc), jnp.float32) + params_ref[b2_off + c2]
            for co in range(cout1):
                acc2 = acc2 + params_ref[w2_off + c2 * cout1 + co] * e0ch[co]
            e1_ref[b, c2] = acc2


def sse_conv2(x, w1, b1, wse, wse2, w2, b2):
    """Pallas forward of SSEConv2.  x: (N, Cin, D, H, W) float32.

    b1 is accepted for API parity but is mathematically cancelled by the
    affine-free InstanceNorm that follows conv1, so it is not sent to the
    kernel.
    """
    del b1  # exactly cancelled by InstanceNorm3d (affine=False)
    N, Cin, D, H, W = x.shape
    Cout1 = w1.shape[0]
    Cout2 = w2.shape[0]
    Dp, Hp, Wp = D + 2, H + 2, W + 2

    Lq = Hp * Wp                            # flattened padded in-plane length
    Lc = _round_up(Lq, 128)                 # lane-dense compute/store width
    # Extended width: left halo Wp+1 + data; window reads for valid lanes
    # reach at most index Lq + Wp, so Lxp >= Lq + Wp + 1 keeps them in bounds.
    Lxp = _round_up(Lq + Wp + 1, 128)

    # Batch packing: <=2 blocks ("parallel" -> both v7x TCs), ceil(N/2)
    # samples per block to amortize per-grid-step overhead.
    num_blocks = 2 if N >= 2 else 1
    Nb = -(-N // num_blocks)
    Npad = num_blocks * Nb

    # Single pad -> reshape -> lane-pad chain (fused by XLA into one pass):
    # zero-pad batch + spatial halo, flatten (Hp, Wp) onto the lane axis, add
    # the left halo of Wp+1 lanes and round up to Lxp.
    xpad = jnp.pad(x.astype(jnp.float32),
                   ((0, Npad - N), (0, 0), (1, 1), (1, 1), (1, 1)))
    xflat = xpad.reshape(Npad, Cin, Dp, Lq)
    xext = jnp.pad(xflat, ((0, 0), (0, 0), (0, 0),
                           (Wp + 1, Lxp - Lq - Wp - 1)))     # (Npad,Cin,Dp,Lxp)

    # Validity mask over the flattened padded plane (halo / pad columns -> 0).
    q = np.arange(Lc)
    hp, wp = q // Wp, q % Wp
    valid = (q < Lq) & (hp >= 1) & (hp <= H) & (wp >= 1) & (wp <= W)
    mask = jnp.asarray(valid.astype(np.float32)).reshape(1, Lc)

    # All scalar parameters packed into one SMEM vector (b1 dropped).
    w1f = w1.reshape(-1).astype(jnp.float32)
    wsef = wse.reshape(-1).astype(jnp.float32)
    wse2f = wse2.reshape(-1).astype(jnp.float32)
    w2f = w2.reshape(-1).astype(jnp.float32)
    b2f = b2.reshape(-1).astype(jnp.float32)
    w1_off = 0
    wse_off = w1_off + w1f.shape[0]
    wse2_off = wse_off + wsef.shape[0]
    w2_off = wse2_off + wse2f.shape[0]
    b2_off = w2_off + w2f.shape[0]
    params = jnp.concatenate([w1f, wsef, wse2f, w2f, b2f])

    kernel = functools.partial(
        sse_conv2_kernel, nb=Nb, cin=Cin, cout1=Cout1, cout2=Cout2,
        D=D, H=H, W=W, Wp=Wp, Lxp=Lxp, Lc=Lc,
        w1_off=w1_off, wse_off=wse_off, wse2_off=wse2_off,
        w2_off=w2_off, b2_off=b2_off)

    in_specs = [
        pl.BlockSpec(memory_space=pltpu.MemorySpace.SMEM),           # params
        pl.BlockSpec((1, Lc), lambda n: (0, 0)),                     # mask
        pl.BlockSpec((Nb, Cin, Dp, Lxp), lambda n: (n, 0, 0, 0)),    # x
    ]
    out_specs = [
        pl.BlockSpec((Nb, Cout1, D, Lc), lambda n: (n, 0, 0, 0)),
        pl.BlockSpec((Nb, Cout2, D, Lc), lambda n: (n, 0, 0, 0)),
    ]
    out_shape = (
        jax.ShapeDtypeStruct((Npad, Cout1, D, Lc), jnp.float32),
        jax.ShapeDtypeStruct((Npad, Cout2, D, Lc), jnp.float32),
    )

    flops = int(2 * Npad * D * H * W *
                (Cout1 * Cin * 27 + Cout2 * Cout1 + 2 * Cout1))
    transcendentals = int(2 * Npad * D * Lc)
    bytes_accessed = int(4 * (xext.size + mask.size + params.size
                              + Npad * (Cout1 + Cout2) * D * Lc))

    # TODO(synk): for production-sized volumes, add a D-tiled grid axis with a
    # 1-voxel halo (+ lane-axis tiling when Hp*Wp is large), a separate stats
    # pass for InstanceNorm, and explicit vmem_limit_bytes budgeting for
    # v7x's 64 MiB VMEM / v5e's 16 MiB scoped default.
    # TODO(synk): if upstream activations are bf16, DMA x in bf16 and cast to
    # f32 inside the kernel (halves input HBM traffic).
    e0f, e1f = pl.pallas_call(
        kernel,
        out_shape=out_shape,
        grid=(num_blocks,),
        in_specs=in_specs,
        out_specs=out_specs,
        compiler_params=pltpu.CompilerParams(
            dimension_semantics=("parallel",)),
        cost_estimate=pl.CostEstimate(
            flops=flops, transcendentals=transcendentals,
            bytes_accessed=bytes_accessed),
    )(params, mask, xext)

    # Strip lane padding / spatial halo (layout plumbing only).
    # TODO(synk): when chained with the next WingsNet block, keep e0/e1
    # lane-dense and strip/mask inside the consumer's index_map instead of
    # paying these extra HBM passes.
    e0 = e0f[:N, :, :, :Lq].reshape(N, Cout1, D, Hp, Wp)[:, :, :, 1:H + 1,
                                                         1:W + 1]
    e1 = e1f[:N, :, :, :Lq].reshape(N, Cout2, D, Hp, Wp)[:, :, :, 1:H + 1,
                                                         1:W + 1]
    return e0, e1


def ref_forward(x, w1, b1, wse, wse2, w2, b2):
    """Pure-JAX reference matching the PyTorch module semantics."""
    dn = ("NCDHW", "OIDHW", "NCDHW")
    e0 = jax.lax.conv_general_dilated(
        x, w1, window_strides=(1, 1, 1),
        padding=((1, 1), (1, 1), (1, 1)), dimension_numbers=dn)
    e0 = e0 + b1[None, :, None, None, None]
    mean = jnp.mean(e0, axis=(2, 3, 4), keepdims=True)
    var = jnp.mean((e0 - mean) ** 2, axis=(2, 3, 4), keepdims=True)
    e0 = (e0 - mean) * jax.lax.rsqrt(var + IN_EPS)
    e0 = jnp.where(e0 >= 0, e0, LEAKY_SLOPE * e0)

    se = jax.nn.sigmoid(jax.lax.conv_general_dilated(
        e0, wse, (1, 1, 1), "VALID", dimension_numbers=dn))
    e0 = e0 * se
    se2 = jax.nn.sigmoid(jax.lax.conv_general_dilated(
        e0, wse2, (1, 1, 1), "VALID", dimension_numbers=dn))
    e0 = e0 * se2

    e1 = jax.lax.conv_general_dilated(
        e0, w2, (1, 1, 1), "VALID", dimension_numbers=dn)
    e1 = e1 + b2[None, :, None, None, None]
    # Upsample(scale_factor=1, trilinear, align_corners=True) == identity.
    return e0, e1


def init_params(key, cin, cout1, cout2):
    ks = jax.random.split(key, 6)
    w1 = 0.2 * jax.random.normal(ks[0], (cout1, cin, 3, 3, 3), jnp.float32)
    b1 = 0.1 * jax.random.normal(ks[1], (cout1,), jnp.float32)
    wse = 0.5 * jax.random.normal(ks[2], (1, cout1, 1, 1, 1), jnp.float32)
    wse2 = 0.5 * jax.random.normal(ks[3], (1, cout1, 1, 1, 1), jnp.float32)
    w2 = 0.3 * jax.random.normal(ks[4], (cout2, cout1, 1, 1, 1), jnp.float32)
    b2 = 0.1 * jax.random.normal(ks[5], (cout2,), jnp.float32)
    return w1, b1, wse, wse2, w2, b2


if __name__ == "__main__":
    key = jax.random.PRNGKey(0)
    kx, kp = jax.random.split(key)

    # Shapes consistent with SSEConv2(in_channel=2, out_channel1=4,
    # out_channel2=2, down_sample=1) on a 5-D NCDHW input.
    N, Cin, D, H, W = 2, 2, 8, 8, 8
    Cout1, Cout2 = 4, 2

    x = jax.random.normal(kx, (N, Cin, D, H, W), jnp.float32)
    w1, b1, wse, wse2, w2, b2 = init_params(kp, Cin, Cout1, Cout2)

    e0, e1 = sse_conv2(x, w1, b1, wse, wse2, w2, b2)
    jax.block_until_ready((e0, e1))

    e0_ref, e1_ref = ref_forward(x, w1, b1, wse, wse2, w2, b2)
    assert np.allclose(np.asarray(e0), np.asarray(e0_ref), atol=1e-4, rtol=1e-4)
    assert np.allclose(np.asarray(e1), np.asarray(e1_ref), atol=1e-4, rtol=1e-4)

    print("KERNEL_OK")
</pallas_src>

<mosaic_0001>
module attributes {stable_mosaic.version = 11 : i64} {
  func.func @sse_conv2_kernel(%arg0: i32, %arg1: memref<234xf32, #tpu.memory_space<smem>>, %arg2: memref<1x128xf32, #tpu.memory_space<vmem>>, %arg3: memref<1x2x10x128xf32, #tpu.memory_space<vmem>>, %arg4: memref<1x4x8x128xf32, #tpu.memory_space<vmem>>, %arg5: memref<1x2x8x128xf32, #tpu.memory_space<vmem>>) attributes {dimension_semantics = [#tpu.dimension_semantics<parallel>], iteration_bounds = array<i64: 2>, scalar_prefetch = 0 : i64, scratch_operands = 0 : i64, tpu.core_type = #tpu.core_type<tc>, window_params = [{transform_indices = @transform_0, window_bounds = array<i64: 234>}, {pipeline_mode = #tpu.pipeline_mode<synchronous>, transform_indices = @transform_1, window_bounds = array<i64: 1, 128>}, {transform_indices = @transform_2, window_bounds = array<i64: 1, 2, 10, 128>}, {transform_indices = @transform_3, window_bounds = array<i64: 1, 4, 8, 128>}, {transform_indices = @transform_4, window_bounds = array<i64: 1, 2, 8, 128>}]} {
    %c0 = arith.constant 0 : index
    %c0_0 = arith.constant 0 : index
    %0 = vector.load %arg2[%c0, %c0_0] : memref<1x128xf32, #tpu.memory_space<vmem>>, vector<1x128xf32>
    %cst = arith.constant 0.000000e+00 : f32
    %1 = vector.broadcast %cst : f32 to vector<8x128xf32>
    %cst_1 = arith.constant 0.000000e+00 : f32
    %2 = vector.broadcast %cst_1 : f32 to vector<8x128xf32>
    %cst_2 = arith.constant 0.000000e+00 : f32
    %3 = vector.broadcast %cst_2 : f32 to vector<8x128xf32>
    %cst_3 = arith.constant 0.000000e+00 : f32
    %4 = vector.broadcast %cst_3 : f32 to vector<8x128xf32>
    %c0_4 = arith.constant 0 : index
    %c0_5 = arith.constant 0 : index
    %c0_6 = arith.constant 0 : index
    %c0_7 = arith.constant 0 : index
    %5 = vector.load %arg3[%c0_4, %c0_5, %c0_6, %c0_7] : memref<1x2x10x128xf32, #tpu.memory_space<vmem>>, vector<1x1x8x128xf32>
    %6 = vector.shape_cast %5 : vector<1x1x8x128xf32> to vector<8x128xf32>
    %c0_8 = arith.constant 0 : index
    %7 = memref.load %arg1[%c0_8] : memref<234xf32, #tpu.memory_space<smem>>
    %8 = vector.broadcast %7 : f32 to vector<8x128xf32>
    %9 = arith.mulf %8, %6 : vector<8x128xf32>
    %10 = arith.addf %1, %9 : vector<8x128xf32>
    %c54 = arith.constant 54 : index
    %11 = memref.load %arg1[%c54] : memref<234xf32, #tpu.memory_space<smem>>
    %12 = vector.broadcast %11 : f32 to vector<8x128xf32>
    %13 = arith.mulf %12, %6 : vector<8x128xf32>
    %14 = arith.addf %2, %13 : vector<8x128xf32>
    %c108 = arith.constant 108 : index
    %15 = memref.load %arg1[%c108] : memref<234xf32, #tpu.memory_space<smem>>
    %16 = vector.broadcast %15 : f32 to vector<8x128xf32>
    %17 = arith.mulf %16, %6 : vector<8x128xf32>
    %18 = arith.addf %3, %17 : vector<8x128xf32>
    %c162 = arith.constant 162 : index
    %19 = memref.load %arg1[%c162] : memref<234xf32, #tpu.memory_space<smem>>
    %20 = vector.broadcast %19 : f32 to vector<8x128xf32>
    %21 = arith.mulf %20, %6 : vector<8x128xf32>
    %22 = arith.addf %4, %21 : vector<8x128xf32>
    %c127_i32 = arith.constant 127 : i32
    %23 = tpu.dynamic_rotate %6 by %c127_i32 dim 1 : vector<8x128xf32>, i32 -> vector<8x128xf32>
    %c1 = arith.constant 1 : index
    %24 = memref.load %arg1[%c1] : memref<234xf32, #tpu.memory_space<smem>>
    %25 = vector.broadcast %24 : f32 to vector<8x128xf32>
    %26 = arith.mulf %25, %23 : vector<8x128xf32>
    %27 = arith.addf %10, %26 : vector<8x128xf32>
    %c55 = arith.constant 55 : index
    %28 = memref.load %arg1[%c55] : memref<234xf32, #tpu.memory_space<smem>>
    %29 = vector.broadcast %28 : f32 to vector<8x128xf32>
    %30 = arith.mulf %29, %23 : vector<8x128xf32>
    %31 = arith.addf %14, %30 : vector<8x128xf32>
    %c109 = arith.constant 109 : index
    %32 = memref.load %arg1[%c109] : memref<234xf32, #tpu.memory_space<smem>>
    %33 = vector.broadcast %32 : f32 to vector<8x128xf32>
    %34 = arith.mulf %33, %23 : vector<8x128xf32>
    %35 = arith.addf %18, %34 : vector<8x128xf32>
    %c163 = arith.constant 163 : index
    %36 = memref.load %arg1[%c163] : memref<234xf32, #tpu.memory_space<smem>>
    %37 = vector.broadcast %36 : f32 to vector<8x128xf32>
    %38 = arith.mulf %37, %23 : vector<8x128xf32>
    %39 = arith.addf %22, %38 : vector<8x128xf32>
    %c126_i32 = arith.constant 126 : i32
    %40 = tpu.dynamic_rotate %6 by %c126_i32 dim 1 : vector<8x128xf32>, i32 -> vector<8x128xf32>
    %c2 = arith.constant 2 : index
    %41 = memref.load %arg1[%c2] : memref<234xf32, #tpu.memory_space<smem>>
    %42 = vector.broadcast %41 : f32 to vector<8x128xf32>
    %43 = arith.mulf %42, %40 : vector<8x128xf32>
    %44 = arith.addf %27, %43 : vector<8x128xf32>
    %c56 = arith.constant 56 : index
    %45 = memref.load %arg1[%c56] : memref<234xf32, #tpu.memory_space<smem>>
    %46 = vector.broadcast %45 : f32 to vector<8x128xf32>
    %47 = arith.mulf %46, %40 : vector<8x128xf32>
    %48 = arith.addf %31, %47 : vector<8x128xf32>
    %c110 = arith.constant 110 : index
    %49 = memref.load %arg1[%c110] : memref<234xf32, #tpu.memory_space<smem>>
    %50 = vector.broadcast %49 : f32 to vector<8x128xf32>
    %51 = arith.mulf %50, %40 : vector<8x128xf32>
    %52 = arith.addf %35, %51 : vector<8x128xf32>
    %c164 = arith.constant 164 : index
    %53 = memref.load %arg1[%c164] : memref<234xf32, #tpu.memory_space<smem>>
    %54 = vector.broadcast %53 : f32 to vector<8x128xf32>
    %55 = arith.mulf %54, %40 : vector<8x128xf32>
    %56 = arith.addf %39, %55 : vector<8x128xf32>
    %c118_i32 = arith.constant 118 : i32
    %57 = tpu.dynamic_rotate %6 by %c118_i32 dim 1 : vector<8x128xf32>, i32 -> vector<8x128xf32>
    %c3 = arith.constant 3 : index
    %58 = memref.load %arg1[%c3] : memref<234xf32, #tpu.memory_space<smem>>
    %59 = vector.broadcast %58 : f32 to vector<8x128xf32>
    %60 = arith.mulf %59, %57 : vector<8x128xf32>
    %61 = arith.addf %44, %60 : vector<8x128xf32>
    %c57 = arith.constant 57 : index
    %62 = memref.load %arg1[%c57] : memref<234xf32, #tpu.memory_space<smem>>
    %63 = vector.broadcast %62 : f32 to vector<8x128xf32>
    %64 = arith.mulf %63, %57 : vector<8x128xf32>
    %65 = arith.addf %48, %64 : vector<8x128xf32>
    %c111 = arith.constant 111 : index
    %66 = memref.load %arg1[%c111] : memref<234xf32, #tpu.memory_space<smem>>
    %67 = vector.broadcast %66 : f32 to vector<8x128xf32>
    %68 = arith.mulf %67, %57 : vector<8x128xf32>
    %69 = arith.addf %52, %68 : vector<8x128xf32>
    %c165 = arith.constant 165 : index
    %70 = memref.load %arg1[%c165] : memref<234xf32, #tpu.memory_space<smem>>
    %71 = vector.broadcast %70 : f32 to vector<8x128xf32>
    %72 = arith.mulf %71, %57 : vector<8x128xf32>
    %73 = arith.addf %56, %72 : vector<8x128xf32>
    %c117_i32 = arith.constant 117 : i32
    %74 = tpu.dynamic_rotate %6 by %c117_i32 dim 1 : vector<8x128xf32>, i32 -> vector<8x128xf32>
    %c4 = arith.constant 4 : index
    %75 = memref.load %arg1[%c4] : memref<234xf32, #tpu.memory_space<smem>>
    %76 = vector.broadcast %75 : f32 to vector<8x128xf32>
    %77 = arith.mulf %76, %74 : vector<8x128xf32>
    %78 = arith.addf %61, %77 : vector<8x128xf32>
    %c58 = arith.constant 58 : index
    %79 = memref.load %arg1[%c58] : memref<234xf32, #tpu.memory_space<smem>>
    %80 = vector.broadcast %79 : f32 to vector<8x128xf32>
    %81 = arith.mulf %80, %74 : vector<8x128xf32>
    %82 = arith.addf %65, %81 : vector<8x128xf32>
    %c112 = arith.constant 112 : index
    %83 = memref.load %arg1[%c112] : memref<234xf32, #tpu.memory_space<smem>>
    %84 = vector.broadcast %83 : f32 to vector<8x128xf32>
    %85 = arith.mulf %84, %74 : vector<8x128xf32>
    %86 = arith.addf %69, %85 : vector<8x128xf32>
    %c166 = arith.constant 166 : index
    %87 = memref.load %arg1[%c166] : memref<234xf32, #tpu.memory_space<smem>>
    %88 = vector.broadcast %87 : f32 to vector<8x128xf32>
    %89 = arith.mulf %88, %74 : vector<8x128xf32>
    %90 = arith.addf %73, %89 : vector<8x128xf32>
    %c116_i32 = arith.constant 116 : i32
    %91 = tpu.dynamic_rotate %6 by %c116_i32 dim 1 : vector<8x128xf32>, i32 -> vector<8x128xf32>
    %c5 = arith.constant 5 : index
    %92 = memref.load %arg1[%c5] : memref<234xf32, #tpu.memory_space<smem>>
    %93 = vector.broadcast %92 : f32 to vector<8x128xf32>
    %94 = arith.mulf %93, %91 : vector<8x128xf32>
    %95 = arith.addf %78, %94 : vector<8x128xf32>
    %c59 = arith.constant 59 : index
    %96 = memref.load %arg1[%c59] : memref<234xf32, #tpu.memory_space<smem>>
    %97 = vector.broadcast %96 : f32 to vector<8x128xf32>
    %98 = arith.mulf %97, %91 : vector<8x128xf32>
    %99 = arith.addf %82, %98 : vector<8x128xf32>
    %c113 = arith.constant 113 : index
    %100 = memref.load %arg1[%c113] : memref<234xf32, #tpu.memory_space<smem>>
    %101 = vector.broadcast %100 : f32 to vector<8x128xf32>
    %102 = arith.mulf %101, %91 : vector<8x128xf32>
    %103 = arith.addf %86, %102 : vector<8x128xf32>
    %c167 = arith.constant 167 : index
    %104 = memref.load %arg1[%c167] : memref<234xf32, #tpu.memory_space<smem>>
    %105 = vector.broadcast %104 : f32 to vector<8x128xf32>
    %106 = arith.mulf %105, %91 : vector<8x128xf32>
    %107 = arith.addf %90, %106 : vector<8x128xf32>
    %c108_i32 = arith.constant 108 : i32
    %108 = tpu.dynamic_rotate %6 by %c108_i32 dim 1 : vector<8x128xf32>, i32 -> vector<8x128xf32>
    %c6 = arith.constant 6 : index
    %109 = memref.load %arg1[%c6] : memref<234xf32, #tpu.memory_space<smem>>
    %110 = vector.broadcast %109 : f32 to vector<8x128xf32>
    %111 = arith.mulf %110, %108 : vector<8x128xf32>
    %112 = arith.addf %95, %111 : vector<8x128xf32>
    %c60 = arith.constant 60 : index
    %113 = memref.load %arg1[%c60] : memref<234xf32, #tpu.memory_space<smem>>
    %114 = vector.broadcast %113 : f32 to vector<8x128xf32>
    %115 = arith.mulf %114, %108 : vector<8x128xf32>
    %116 = arith.addf %99, %115 : vector<8x128xf32>
    %c114 = arith.constant 114 : index
    %117 = memref.load %arg1[%c114] : memref<234xf32, #tpu.memory_space<smem>>
    %118 = vector.broadcast %117 : f32 to vector<8x128xf32>
    %119 = arith.mulf %118, %108 : vector<8x128xf32>
    %120 = arith.addf %103, %119 : vector<8x128xf32>
    %c168 = arith.constant 168 : index
    %121 = memref.load %arg1[%c168] : memref<234xf32, #tpu.memory_space<smem>>
    %122 = vector.broadcast %121 : f32 to vector<8x128xf32>
    %123 = arith.mulf %122, %108 : vector<8x128xf32>
    %124 = arith.addf %107, %123 : vector<8x128xf32>
    %c107_i32 = arith.constant 107 : i32
    %125 = tpu.dynamic_rotate %6 by %c107_i32 dim 1 : vector<8x128xf32>, i32 -> vector<8x128xf32>
    %c7 = arith.constant 7 : index
    %126 = memref.load %arg1[%c7] : memref<234xf32, #tpu.memory_space<smem>>
    %127 = vector.broadcast %126 : f32 to vector<8x128xf32>
    %128 = arith.mulf %127, %125 : vector<8x128xf32>
    %129 = arith.addf %112, %128 : vector<8x128xf32>
    %c61 = arith.constant 61 : index
    %130 = memref.load %arg1[%c61] : memref<234xf32, #tpu.memory_space<smem>>
    %131 = vector.broadcast %130 : f32 to vector<8x128xf32>
    %132 = arith.mulf %131, %125 : vector<8x128xf32>
    %133 = arith.addf %116, %132 : vector<8x128xf32>
    %c115 = arith.constant 115 : index
    %134 = memref.load %arg1[%c115] : memref<234xf32, #tpu.memory_space<smem>>
    %135 = vector.broadcast %134 : f32 to vector<8x128xf32>
    %136 = arith.mulf %135, %125 : vector<8x128xf32>
    %137 = arith.addf %120, %136 : vector<8x128xf32>
    %c169 = arith.constant 169 : index
    %138 = memref.load %arg1[%c169] : memref<234xf32, #tpu.memory_space<smem>>
    %139 = vector.broadcast %138 : f32 to vector<8x128xf32>
    %140 = arith.mulf %139, %125 : vector<8x128xf32>
    %141 = arith.addf %124, %140 : vector<8x128xf32>
    %c106_i32 = arith.constant 106 : i32
    %142 = tpu.dynamic_rotate %6 by %c106_i32 dim 1 : vector<8x128xf32>, i32 -> vector<8x128xf32>
    %c8 = arith.constant 8 : index
    %143 = memref.load %arg1[%c8] : memref<234xf32, #tpu.memory_space<smem>>
    %144 = vector.broadcast %143 : f32 to vector<8x128xf32>
    %145 = arith.mulf %144, %142 : vector<8x128xf32>
    %146 = arith.addf %129, %145 : vector<8x128xf32>
    %c62 = arith.constant 62 : index
    %147 = memref.load %arg1[%c62] : memref<234xf32, #tpu.memory_space<smem>>
    %148 = vector.broadcast %147 : f32 to vector<8x128xf32>
    %149 = arith.mulf %148, %142 : vector<8x128xf32>
    %150 = arith.addf %133, %149 : vector<8x128xf32>
    %c116 = arith.constant 116 : index
    %151 = memref.load %arg1[%c116] : memref<234xf32, #tpu.memory_space<smem>>
    %152 = vector.broadcast %151 : f32 to vector<8x128xf32>
    %153 = arith.mulf %152, %142 : vector<8x128xf32>
    %154 = arith.addf %137, %153 : vector<8x128xf32>
    %c170 = arith.constant 170 : index
    %155 = memref.load %arg1[%c170] : memref<234xf32, #tpu.memory_space<smem>>
    %156 = vector.broadcast %155 : f32 to vector<8x128xf32>
    %157 = arith.mulf %156, %142 : vector<8x128xf32>
    %158 = arith.addf %141, %157 : vector<8x128xf32>
    %c0_9 = arith.constant 0 : index
    %c0_10 = arith.constant 0 : index
    %c1_11 = arith.constant 1 : index
    %c0_12 = arith.constant 0 : index
    %159 = vector.load %arg3[%c0_9, %c0_10, %c1_11, %c0_12] : memref<1x2x10x128xf32, #tpu.memory_space<vmem>>, vector<1x1x8x128xf32>
    %160 = vector.shape_cast %159 : vector<1x1x8x128xf32> to vector<8x128xf32>
    %c9 = arith.constant 9 : index
    %161 = memref.load %arg1[%c9] : memref<234xf32, #tpu.memory_space<smem>>
    %162 = vector.broadcast %161 : f32 to vector<8x128xf32>
    %163 = arith.mulf %162, %160 : vector<8x128xf32>
    %164 = arith.addf %146, %163 : vector<8x128xf32>
    %c63 = arith.constant 63 : index
    %165 = memref.load %arg1[%c63] : memref<234xf32, #tpu.memory_space<smem>>
    %166 = vector.broadcast %165 : f32 to vector<8x128xf32>
    %167 = arith.mulf %166, %160 : vector<8x128xf32>
    %168 = arith.addf %150, %167 : vector<8x128xf32>
    %c117 = arith.constant 117 : index
    %169 = memref.load %arg1[%c117] : memref<234xf32, #tpu.memory_space<smem>>
    %170 = vector.broadcast %169 : f32 to vector<8x128xf32>
    %171 = arith.mulf %170, %160 : vector<8x128xf32>
    %172 = arith.addf %154, %171 : vector<8x128xf32>
    %c171 = arith.constant 171 : index
    %173 = memref.load %arg1[%c171] : memref<234xf32, #tpu.memory_space<smem>>
    %174 = vector.broadcast %173 : f32 to vector<8x128xf32>
    %175 = arith.mulf %174, %160 : vector<8x128xf32>
    %176 = arith.addf %158, %175 : vector<8x128xf32>
    %c127_i32_13 = arith.constant 127 : i32
    %177 = tpu.dynamic_rotate %160 by %c127_i32_13 dim 1 : vector<8x128xf32>, i32 -> vector<8x128xf32>
    %c10 = arith.constant 10 : index
    %178 = memref.load %arg1[%c10] : memref<234xf32, #tpu.memory_space<smem>>
    %179 = vector.broadcast %178 : f32 to vector<8x128xf32>
    %180 = arith.mulf %179, %177 : vector<8x128xf32>
    %181 = arith.addf %164, %180 : vector<8x128xf32>
    %c64 = arith.constant 64 : index
    %182 = memref.load %arg1[%c64] : memref<234xf32, #tpu.memory_space<smem>>
    %183 = vector.broadcast %182 : f32 to vector<8x128xf32>
    %184 = arith.mulf %183, %177 : vector<8x128xf32>
    %185 = arith.addf %168, %184 : vector<8x128xf32>
    %c118 = arith.constant 118 : index
    %186 = memref.load %arg1[%c118] : memref<234xf32, #tpu.memory_space<smem>>
    %187 = vector.broadcast %186 : f32 to vector<8x128xf32>
    %188 = arith.mulf %187, %177 : vector<8x128xf32>
    %189 = arith.addf %172, %188 : vector<8x128xf32>
    %c172 = arith.constant 172 : index
    %190 = memref.load %arg1[%c172] : memref<234xf32, #tpu.memory_space<smem>>
    %191 = vector.broadcast %190 : f32 to vector<8x128xf32>
    %192 = arith.mulf %191, %177 : vector<8x128xf32>
    %193 = arith.addf %176, %192 : vector<8x128xf32>
    %c126_i32_14 = arith.constant 126 : i32
    %194 = tpu.dynamic_rotate %160 by %c126_i32_14 dim 1 : vector<8x128xf32>, i32 -> vector<8x128xf32>
    %c11 = arith.constant 11 : index
    %195 = memref.load %arg1[%c11] : memref<234xf32, #tpu.memory_space<smem>>
    %196 = vector.broadcast %195 : f32 to vector<8x128xf32>
    %197 = arith.mulf %196, %194 : vector<8x128xf32>
    %198 = arith.addf %181, %197 : vector<8x128xf32>
    %c65 = arith.constant 65 : index
    %199 = memref.load %arg1[%c65] : memref<234xf32, #tpu.memory_space<smem>>
    %200 = vector.broadcast %199 : f32 to vector<8x128xf32>
    %201 = arith.mulf %200, %194 : vector<8x128xf32>
    %202 = arith.addf %185, %201 : vector<8x128xf32>
    %c119 = arith.constant 119 : index
    %203 = memref.load %arg1[%c119] : memref<234xf32, #tpu.memory_space<smem>>
    %204 = vector.broadcast %203 : f32 to vector<8x128xf32>
    %205 = arith.mulf %204, %194 : vector<8x128xf32>
    %206 = arith.addf %189, %205 : vector<8x128xf32>
    %c173 = arith.constant 173 : index
    %207 = memref.load %arg1[%c173] : memref<234xf32, #tpu.memory_space<smem>>
    %208 = vector.broadcast %207 : f32 to vector<8x128xf32>
    %209 = arith.mulf %208, %194 : vector<8x128xf32>
    %210 = arith.addf %193, %209 : vector<8x128xf32>
    %c118_i32_15 = arith.constant 118 : i32
    %211 = tpu.dynamic_rotate %160 by %c118_i32_15 dim 1 : vector<8x128xf32>, i32 -> vector<8x128xf32>
    %c12 = arith.constant 12 : index
    %212 = memref.load %arg1[%c12] : memref<234xf32, #tpu.memory_space<smem>>
    %213 = vector.broadcast %212 : f32 to vector<8x128xf32>
    %214 = arith.mulf %213, %211 : vector<8x128xf32>
    %215 = arith.addf %198, %214 : vector<8x128xf32>
    %c66 = arith.constant 66 : index
    %216 = memref.load %arg1[%c66] : memref<234xf32, #tpu.memory_space<smem>>
    %217 = vector.broadcast %216 : f32 to vector<8x128xf32>
    %218 = arith.mulf %217, %211 : vector<8x128xf32>
    %219 = arith.addf %202, %218 : vector<8x128xf32>
    %c120 = arith.constant 120 : index
    %220 = memref.load %arg1[%c120] : memref<234xf32, #tpu.memory_space<smem>>
    %221 = vector.broadcast %220 : f32 to vector<8x128xf32>
    %222 = arith.mulf %221, %211 : vector<8x128xf32>
    %223 = arith.addf %206, %222 : vector<8x128xf32>
    %c174 = arith.constant 174 : index
    %224 = memref.load %arg1[%c174] : memref<234xf32, #tpu.memory_space<smem>>
    %225 = vector.broadcast %224 : f32 to vector<8x128xf32>
    %226 = arith.mulf %225, %211 : vector<8x128xf32>
    %227 = arith.addf %210, %226 : vector<8x128xf32>
    %c117_i32_16 = arith.constant 117 : i32
    %228 = tpu.dynamic_rotate %160 by %c117_i32_16 dim 1 : vector<8x128xf32>, i32 -> vector<8x128xf32>
    %c13 = arith.constant 13 : index
    %229 = memref.load %arg1[%c13] : memref<234xf32, #tpu.memory_space<smem>>
    %230 = vector.broadcast %229 : f32 to vector<8x128xf32>
    %231 = arith.mulf %230, %228 : vector<8x128xf32>
    %232 = arith.addf %215, %231 : vector<8x128xf32>
    %c67 = arith.constant 67 : index
    %233 = memref.load %arg1[%c67] : memref<234xf32, #tpu.memory_space<smem>>
    %234 = vector.broadcast %233 : f32 to vector<8x128xf32>
    %235 = arith.mulf %234, %228 : vector<8x128xf32>
    %236 = arith.addf %219, %235 : vector<8x128xf32>
    %c121 = arith.constant 121 : index
    %237 = memref.load %arg1[%c121] : memref<234xf32, #tpu.memory_space<smem>>
    %238 = vector.broadcast %237 : f32 to vector<8x128xf32>
    %239 = arith.mulf %238, %228 : vector<8x128xf32>
    %240 = arith.addf %223, %239 : vector<8x128xf32>
    %c175 = arith.constant 175 : index
    %241 = memref.load %arg1[%c175] : memref<234xf32, #tpu.memory_space<smem>>
    %242 = vector.broadcast %241 : f32 to vector<8x128xf32>
    %243 = arith.mulf %242, %228 : vector<8x128xf32>
    %244 = arith.addf %227, %243 : vector<8x128xf32>
    %c116_i32_17 = arith.constant 116 : i32
    %245 = tpu.dynamic_rotate %160 by %c116_i32_17 dim 1 : vector<8x128xf32>, i32 -> vector<8x128xf32>
    %c14 = arith.constant 14 : index
    %246 = memref.load %arg1[%c14] : memref<234xf32, #tpu.memory_space<smem>>
    %247 = vector.broadcast %246 : f32 to vector<8x128xf32>
    %248 = arith.mulf %247, %245 : vector<8x128xf32>
    %249 = arith.addf %232, %248 : vector<8x128xf32>
    %c68 = arith.constant 68 : index
    %250 = memref.load %arg1[%c68] : memref<234xf32, #tpu.memory_space<smem>>
    %251 = vector.broadcast %250 : f32 to vector<8x128xf32>
    %252 = arith.mulf %251, %245 : vector<8x128xf32>
    %253 = arith.addf %236, %252 : vector<8x128xf32>
    %c122 = arith.constant 122 : index
    %254 = memref.load %arg1[%c122] : memref<234xf32, #tpu.memory_space<smem>>
    %255 = vector.broadcast %254 : f32 to vector<8x128xf32>
    %256 = arith.mulf %255, %245 : vector<8x128xf32>
    %257 = arith.addf %240, %256 : vector<8x128xf32>
    %c176 = arith.constant 176 : index
    %258 = memref.load %arg1[%c176] : memref<234xf32, #tpu.memory_space<smem>>
    %259 = vector.broadcast %258 : f32 to vector<8x128xf32>
    %260 = arith.mulf %259, %245 : vector<8x128xf32>
    %261 = arith.addf %244, %260 : vector<8x128xf32>
    %c108_i32_18 = arith.constant 108 : i32
    %262 = tpu.dynamic_rotate %160 by %c108_i32_18 dim 1 : vector<8x128xf32>, i32 -> vector<8x128xf32>
    %c15 = arith.constant 15 : index
    %263 = memref.load %arg1[%c15] : memref<234xf32, #tpu.memory_space<smem>>
    %264 = vector.broadcast %263 : f32 to vector<8x128xf32>
    %265 = arith.mulf %264, %262 : vector<8x128xf32>
    %266 = arith.addf %249, %265 : vector<8x128xf32>
    %c69 = arith.constant 69 : index
    %267 = memref.load %arg1[%c69] : memref<234xf32, #tpu.memory_space<smem>>
    %268 = vector.broadcast %267 : f32 to vector<8x128xf32>
    %269 = arith.mulf %268, %262 : vector<8x128xf32>
    %270 = arith.addf %253, %269 : vector<8x128xf32>
    %c123 = arith.constant 123 : index
    %271 = memref.load %arg1[%c123] : memref<234xf32, #tpu.memory_space<smem>>
    %272 = vector.broadcast %271 : f32 to vector<8x128xf32>
    %273 = arith.mulf %272, %262 : vector<8x128xf32>
    %274 = arith.addf %257, %273 : vector<8x128xf32>
    %c177 = arith.constant 177 : index
    %275 = memref.load %arg1[%c177] : memref<234xf32, #tpu.memory_space<smem>>
    %276 = vector.broadcast %275 : f32 to vector<8x128xf32>
    %277 = arith.mulf %276, %262 : vector<8x128xf32>
    %278 = arith.addf %261, %277 : vector<8x128xf32>
    %c107_i32_19 = arith.constant 107 : i32
    %279 = tpu.dynamic_rotate %160 by %c107_i32_19 dim 1 : vector<8x128xf32>, i32 -> vector<8x128xf32>
    %c16 = arith.constant 16 : index
    %280 = memref.load %arg1[%c16] : memref<234xf32, #tpu.memory_space<smem>>
    %281 = vector.broadcast %280 : f32 to vector<8x128xf32>
    %282 = arith.mulf %281, %279 : vector<8x128xf32>
    %283 = arith.addf %266, %282 : vector<8x128xf32>
    %c70 = arith.constant 70 : index
    %284 = memref.load %arg1[%c70] : memref<234xf32, #tpu.memory_space<smem>>
    %285 = vector.broadcast %284 : f32 to vector<8x128xf32>
    %286 = arith.mulf %285, %279 : vector<8x128xf32>
    %287 = arith.addf %270, %286 : vector<8x128xf32>
    %c124 = arith.constant 124 : index
    %288 = memref.load %arg1[%c124] : memref<234xf32, #tpu.memory_space<smem>>
    %289 = vector.broadcast %288 : f32 to vector<8x128xf32>
    %290 = arith.mulf %289, %279 : vector<8x128xf32>
    %291 = arith.addf %274, %290 : vector<8x128xf32>
    %c178 = arith.constant 178 : index
    %292 = memref.load %arg1[%c178] : memref<234xf32, #tpu.memory_space<smem>>
    %293 = vector.broadcast %292 : f32 to vector<8x128xf32>
    %294 = arith.mulf %293, %279 : vector<8x128xf32>
    %295 = arith.addf %278, %294 : vector<8x128xf32>
    %c106_i32_20 = arith.constant 106 : i32
    %296 = tpu.dynamic_rotate %160 by %c106_i32_20 dim 1 : vector<8x128xf32>, i32 -> vector<8x128xf32>
    %c17 = arith.constant 17 : index
    %297 = memref.load %arg1[%c17] : memref<234xf32, #tpu.memory_space<smem>>
    %298 = vector.broadcast %297 : f32 to vector<8x128xf32>
    %299 = arith.mulf %298, %296 : vector<8x128xf32>
    %300 = arith.addf %283, %299 : vector<8x128xf32>
    %c71 = arith.constant 71 : index
    %301 = memref.load %arg1[%c71] : memref<234xf32, #tpu.memory_space<smem>>
    %302 = vector.broadcast %301 : f32 to vector<8x128xf32>
    %303 = arith.mulf %302, %296 : vector<8x128xf32>
    %304 = arith.addf %287, %303 : vector<8x128xf32>
    %c125 = arith.constant 125 : index
    %305 = memref.load %arg1[%c125] : memref<234xf32, #tpu.memory_space<smem>>
    %306 = vector.broadcast %305 : f32 to vector<8x128xf32>
    %307 = arith.mulf %306, %296 : vector<8x128xf32>
    %308 = arith.addf %291, %307 : vector<8x128xf32>
    %c179 = arith.constant 179 : index
    %309 = memref.load %arg1[%c179] : memref<234xf32, #tpu.memory_space<smem>>
    %310 = vector.broadcast %309 : f32 to vector<8x128xf32>
    %311 = arith.mulf %310, %296 : vector<8x128xf32>
    %312 = arith.addf %295, %311 : vector<8x128xf32>
    %c0_21 = arith.constant 0 : index
    %c0_22 = arith.constant 0 : index
    %c2_23 = arith.constant 2 : index
    %c0_24 = arith.constant 0 : index
    %313 = vector.load %arg3[%c0_21, %c0_22, %c2_23, %c0_24] : memref<1x2x10x128xf32, #tpu.memory_space<vmem>>, vector<1x1x8x128xf32>
    %314 = vector.shape_cast %313 : vector<1x1x8x128xf32> to vector<8x128xf32>
    %c18 = arith.constant 18 : index
    %315 = memref.load %arg1[%c18] : memref<234xf32, #tpu.memory_space<smem>>
    %316 = vector.broadcast %315 : f32 to vector<8x128xf32>
    %317 = arith.mulf %316, %314 : vector<8x128xf32>
    %318 = arith.addf %300, %317 : vector<8x128xf32>
    %c72 = arith.constant 72 : index
    %319 = memref.load %arg1[%c72] : memref<234xf32, #tpu.memory_space<smem>>
    %320 = vector.broadcast %319 : f32 to vector<8x128xf32>
    %321 = arith.mulf %320, %314 : vector<8x128xf32>
    %322 = arith.addf %304, %321 : vector<8x128xf32>
    %c126 = arith.constant 126 : index
    %323 = memref.load %arg1[%c126] : memref<234xf32, #tpu.memory_space<smem>>
    %324 = vector.broadcast %323 : f32 to vector<8x128xf32>
    %325 = arith.mulf %324, %314 : vector<8x128xf32>
    %326 = arith.addf %308, %325 : vector<8x128xf32>
    %c180 = arith.constant 180 : index
    %327 = memref.load %arg1[%c180] : memref<234xf32, #tpu.memory_space<smem>>
    %328 = vector.broadcast %327 : f32 to vector<8x128xf32>
    %329 = arith.mulf %328, %314 : vector<8x128xf32>
    %330 = arith.addf %312, %329 : vector<8x128xf32>
    %c127_i32_25 = arith.constant 127 : i32
    %331 = tpu.dynamic_rotate %314 by %c127_i32_25 dim 1 : vector<8x128xf32>, i32 -> vector<8x128xf32>
    %c19 = arith.constant 19 : index
    %332 = memref.load %arg1[%c19] : memref<234xf32, #tpu.memory_space<smem>>
    %333 = vector.broadcast %332 : f32 to vector<8x128xf32>
    %334 = arith.mulf %333, %331 : vector<8x128xf32>
    %335 = arith.addf %318, %334 : vector<8x128xf32>
    %c73 = arith.constant 73 : index
    %336 = memref.load %arg1[%c73] : memref<234xf32, #tpu.memory_space<smem>>
    %337 = vector.broadcast %336 : f32 to vector<8x128xf32>
    %338 = arith.mulf %337, %331 : vector<8x128xf32>
    %339 = arith.addf %322, %338 : vector<8x128xf32>
    %c127 = arith.constant 127 : index
    %340 = memref.load %arg1[%c127] : memref<234xf32, #tpu.memory_space<smem>>
    %341 = vector.broadcast %340 : f32 to vector<8x128xf32>
    %342 = arith.mulf %341, %331 : vector<8x128xf32>
    %343 = arith.addf %326, %342 : vector<8x128xf32>
    %c181 = arith.constant 181 : index
    %344 = memref.load %arg1[%c181] : memref<234xf32, #tpu.memory_space<smem>>
    %345 = vector.broadcast %344 : f32 to vector<8x128xf32>
    %346 = arith.mulf %345, %331 : vector<8x128xf32>
    %347 = arith.addf %330, %346 : vector<8x128xf32>
    %c126_i32_26 = arith.constant 126 : i32
    %348 = tpu.dynamic_rotate %314 by %c126_i32_26 dim 1 : vector<8x128xf32>, i32 -> vector<8x128xf32>
    %c20 = arith.constant 20 : index
    %349 = memref.load %arg1[%c20] : memref<234xf32, #tpu.memory_space<smem>>
    %350 = vector.broadcast %349 : f32 to vector<8x128xf32>
    %351 = arith.mulf %350, %348 : vector<8x128xf32>
    %352 = arith.addf %335, %351 : vector<8x128xf32>
    %c74 = arith.constant 74 : index
    %353 = memref.load %arg1[%c74] : memref<234xf32, #tpu.memory_space<smem>>
    %354 = vector.broadcast %353 : f32 to vector<8x128xf32>
    %355 = arith.mulf %354, %348 : vector<8x128xf32>
    %356 = arith.addf %339, %355 : vector<8x128xf32>
    %c128 = arith.constant 128 : index
    %357 = memref.load %arg1[%c128] : memref<234xf32, #tpu.memory_space<smem>>
    %358 = vector.broadcast %357 : f32 to vector<8x128xf32>
    %359 = arith.mulf %358, %348 : vector<8x128xf32>
    %360 = arith.addf %343, %359 : vector<8x128xf32>
    %c182 = arith.constant 182 : index
    %361 = memref.load %arg1[%c182] : memref<234xf32, #tpu.memory_space<smem>>
    %362 = vector.broadcast %361 : f32 to vector<8x128xf32>
    %363 = arith.mulf %362, %348 : vector<8x128xf32>
    %364 = arith.addf %347, %363 : vector<8x128xf32>
    %c118_i32_27 = arith.constant 118 : i32
    %365 = tpu.dynamic_rotate %314 by %c118_i32_27 dim 1 : vector<8x128xf32>, i32 -> vector<8x128xf32>
    %c21 = arith.constant 21 : index
    %366 = memref.load %arg1[%c21] : memref<234xf32, #tpu.memory_space<smem>>
    %367 = vector.broadcast %366 : f32 to vector<8x128xf32>
    %368 = arith.mulf %367, %365 : vector<8x128xf32>
    %369 = arith.addf %352, %368 : vector<8x128xf32>
    %c75 = arith.constant 75 : index
    %370 = memref.load %arg1[%c75] : memref<234xf32, #tpu.memory_space<smem>>
    %371 = vector.broadcast %370 : f32 to vector<8x128xf32>
    %372 = arith.mulf %371, %365 : vector<8x128xf32>
    %373 = arith.addf %356, %372 : vector<8x128xf32>
    %c129 = arith.constant 129 : index
    %374 = memref.load %arg1[%c129] : memref<234xf32, #tpu.memory_space<smem>>
    %375 = vector.broadcast %374 : f32 to vector<8x128xf32>
    %376 = arith.mulf %375, %365 : vector<8x128xf32>
    %377 = arith.addf %360, %376 : vector<8x128xf32>
    %c183 = arith.constant 183 : index
    %378 = memref.load %arg1[%c183] : memref<234xf32, #tpu.memory_space<smem>>
    %379 = vector.broadcast %378 : f32 to vector<8x128xf32>
    %380 = arith.mulf %379, %365 : vector<8x128xf32>
    %381 = arith.addf %364, %380 : vector<8x128xf32>
    %c117_i32_28 = arith.constant 117 : i32
    %382 = tpu.dynamic_rotate %314 by %c117_i32_28 dim 1 : vector<8x128xf32>, i32 -> vector<8x128xf32>
    %c22 = arith.constant 22 : index
    %383 = memref.load %arg1[%c22] : memref<234xf32, #tpu.memory_space<smem>>
    %384 = vector.broadcast %383 : f32 to vector<8x128xf32>
    %385 = arith.mulf %384, %382 : vector<8x128xf32>
    %386 = arith.addf %369, %385 : vector<8x128xf32>
    %c76 = arith.constant 76 : index
    %387 = memref.load %arg1[%c76] : memref<234xf32, #tpu.memory_space<smem>>
    %388 = vector.broadcast %387 : f32 to vector<8x128xf32>
    %389 = arith.mulf %388, %382 : vector<8x128xf32>
    %390 = arith.addf %373, %389 : vector<8x128xf32>
    %c130 = arith.constant 130 : index
    %391 = memref.load %arg1[%c130] : memref<234xf32, #tpu.memory_space<smem>>
    %392 = vector.broadcast %391 : f32 to vector<8x128xf32>
    %393 = arith.mulf %392, %382 : vector<8x128xf32>
    %394 = arith.addf %377, %393 : vector<8x128xf32>
    %c184 = arith.constant 184 : index
    %395 = memref.load %arg1[%c184] : memref<234xf32, #tpu.memory_space<smem>>
    %396 = vector.broadcast %395 : f32 to vector<8x128xf32>
    %397 = arith.mulf %396, %382 : vector<8x128xf32>
    %398 = arith.addf %381, %397 : vector<8x128xf32>
    %c116_i32_29 = arith.constant 116 : i32
    %399 = tpu.dynamic_rotate %314 by %c116_i32_29 dim 1 : vector<8x128xf32>, i32 -> vector<8x128xf32>
    %c23 = arith.constant 23 : index
    %400 = memref.load %arg1[%c23] : memref<234xf32, #tpu.memory_space<smem>>
    %401 = vector.broadcast %400 : f32 to vector<8x128xf32>
    %402 = arith.mulf %401, %399 : vector<8x128xf32>
    %403 = arith.addf %386, %402 : vector<8x128xf32>
    %c77 = arith.constant 77 : index
    %404 = memref.load %arg1[%c77] : memref<234xf32, #tpu.memory_space<smem>>
    %405 = vector.broadcast %404 : f32 to vector<8x128xf32>
    %406 = arith.mulf %405, %399 : vector<8x128xf32>
    %407 = arith.addf %390, %406 : vector<8x128xf32>
    %c131 = arith.constant 131 : index
    %408 = memref.load %arg1[%c131] : memref<234xf32, #tpu.memory_space<smem>>
    %409 = vector.broadcast %408 : f32 to vector<8x128xf32>
    %410 = arith.mulf %409, %399 : vector<8x128xf32>
    %411 = arith.addf %394, %410 : vector<8x128xf32>
    %c185 = arith.constant 185 : index
    %412 = memref.load %arg1[%c185] : memref<234xf32, #tpu.memory_space<smem>>
    %413 = vector.broadcast %412 : f32 to vector<8x128xf32>
    %414 = arith.mulf %413, %399 : vector<8x128xf32>
    %415 = arith.addf %398, %414 : vector<8x128xf32>
    %c108_i32_30 = arith.constant 108 : i32
    %416 = tpu.dynamic_rotate %314 by %c108_i32_30 dim 1 : vector<8x128xf32>, i32 -> vector<8x128xf32>
    %c24 = arith.constant 24 : index
    %417 = memref.load %arg1[%c24] : memref<234xf32, #tpu.memory_space<smem>>
    %418 = vector.broadcast %417 : f32 to vector<8x128xf32>
    %419 = arith.mulf %418, %416 : vector<8x128xf32>
    %420 = arith.addf %403, %419 : vector<8x128xf32>
    %c78 = arith.constant 78 : index
    %421 = memref.load %arg1[%c78] : memref<234xf32, #tpu.memory_space<smem>>
    %422 = vector.broadcast %421 : f32 to vector<8x128xf32>
    %423 = arith.mulf %422, %416 : vector<8x128xf32>
    %424 = arith.addf %407, %423 : vector<8x128xf32>
    %c132 = arith.constant 132 : index
    %425 = memref.load %arg1[%c132] : memref<234xf32, #tpu.memory_space<smem>>
    %426 = vector.broadcast %425 : f32 to vector<8x128xf32>
    %427 = arith.mulf %426, %416 : vector<8x128xf32>
    %428 = arith.addf %411, %427 : vector<8x128xf32>
    %c186 = arith.constant 186 : index
    %429 = memref.load %arg1[%c186] : memref<234xf32, #tpu.memory_space<smem>>
    %430 = vector.broadcast %429 : f32 to vector<8x128xf32>
    %431 = arith.mulf %430, %416 : vector<8x128xf32>
    %432 = arith.addf %415, %431 : vector<8x128xf32>
    %c107_i32_31 = arith.constant 107 : i32
    %433 = tpu.dynamic_rotate %314 by %c107_i32_31 dim 1 : vector<8x128xf32>, i32 -> vector<8x128xf32>
    %c25 = arith.constant 25 : index
    %434 = memref.load %arg1[%c25] : memref<234xf32, #tpu.memory_space<smem>>
    %435 = vector.broadcast %434 : f32 to vector<8x128xf32>
    %436 = arith.mulf %435, %433 : vector<8x128xf32>
    %437 = arith.addf %420, %436 : vector<8x128xf32>
    %c79 = arith.constant 79 : index
    %438 = memref.load %arg1[%c79] : memref<234xf32, #tpu.memory_space<smem>>
    %439 = vector.broadcast %438 : f32 to vector<8x128xf32>
    %440 = arith.mulf %439, %433 : vector<8x128xf32>
    %441 = arith.addf %424, %440 : vector<8x128xf32>
    %c133 = arith.constant 133 : index
    %442 = memref.load %arg1[%c133] : memref<234xf32, #tpu.memory_space<smem>>
    %443 = vector.broadcast %442 : f32 to vector<8x128xf32>
    %444 = arith.mulf %443, %433 : vector<8x128xf32>
    %445 = arith.addf %428, %444 : vector<8x128xf32>
    %c187 = arith.constant 187 : index
    %446 = memref.load %arg1[%c187] : memref<234xf32, #tpu.memory_space<smem>>
    %447 = vector.broadcast %446 : f32 to vector<8x128xf32>
    %448 = arith.mulf %447, %433 : vector<8x128xf32>
    %449 = arith.addf %432, %448 : vector<8x128xf32>
    %c106_i32_32 = arith.constant 106 : i32
    %450 = tpu.dynamic_rotate %314 by %c106_i32_32 dim 1 : vector<8x128xf32>, i32 -> vector<8x128xf32>
    %c26 = arith.constant 26 : index
    %451 = memref.load %arg1[%c26] : memref<234xf32, #tpu.memory_space<smem>>
    %452 = vector.broadcast %451 : f32 to vector<8x128xf32>
    %453 = arith.mulf %452, %450 : vector<8x128xf32>
    %454 = arith.addf %437, %453 : vector<8x128xf32>
    %c80 = arith.constant 80 : index
    %455 = memref.load %arg1[%c80] : memref<234xf32, #tpu.memory_space<smem>>
    %456 = vector.broadcast %455 : f32 to vector<8x128xf32>
    %457 = arith.mulf %456, %450 : vector<8x128xf32>
    %458 = arith.addf %441, %457 : vector<8x128xf32>
    %c134 = arith.constant 134 : index
    %459 = memref.load %arg1[%c134] : memref<234xf32, #tpu.memory_space<smem>>
    %460 = vector.broadcast %459 : f32 to vector<8x128xf32>
    %461 = arith.mulf %460, %450 : vector<8x128xf32>
    %462 = arith.addf %445, %461 : vector<8x128xf32>
    %c188 = arith.constant 188 : index
    %463 = memref.load %arg1[%c188] : memref<234xf32, #tpu.memory_space<smem>>
    %464 = vector.broadcast %463 : f32 to vector<8x128xf32>
    %465 = arith.mulf %464, %450 : vector<8x128xf32>
    %466 = arith.addf %449, %465 : vector<8x128xf32>
    %c0_33 = arith.constant 0 : index
    %c1_34 = arith.constant 1 : index
    %c0_35 = arith.constant 0 : index
    %c0_36 = arith.constant 0 : index
    %467 = vector.load %arg3[%c0_33, %c1_34, %c0_35, %c0_36] : memref<1x2x10x128xf32, #tpu.memory_space<vmem>>, vector<1x1x8x128xf32>
    %468 = vector.shape_cast %467 : vector<1x1x8x128xf32> to vector<8x128xf32>
    %c27 = arith.constant 27 : index
    %469 = memref.load %arg1[%c27] : memref<234xf32, #tpu.memory_space<smem>>
    %470 = vector.broadcast %469 : f32 to vector<8x128xf32>
    %471 = arith.mulf %470, %468 : vector<8x128xf32>
    %472 = arith.addf %454, %471 : vector<8x128xf32>
    %c81 = arith.constant 81 : index
    %473 = memref.load %arg1[%c81] : memref<234xf32, #tpu.memory_space<smem>>
    %474 = vector.broadcast %473 : f32 to vector<8x128xf32>
    %475 = arith.mulf %474, %468 : vector<8x128xf32>
    %476 = arith.addf %458, %475 : vector<8x128xf32>
    %c135 = arith.constant 135 : index
    %477 = memref.load %arg1[%c135] : memref<234xf32, #tpu.memory_space<smem>>
    %478 = vector.broadcast %477 : f32 to vector<8x128xf32>
    %479 = arith.mulf %478, %468 : vector<8x128xf32>
    %480 = arith.addf %462, %479 : vector<8x128xf32>
    %c189 = arith.constant 189 : index
    %481 = memref.load %arg1[%c189] : memref<234xf32, #tpu.memory_space<smem>>
    %482 = vector.broadcast %481 : f32 to vector<8x128xf32>
    %483 = arith.mulf %482, %468 : vector<8x128xf32>
    %484 = arith.addf %466, %483 : vector<8x128xf32>
    %c127_i32_37 = arith.constant 127 : i32
    %485 = tpu.dynamic_rotate %468 by %c127_i32_37 dim 1 : vector<8x128xf32>, i32 -> vector<8x128xf32>
    %c28 = arith.constant 28 : index
    %486 = memref.load %arg1[%c28] : memref<234xf32, #tpu.memory_space<smem>>
    %487 = vector.broadcast %486 : f32 to vector<8x128xf32>
    %488 = arith.mulf %487, %485 : vector<8x128xf32>
    %489 = arith.addf %472, %488 : vector<8x128xf32>
    %c82 = arith.constant 82 : index
    %490 = memref.load %arg1[%c82] : memref<234xf32, #tpu.memory_space<smem>>
    %491 = vector.broadcast %490 : f32 to vector<8x128xf32>
    %492 = arith.mulf %491, %485 : vector<8x128xf32>
    %493 = arith.addf %476, %492 : vector<8x128xf32>
    %c136 = arith.constant 136 : index
    %494 = memref.load %arg1[%c136] : memref<234xf32, #tpu.memory_space<smem>>
    %495 = vector.broadcast %494 : f32 to vector<8x128xf32>
    %496 = arith.mulf %495, %485 : vector<8x128xf32>
    %497 = arith.addf %480, %496 : vector<8x128xf32>
    %c190 = arith.constant 190 : index
    %498 = memref.load %arg1[%c190] : memref<234xf32, #tpu.memory_space<smem>>
    %499 = vector.broadcast %498 : f32 to vector<8x128xf32>
    %500 = arith.mulf %499, %485 : vector<8x128xf32>
    %501 = arith.addf %484, %500 : vector<8x128xf32>
    %c126_i32_38 = arith.constant 126 : i32
    %502 = tpu.dynamic_rotate %468 by %c126_i32_38 dim 1 : vector<8x128xf32>, i32 -> vector<8x128xf32>
    %c29 = arith.constant 29 : index
    %503 = memref.load %arg1[%c29] : memref<234xf32, #tpu.memory_space<smem>>
    %504 = vector.broadcast %503 : f32 to vector<8x128xf32>
    %505 = arith.mulf %504, %502 : vector<8x128xf32>
    %506 = arith.addf %489, %505 : vector<8x128xf32>
    %c83 = arith.constant 83 : index
    %507 = memref.load %arg1[%c83] : memref<234xf32, #tpu.memory_space<smem>>
    %508 = vector.broadcast %507 : f32 to vector<8x128xf32>
    %509 = arith.mulf %508, %502 : vector<8x128xf32>
    %510 = arith.addf %493, %509 : vector<8x128xf32>
    %c137 = arith.constant 137 : index
    %511 = memref.load %arg1[%c137] : memref<234xf32, #tpu.memory_space<smem>>
    %512 = vector.broadcast %511 : f32 to vector<8x128xf32>
    %513 = arith.mulf %512, %502 : vector<8x128xf32>
    %514 = arith.addf %497, %513 : vector<8x128xf32>
    %c191 = arith.constant 191 : index
    %515 = memref.load %arg1[%c191] : memref<234xf32, #tpu.memory_space<smem>>
    %516 = vector.broadcast %515 : f32 to vector<8x128xf32>
    %517 = arith.mulf %516, %502 : vector<8x128xf32>
    %518 = arith.addf %501, %517 : vector<8x128xf32>
    %c118_i32_39 = arith.constant 118 : i32
    %519 = tpu.dynamic_rotate %468 by %c118_i32_39 dim 1 : vector<8x128xf32>, i32 -> vector<8x128xf32>
    %c30 = arith.constant 30 : index
    %520 = memref.load %arg1[%c30] : memref<234xf32, #tpu.memory_space<smem>>
    %521 = vector.broadcast %520 : f32 to vector<8x128xf32>
    %522 = arith.mulf %521, %519 : vector<8x128xf32>
    %523 = arith.addf %506, %522 : vector<8x128xf32>
    %c84 = arith.constant 84 : index
    %524 = memref.load %arg1[%c84] : memref<234xf32, #tpu.memory_space<smem>>
    %525 = vector.broadcast %524 : f32 to vector<8x128xf32>
    %526 = arith.mulf %525, %519 : vector<8x128xf32>
    %527 = arith.addf %510, %526 : vector<8x128xf32>
    %c138 = arith.constant 138 : index
    %528 = memref.load %arg1[%c138] : memref<234xf32, #tpu.memory_space<smem>>
    %529 = vector.broadcast %528 : f32 to vector<8x128xf32>
    %530 = arith.mulf %529, %519 : vector<8x128xf32>
    %531 = arith.addf %514, %530 : vector<8x128xf32>
    %c192 = arith.constant 192 : index
    %532 = memref.load %arg1[%c192] : memref<234xf32, #tpu.memory_space<smem>>
    %533 = vector.broadcast %532 : f32 to vector<8x128xf32>
    %534 = arith.mulf %533, %519 : vector<8x128xf32>
    %535 = arith.addf %518, %534 : vector<8x128xf32>
    %c117_i32_40 = arith.constant 117 : i32
    %536 = tpu.dynamic_rotate %468 by %c117_i32_40 dim 1 : vector<8x128xf32>, i32 -> vector<8x128xf32>
    %c31 = arith.constant 31 : index
    %537 = memref.load %arg1[%c31] : memref<234xf32, #tpu.memory_space<smem>>
    %538 = vector.broadcast %537 : f32 to vector<8x128xf32>
    %539 = arith.mulf %538, %536 : vector<8x128xf32>
    %540 = arith.addf %523, %539 : vector<8x128xf32>
    %c85 = arith.constant 85 : index
    %541 = memref.load %arg1[%c85] : memref<234xf32, #tpu.memory_space<smem>>
    %542 = vector.broadcast %541 : f32 to vector<8x128xf32>
    %543 = arith.mulf %542, %536 : vector<8x128xf32>
    %544 = arith.addf %527, %543 : vector<8x128xf32>
    %c139 = arith.constant 139 : index
    %545 = memref.load %arg1[%c139] : memref<234xf32, #tpu.memory_space<smem>>
    %546 = vector.broadcast %545 : f32 to vector<8x128xf32>
    %547 = arith.mulf %546, %536 : vector<8x128xf32>
    %548 = arith.addf %531, %547 : vector<8x128xf32>
    %c193 = arith.constant 193 : index
    %549 = memref.load %arg1[%c193] : memref<234xf32, #tpu.memory_space<smem>>
    %550 = vector.broadcast %549 : f32 to vector<8x128xf32>
    %551 = arith.mulf %550, %536 : vector<8x128xf32>
    %552 = arith.addf %535, %551 : vector<8x128xf32>
    %c116_i32_41 = arith.constant 116 : i32
    %553 = tpu.dynamic_rotate %468 by %c116_i32_41 dim 1 : vector<8x128xf32>, i32 -> vector<8x128xf32>
    %c32 = arith.constant 32 : index
    %554 = memref.load %arg1[%c32] : memref<234xf32, #tpu.memory_space<smem>>
    %555 = vector.broadcast %554 : f32 to vector<8x128xf32>
    %556 = arith.mulf %555, %553 : vector<8x128xf32>
    %557 = arith.addf %540, %556 : vector<8x128xf32>
    %c86 = arith.constant 86 : index
    %558 = memref.load %arg1[%c86] : memref<234xf32, #tpu.memory_space<smem>>
    %559 = vector.broadcast %558 : f32 to vector<8x128xf32>
    %560 = arith.mulf %559, %553 : vector<8x128xf32>
    %561 = arith.addf %544, %560 : vector<8x128xf32>
    %c140 = arith.constant 140 : index
    %562 = memref.load %arg1[%c140] : memref<234xf32, #tpu.memory_space<smem>>
    %563 = vector.broadcast %562 : f32 to vector<8x128xf32>
    %564 = arith.mulf %563, %553 : vector<8x128xf32>
    %565 = arith.addf %548, %564 : vector<8x128xf32>
    %c194 = arith.constant 194 : index
    %566 = memref.load %arg1[%c194] : memref<234xf32, #tpu.memory_space<smem>>
    %567 = vector.broadcast %566 : f32 to vector<8x128xf32>
    %568 = arith.mulf %567, %553 : vector<8x128xf32>
    %569 = arith.addf %552, %568 : vector<8x128xf32>
    %c108_i32_42 = arith.constant 108 : i32
    %570 = tpu.dynamic_rotate %468 by %c108_i32_42 dim 1 : vector<8x128xf32>, i32 -> vector<8x128xf32>
    %c33 = arith.constant 33 : index
    %571 = memref.load %arg1[%c33] : memref<234xf32, #tpu.memory_space<smem>>
    %572 = vector.broadcast %571 : f32 to vector<8x128xf32>
    %573 = arith.mulf %572, %570 : vector<8x128xf32>
    %574 = arith.addf %557, %573 : vector<8x128xf32>
    %c87 = arith.constant 87 : index
    %575 = memref.load %arg1[%c87] : memref<234xf32, #tpu.memory_space<smem>>
    %576 = vector.broadcast %575 : f32 to vector<8x128xf32>
    %577 = arith.mulf %576, %570 : vector<8x128xf32>
    %578 = arith.addf %561, %577 : vector<8x128xf32>
    %c141 = arith.constant 141 : index
    %579 = memref.load %arg1[%c141] : memref<234xf32, #tpu.memory_space<smem>>
    %580 = vector.broadcast %579 : f32 to vector<8x128xf32>
    %581 = arith.mulf %580, %570 : vector<8x128xf32>
    %582 = arith.addf %565, %581 : vector<8x128xf32>
    %c195 = arith.constant 195 : index
    %583 = memref.load %arg1[%c195] : memref<234xf32, #tpu.memory_space<smem>>
    %584 = vector.broadcast %583 : f32 to vector<8x128xf32>
    %585 = arith.mulf %584, %570 : vector<8x128xf32>
    %586 = arith.addf %569, %585 : vector<8x128xf32>
    %c107_i32_43 = arith.constant 107 : i32
    %587 = tpu.dynamic_rotate %468 by %c107_i32_43 dim 1 : vector<8x128xf32>, i32 -> vector<8x128xf32>
    %c34 = arith.constant 34 : index
    %588 = memref.load %arg1[%c34] : memref<234xf32, #tpu.memory_space<smem>>
    %589 = vector.broadcast %588 : f32 to vector<8x128xf32>
    %590 = arith.mulf %589, %587 : vector<8x128xf32>
    %591 = arith.addf %574, %590 : vector<8x128xf32>
    %c88 = arith.constant 88 : index
    %592 = memref.load %arg1[%c88] : memref<234xf32, #tpu.memory_space<smem>>
    %593 = vector.broadcast %592 : f32 to vector<8x128xf32>
    %594 = arith.mulf %593, %587 : vector<8x128xf32>
    %595 = arith.addf %578, %594 : vector<8x128xf32>
    %c142 = arith.constant 142 : index
    %596 = memref.load %arg1[%c142] : memref<234xf32, #tpu.memory_space<smem>>
    %597 = vector.broadcast %596 : f32 to vector<8x128xf32>
    %598 = arith.mulf %597, %587 : vector<8x128xf32>
    %599 = arith.addf %582, %598 : vector<8x128xf32>
    %c196 = arith.constant 196 : index
    %600 = memref.load %arg1[%c196] : memref<234xf32, #tpu.memory_space<smem>>
    %601 = vector.broadcast %600 : f32 to vector<8x128xf32>
    %602 = arith.mulf %601, %587 : vector<8x128xf32>
    %603 = arith.addf %586, %602 : vector<8x128xf32>
    %c106_i32_44 = arith.constant 106 : i32
    %604 = tpu.dynamic_rotate %468 by %c106_i32_44 dim 1 : vector<8x128xf32>, i32 -> vector<8x128xf32>
    %c35 = arith.constant 35 : index
    %605 = memref.load %arg1[%c35] : memref<234xf32, #tpu.memory_space<smem>>
    %606 = vector.broadcast %605 : f32 to vector<8x128xf32>
    %607 = arith.mulf %606, %604 : vector<8x128xf32>
    %608 = arith.addf %591, %607 : vector<8x128xf32>
    %c89 = arith.constant 89 : index
    %609 = memref.load %arg1[%c89] : memref<234xf32, #tpu.memory_space<smem>>
    %610 = vector.broadcast %609 : f32 to vector<8x128xf32>
    %611 = arith.mulf %610, %604 : vector<8x128xf32>
    %612 = arith.addf %595, %611 : vector<8x128xf32>
    %c143 = arith.constant 143 : index
    %613 = memref.load %arg1[%c143] : memref<234xf32, #tpu.memory_space<smem>>
    %614 = vector.broadcast %613 : f32 to vector<8x128xf32>
    %615 = arith.mulf %614, %604 : vector<8x128xf32>
    %616 = arith.addf %599, %615 : vector<8x128xf32>
    %c197 = arith.constant 197 : index
    %617 = memref.load %arg1[%c197] : memref<234xf32, #tpu.memory_space<smem>>
    %618 = vector.broadcast %617 : f32 to vector<8x128xf32>
    %619 = arith.mulf %618, %604 : vector<8x128xf32>
    %620 = arith.addf %603, %619 : vector<8x128xf32>
    %c0_45 = arith.constant 0 : index
    %c1_46 = arith.constant 1 : index
    %c1_47 = arith.constant 1 : index
    %c0_48 = arith.constant 0 : index
    %621 = vector.load %arg3[%c0_45, %c1_46, %c1_47, %c0_48] : memref<1x2x10x128xf32, #tpu.memory_space<vmem>>, vector<1x1x8x128xf32>
    %622 = vector.shape_cast %621 : vector<1x1x8x128xf32> to vector<8x128xf32>
    %c36 = arith.constant 36 : index
    %623 = memref.load %arg1[%c36] : memref<234xf32, #tpu.memory_space<smem>>
    %624 = vector.broadcast %623 : f32 to vector<8x128xf32>
    %625 = arith.mulf %624, %622 : vector<8x128xf32>
    %626 = arith.addf %608, %625 : vector<8x128xf32>
    %c90 = arith.constant 90 : index
    %627 = memref.load %arg1[%c90] : memref<234xf32, #tpu.memory_space<smem>>
    %628 = vector.broadcast %627 : f32 to vector<8x128xf32>
    %629 = arith.mulf %628, %622 : vector<8x128xf32>
    %630 = arith.addf %612, %629 : vector<8x128xf32>
    %c144 = arith.constant 144 : index
    %631 = memref.load %arg1[%c144] : memref<234xf32, #tpu.memory_space<smem>>
    %632 = vector.broadcast %631 : f32 to vector<8x128xf32>
    %633 = arith.mulf %632, %622 : vector<8x128xf32>
    %634 = arith.addf %616, %633 : vector<8x128xf32>
    %c198 = arith.constant 198 : index
    %635 = memref.load %arg1[%c198] : memref<234xf32, #tpu.memory_space<smem>>
    %636 = vector.broadcast %635 : f32 to vector<8x128xf32>
    %637 = arith.mulf %636, %622 : vector<8x128xf32>
    %638 = arith.addf %620, %637 : vector<8x128xf32>
    %c127_i32_49 = arith.constant 127 : i32
    %639 = tpu.dynamic_rotate %622 by %c127_i32_49 dim 1 : vector<8x128xf32>, i32 -> vector<8x128xf32>
    %c37 = arith.constant 37 : index
    %640 = memref.load %arg1[%c37] : memref<234xf32, #tpu.memory_space<smem>>
    %641 = vector.broadcast %640 : f32 to vector<8x128xf32>
    %642 = arith.mulf %641, %639 : vector<8x128xf32>
    %643 = arith.addf %626, %642 : vector<8x128xf32>
    %c91 = arith.constant 91 : index
    %644 = memref.load %arg1[%c91] : memref<234xf32, #tpu.memory_space<smem>>
    %645 = vector.broadcast %644 : f32 to vector<8x128xf32>
    %646 = arith.mulf %645, %639 : vector<8x128xf32>
    %647 = arith.addf %630, %646 : vector<8x128xf32>
    %c145 = arith.constant 145 : index
    %648 = memref.load %arg1[%c145] : memref<234xf32, #tpu.memory_space<smem>>
    %649 = vector.broadcast %648 : f32 to vector<8x128xf32>
    %650 = arith.mulf %649, %639 : vector<8x128xf32>
    %651 = arith.addf %634, %650 : vector<8x128xf32>
    %c199 = arith.constant 199 : index
    %652 = memref.load %arg1[%c199] : memref<234xf32, #tpu.memory_space<smem>>
    %653 = vector.broadcast %652 : f32 to vector<8x128xf32>
    %654 = arith.mulf %653, %639 : vector<8x128xf32>
    %655 = arith.addf %638, %654 : vector<8x128xf32>
    %c126_i32_50 = arith.constant 126 : i32
    %656 = tpu.dynamic_rotate %622 by %c126_i32_50 dim 1 : vector<8x128xf32>, i32 -> vector<8x128xf32>
    %c38 = arith.constant 38 : index
    %657 = memref.load %arg1[%c38] : memref<234xf32, #tpu.memory_space<smem>>
    %658 = vector.broadcast %657 : f32 to vector<8x128xf32>
    %659 = arith.mulf %658, %656 : vector<8x128xf32>
    %660 = arith.addf %643, %659 : vector<8x128xf32>
    %c92 = arith.constant 92 : index
    %661 = memref.load %arg1[%c92] : memref<234xf32, #tpu.memory_space<smem>>
    %662 = vector.broadcast %661 : f32 to vector<8x128xf32>
    %663 = arith.mulf %662, %656 : vector<8x128xf32>
    %664 = arith.addf %647, %663 : vector<8x128xf32>
    %c146 = arith.constant 146 : index
    %665 = memref.load %arg1[%c146] : memref<234xf32, #tpu.memory_space<smem>>
    %666 = vector.broadcast %665 : f32 to vector<8x128xf32>
    %667 = arith.mulf %666, %656 : vector<8x128xf32>
    %668 = arith.addf %651, %667 : vector<8x128xf32>
    %c200 = arith.constant 200 : index
    %669 = memref.load %arg1[%c200] : memref<234xf32, #tpu.memory_space<smem>>
    %670 = vector.broadcast %669 : f32 to vector<8x128xf32>
    %671 = arith.mulf %670, %656 : vector<8x128xf32>
    %672 = arith.addf %655, %671 : vector<8x128xf32>
    %c118_i32_51 = arith.constant 118 : i32
    %673 = tpu.dynamic_rotate %622 by %c118_i32_51 dim 1 : vector<8x128xf32>, i32 -> vector<8x128xf32>
    %c39 = arith.constant 39 : index
    %674 = memref.load %arg1[%c39] : memref<234xf32, #tpu.memory_space<smem>>
    %675 = vector.broadcast %674 : f32 to vector<8x128xf32>
    %676 = arith.mulf %675, %673 : vector<8x128xf32>
    %677 = arith.addf %660, %676 : vector<8x128xf32>
    %c93 = arith.constant 93 : index
    %678 = memref.load %arg1[%c93] : memref<234xf32, #tpu.memory_space<smem>>
    %679 = vector.broadcast %678 : f32 to vector<8x128xf32>
    %680 = arith.mulf %679, %673 : vector<8x128xf32>
    %681 = arith.addf %664, %680 : vector<8x128xf32>
    %c147 = arith.constant 147 : index
    %682 = memref.load %arg1[%c147] : memref<234xf32, #tpu.memory_space<smem>>
    %683 = vector.broadcast %682 : f32 to vector<8x128xf32>
    %684 = arith.mulf %683, %673 : vector<8x128xf32>
    %685 = arith.addf %668, %684 : vector<8x128xf32>
    %c201 = arith.constant 201 : index
    %686 = memref.load %arg1[%c201] : memref<234xf32, #tpu.memory_space<smem>>
    %687 = vector.broadcast %686 : f32 to vector<8x128xf32>
    %688 = arith.mulf %687, %673 : vector<8x128xf32>
    %689 = arith.addf %672, %688 : vector<8x128xf32>
    %c117_i32_52 = arith.constant 117 : i32
    %690 = tpu.dynamic_rotate %622 by %c117_i32_52 dim 1 : vector<8x128xf32>, i32 -> vector<8x128xf32>
    %c40 = arith.constant 40 : index
    %691 = memref.load %arg1[%c40] : memref<234xf32, #tpu.memory_space<smem>>
    %692 = vector.broadcast %691 : f32 to vector<8x128xf32>
    %693 = arith.mulf %692, %690 : vector<8x128xf32>
    %694 = arith.addf %677, %693 : vector<8x128xf32>
    %c94 = arith.constant 94 : index
    %695 = memref.load %arg1[%c94] : memref<234xf32, #tpu.memory_space<smem>>
    %696 = vector.broadcast %695 : f32 to vector<8x128xf32>
    %697 = arith.mulf %696, %690 : vector<8x128xf32>
    %698 = arith.addf %681, %697 : vector<8x128xf32>
    %c148 = arith.constant 148 : index
    %699 = memref.load %arg1[%c148] : memref<234xf32, #tpu.memory_space<smem>>
    %700 = vector.broadcast %699 : f32 to vector<8x128xf32>
    %701 = arith.mulf %700, %690 : vector<8x128xf32>
    %702 = arith.addf %685, %701 : vector<8x128xf32>
    %c202 = arith.constant 202 : index
    %703 = memref.load %arg1[%c202] : memref<234xf32, #tpu.memory_space<smem>>
    %704 = vector.broadcast %703 : f32 to vector<8x128xf32>
    %705 = arith.mulf %704, %690 : vector<8x128xf32>
    %706 = arith.addf %689, %705 : vector<8x128xf32>
    %c116_i32_53 = arith.constant 116 : i32
    %707 = tpu.dynamic_rotate %622 by %c116_i32_53 dim 1 : vector<8x128xf32>, i32 -> vector<8x128xf32>
    %c41 = arith.constant 41 : index
    %708 = memref.load %arg1[%c41] : memref<234xf32, #tpu.memory_space<smem>>
    %709 = vector.broadcast %708 : f32 to vector<8x128xf32>
    %710 = arith.mulf %709, %707 : vector<8x128xf32>
    %711 = arith.addf %694, %710 : vector<8x128xf32>
    %c95 = arith.constant 95 : index
    %712 = memref.load %arg1[%c95] : memref<234xf32, #tpu.memory_space<smem>>
    %713 = vector.broadcast %712 : f32 to vector<8x128xf32>
    %714 = arith.mulf %713, %707 : vector<8x128xf32>
    %715 = arith.addf %698, %714 : vector<8x128xf32>
    %c149 = arith.constant 149 : index
    %716 = memref.load %arg1[%c149] : memref<234xf32, #tpu.memory_space<smem>>
    %717 = vector.broadcast %716 : f32 to vector<8x128xf32>
    %718 = arith.mulf %717, %707 : vector<8x128xf32>
    %719 = arith.addf %702, %718 : vector<8x128xf32>
    %c203 = arith.constant 203 : index
    %720 = memref.load %arg1[%c203] : memref<234xf32, #tpu.memory_space<smem>>
    %721 = vector.broadcast %720 : f32 to vector<8x128xf32>
    %722 = arith.mulf %721, %707 : vector<8x128xf32>
    %723 = arith.addf %706, %722 : vector<8x128xf32>
    %c108_i32_54 = arith.constant 108 : i32
    %724 = tpu.dynamic_rotate %622 by %c108_i32_54 dim 1 : vector<8x128xf32>, i32 -> vector<8x128xf32>
    %c42 = arith.constant 42 : index
    %725 = memref.load %arg1[%c42] : memref<234xf32, #tpu.memory_space<smem>>
    %726 = vector.broadcast %725 : f32 to vector<8x128xf32>
    %727 = arith.mulf %726, %724 : vector<8x128xf32>
    %728 = arith.addf %711, %727 : vector<8x128xf32>
    %c96 = arith.constant 96 : index
    %729 = memref.load %arg1[%c96] : memref<234xf32, #tpu.memory_space<smem>>
    %730 = vector.broadcast %729 : f32 to vector<8x128xf32>
    %731 = arith.mulf %730, %724 : vector<8x128xf32>
    %732 = arith.addf %715, %731 : vector<8x128xf32>
    %c150 = arith.constant 150 : index
    %733 = memref.load %arg1[%c150] : memref<234xf32, #tpu.memory_space<smem>>
    %734 = vector.broadcast %733 : f32 to vector<8x128xf32>
    %735 = arith.mulf %734, %724 : vector<8x128xf32>
    %736 = arith.addf %719, %735 : vector<8x128xf32>
    %c204 = arith.constant 204 : index
    %737 = memref.load %arg1[%c204] : memref<234xf32, #tpu.memory_space<smem>>
    %738 = vector.broadcast %737 : f32 to vector<8x128xf32>
    %739 = arith.mulf %738, %724 : vector<8x128xf32>
    %740 = arith.addf %723, %739 : vector<8x128xf32>
    %c107_i32_55 = arith.constant 107 : i32
    %741 = tpu.dynamic_rotate %622 by %c107_i32_55 dim 1 : vector<8x128xf32>, i32 -> vector<8x128xf32>
    %c43 = arith.constant 43 : index
    %742 = memref.load %arg1[%c43] : memref<234xf32, #tpu.memory_space<smem>>
    %743 = vector.broadcast %742 : f32 to vector<8x128xf32>
    %744 = arith.mulf %743, %741 : vector<8x128xf32>
    %745 = arith.addf %728, %744 : vector<8x128xf32>
    %c97 = arith.constant 97 : index
    %746 = memref.load %arg1[%c97] : memref<234xf32, #tpu.memory_space<smem>>
    %747 = vector.broadcast %746 : f32 to vector<8x128xf32>
    %748 = arith.mulf %747, %741 : vector<8x128xf32>
    %749 = arith.addf %732, %748 : vector<8x128xf32>
    %c151 = arith.constant 151 : index
    %750 = memref.load %arg1[%c151] : memref<234xf32, #tpu.memory_space<smem>>
    %751 = vector.broadcast %750 : f32 to vector<8x128xf32>
    %752 = arith.mulf %751, %741 : vector<8x128xf32>
    %753 = arith.addf %736, %752 : vector<8x128xf32>
    %c205 = arith.constant 205 : index
    %754 = memref.load %arg1[%c205] : memref<234xf32, #tpu.memory_space<smem>>
    %755 = vector.broadcast %754 : f32 to vector<8x128xf32>
    %756 = arith.mulf %755, %741 : vector<8x128xf32>
    %757 = arith.addf %740, %756 : vector<8x128xf32>
    %c106_i32_56 = arith.constant 106 : i32
    %758 = tpu.dynamic_rotate %622 by %c106_i32_56 dim 1 : vector<8x128xf32>, i32 -> vector<8x128xf32>
    %c44 = arith.constant 44 : index
    %759 = memref.load %arg1[%c44] : memref<234xf32, #tpu.memory_space<smem>>
    %760 = vector.broadcast %759 : f32 to vector<8x128xf32>
    %761 = arith.mulf %760, %758 : vector<8x128xf32>
    %762 = arith.addf %745, %761 : vector<8x128xf32>
    %c98 = arith.constant 98 : index
    %763 = memref.load %arg1[%c98] : memref<234xf32, #tpu.memory_space<smem>>
    %764 = vector.broadcast %763 : f32 to vector<8x128xf32>
    %765 = arith.mulf %764, %758 : vector<8x128xf32>
    %766 = arith.addf %749, %765 : vector<8x128xf32>
    %c152 = arith.constant 152 : index
    %767 = memref.load %arg1[%c152] : memref<234xf32, #tpu.memory_space<smem>>
    %768 = vector.broadcast %767 : f32 to vector<8x128xf32>
    %769 = arith.mulf %768, %758 : vector<8x128xf32>
    %770 = arith.addf %753, %769 : vector<8x128xf32>
    %c206 = arith.constant 206 : index
    %771 = memref.load %arg1[%c206] : memref<234xf32, #tpu.memory_space<smem>>
    %772 = vector.broadcast %771 : f32 to vector<8x128xf32>
    %773 = arith.mulf %772, %758 : vector<8x128xf32>
    %774 = arith.addf %757, %773 : vector<8x128xf32>
    %c0_57 = arith.constant 0 : index
    %c1_58 = arith.constant 1 : index
    %c2_59 = arith.constant 2 : index
    %c0_60 = arith.constant 0 : index
    %775 = vector.load %arg3[%c0_57, %c1_58, %c2_59, %c0_60] : memref<1x2x10x128xf32, #tpu.memory_space<vmem>>, vector<1x1x8x128xf32>
    %776 = vector.shape_cast %775 : vector<1x1x8x128xf32> to vector<8x128xf32>
    %c45 = arith.constant 45 : index
    %777 = memref.load %arg1[%c45] : memref<234xf32, #tpu.memory_space<smem>>
    %778 = vector.broadcast %777 : f32 to vector<8x128xf32>
    %779 = arith.mulf %778, %776 : vector<8x128xf32>
    %780 = arith.addf %762, %779 : vector<8x128xf32>
    %c99 = arith.constant 99 : index
    %781 = memref.load %arg1[%c99] : memref<234xf32, #tpu.memory_space<smem>>
    %782 = vector.broadcast %781 : f32 to vector<8x128xf32>
    %783 = arith.mulf %782, %776 : vector<8x128xf32>
    %784 = arith.addf %766, %783 : vector<8x128xf32>
    %c153 = arith.constant 153 : index
    %785 = memref.load %arg1[%c153] : memref<234xf32, #tpu.memory_space<smem>>
    %786 = vector.broadcast %785 : f32 to vector<8x128xf32>
    %787 = arith.mulf %786, %776 : vector<8x128xf32>
    %788 = arith.addf %770, %787 : vector<8x128xf32>
    %c207 = arith.constant 207 : index
    %789 = memref.load %arg1[%c207] : memref<234xf32, #tpu.memory_space<smem>>
    %790 = vector.broadcast %789 : f32 to vector<8x128xf32>
    %791 = arith.mulf %790, %776 : vector<8x128xf32>
    %792 = arith.addf %774, %791 : vector<8x128xf32>
    %c127_i32_61 = arith.constant 127 : i32
    %793 = tpu.dynamic_rotate %776 by %c127_i32_61 dim 1 : vector<8x128xf32>, i32 -> vector<8x128xf32>
    %c46 = arith.constant 46 : index
    %794 = memref.load %arg1[%c46] : memref<234xf32, #tpu.memory_space<smem>>
    %795 = vector.broadcast %794 : f32 to vector<8x128xf32>
    %796 = arith.mulf %795, %793 : vector<8x128xf32>
    %797 = arith.addf %780, %796 : vector<8x128xf32>
    %c100 = arith.constant 100 : index
    %798 = memref.load %arg1[%c100] : memref<234xf32, #tpu.memory_space<smem>>
    %799 = vector.broadcast %798 : f32 to vector<8x128xf32>
    %800 = arith.mulf %799, %793 : vector<8x128xf32>
    %801 = arith.addf %784, %800 : vector<8x128xf32>
    %c154 = arith.constant 154 : index
    %802 = memref.load %arg1[%c154] : memref<234xf32, #tpu.memory_space<smem>>
    %803 = vector.broadcast %802 : f32 to vector<8x128xf32>
    %804 = arith.mulf %803, %793 : vector<8x128xf32>
    %805 = arith.addf %788, %804 : vector<8x128xf32>
    %c208 = arith.constant 208 : index
    %806 = memref.load %arg1[%c208] : memref<234xf32, #tpu.memory_space<smem>>
    %807 = vector.broadcast %806 : f32 to vector<8x128xf32>
    %808 = arith.mulf %807, %793 : vector<8x128xf32>
    %809 = arith.addf %792, %808 : vector<8x128xf32>
    %c126_i32_62 = arith.constant 126 : i32
    %810 = tpu.dynamic_rotate %776 by %c126_i32_62 dim 1 : vector<8x128xf32>, i32 -> vector<8x128xf32>
    %c47 = arith.constant 47 : index
    %811 = memref.load %arg1[%c47] : memref<234xf32, #tpu.memory_space<smem>>
    %812 = vector.broadcast %811 : f32 to vector<8x128xf32>
    %813 = arith.mulf %812, %810 : vector<8x128xf32>
    %814 = arith.addf %797, %813 : vector<8x128xf32>
    %c101 = arith.constant 101 : index
    %815 = memref.load %arg1[%c101] : memref<234xf32, #tpu.memory_space<smem>>
    %816 = vector.broadcast %815 : f32 to vector<8x128xf32>
    %817 = arith.mulf %816, %810 : vector<8x128xf32>
    %818 = arith.addf %801, %817 : vector<8x128xf32>
    %c155 = arith.constant 155 : index
    %819 = memref.load %arg1[%c155] : memref<234xf32, #tpu.memory_space<smem>>
    %820 = vector.broadcast %819 : f32 to vector<8x128xf32>
    %821 = arith.mulf %820, %810 : vector<8x128xf32>
    %822 = arith.addf %805, %821 : vector<8x128xf32>
    %c209 = arith.constant 209 : index
    %823 = memref.load %arg1[%c209] : memref<234xf32, #tpu.memory_space<smem>>
    %824 = vector.broadcast %823 : f32 to vector<8x128xf32>
    %825 = arith.mulf %824, %810 : vector<8x128xf32>
    %826 = arith.addf %809, %825 : vector<8x128xf32>
    %c118_i32_63 = arith.constant 118 : i32
    %827 = tpu.dynamic_rotate %776 by %c118_i32_63 dim 1 : vector<8x128xf32>, i32 -> vector<8x128xf32>
    %c48 = arith.constant 48 : index
    %828 = memref.load %arg1[%c48] : memref<234xf32, #tpu.memory_space<smem>>
    %829 = vector.broadcast %828 : f32 to vector<8x128xf32>
    %830 = arith.mulf %829, %827 : vector<8x128xf32>
    %831 = arith.addf %814, %830 : vector<8x128xf32>
    %c102 = arith.constant 102 : index
    %832 = memref.load %arg1[%c102] : memref<234xf32, #tpu.memory_space<smem>>
    %833 = vector.broadcast %832 : f32 to vector<8x128xf32>
    %834 = arith.mulf %833, %827 : vector<8x128xf32>
    %835 = arith.addf %818, %834 : vector<8x128xf32>
    %c156 = arith.constant 156 : index
    %836 = memref.load %arg1[%c156] : memref<234xf32, #tpu.memory_space<smem>>
    %837 = vector.broadcast %836 : f32 to vector<8x128xf32>
    %838 = arith.mulf %837, %827 : vector<8x128xf32>
    %839 = arith.addf %822, %838 : vector<8x128xf32>
    %c210 = arith.constant 210 : index
    %840 = memref.load %arg1[%c210] : memref<234xf32, #tpu.memory_space<smem>>
    %841 = vector.broadcast %840 : f32 to vector<8x128xf32>
    %842 = arith.mulf %841, %827 : vector<8x128xf32>
    %843 = arith.addf %826, %842 : vector<8x128xf32>
    %c117_i32_64 = arith.constant 117 : i32
    %844 = tpu.dynamic_rotate %776 by %c117_i32_64 dim 1 : vector<8x128xf32>, i32 -> vector<8x128xf32>
    %c49 = arith.constant 49 : index
    %845 = memref.load %arg1[%c49] : memref<234xf32, #tpu.memory_space<smem>>
    %846 = vector.broadcast %845 : f32 to vector<8x128xf32>
    %847 = arith.mulf %846, %844 : vector<8x128xf32>
    %848 = arith.addf %831, %847 : vector<8x128xf32>
    %c103 = arith.constant 103 : index
    %849 = memref.load %arg1[%c103] : memref<234xf32, #tpu.memory_space<smem>>
    %850 = vector.broadcast %849 : f32 to vector<8x128xf32>
    %851 = arith.mulf %850, %844 : vector<8x128xf32>
    %852 = arith.addf %835, %851 : vector<8x128xf32>
    %c157 = arith.constant 157 : index
    %853 = memref.load %arg1[%c157] : memref<234xf32, #tpu.memory_space<smem>>
    %854 = vector.broadcast %853 : f32 to vector<8x128xf32>
    %855 = arith.mulf %854, %844 : vector<8x128xf32>
    %856 = arith.addf %839, %855 : vector<8x128xf32>
    %c211 = arith.constant 211 : index
    %857 = memref.load %arg1[%c211] : memref<234xf32, #tpu.memory_space<smem>>
    %858 = vector.broadcast %857 : f32 to vector<8x128xf32>
    %859 = arith.mulf %858, %844 : vector<8x128xf32>
    %860 = arith.addf %843, %859 : vector<8x128xf32>
    %c116_i32_65 = arith.constant 116 : i32
    %861 = tpu.dynamic_rotate %776 by %c116_i32_65 dim 1 : vector<8x128xf32>, i32 -> vector<8x128xf32>
    %c50 = arith.constant 50 : index
    %862 = memref.load %arg1[%c50] : memref<234xf32, #tpu.memory_space<smem>>
    %863 = vector.broadcast %862 : f32 to vector<8x128xf32>
    %864 = arith.mulf %863, %861 : vector<8x128xf32>
    %865 = arith.addf %848, %864 : vector<8x128xf32>
    %c104 = arith.constant 104 : index
    %866 = memref.load %arg1[%c104] : memref<234xf32, #tpu.memory_space<smem>>
    %867 = vector.broadcast %866 : f32 to vector<8x128xf32>
    %868 = arith.mulf %867, %861 : vector<8x128xf32>
    %869 = arith.addf %852, %868 : vector<8x128xf32>
    %c158 = arith.constant 158 : index
    %870 = memref.load %arg1[%c158] : memref<234xf32, #tpu.memory_space<smem>>
    %871 = vector.broadcast %870 : f32 to vector<8x128xf32>
    %872 = arith.mulf %871, %861 : vector<8x128xf32>
    %873 = arith.addf %856, %872 : vector<8x128xf32>
    %c212 = arith.constant 212 : index
    %874 = memref.load %arg1[%c212] : memref<234xf32, #tpu.memory_space<smem>>
    %875 = vector.broadcast %874 : f32 to vector<8x128xf32>
    %876 = arith.mulf %875, %861 : vector<8x128xf32>
    %877 = arith.addf %860, %876 : vector<8x128xf32>
    %c108_i32_66 = arith.constant 108 : i32
    %878 = tpu.dynamic_rotate %776 by %c108_i32_66 dim 1 : vector<8x128xf32>, i32 -> vector<8x128xf32>
    %c51 = arith.constant 51 : index
    %879 = memref.load %arg1[%c51] : memref<234xf32, #tpu.memory_space<smem>>
    %880 = vector.broadcast %879 : f32 to vector<8x128xf32>
    %881 = arith.mulf %880, %878 : vector<8x128xf32>
    %882 = arith.addf %865, %881 : vector<8x128xf32>
    %c105 = arith.constant 105 : index
    %883 = memref.load %arg1[%c105] : memref<234xf32, #tpu.memory_space<smem>>
    %884 = vector.broadcast %883 : f32 to vector<8x128xf32>
    %885 = arith.mulf %884, %878 : vector<8x128xf32>
    %886 = arith.addf %869, %885 : vector<8x128xf32>
    %c159 = arith.constant 159 : index
    %887 = memref.load %arg1[%c159] : memref<234xf32, #tpu.memory_space<smem>>
    %888 = vector.broadcast %887 : f32 to vector<8x128xf32>
    %889 = arith.mulf %888, %878 : vector<8x128xf32>
    %890 = arith.addf %873, %889 : vector<8x128xf32>
    %c213 = arith.constant 213 : index
    %891 = memref.load %arg1[%c213] : memref<234xf32, #tpu.memory_space<smem>>
    %892 = vector.broadcast %891 : f32 to vector<8x128xf32>
    %893 = arith.mulf %892, %878 : vector<8x128xf32>
    %894 = arith.addf %877, %893 : vector<8x128xf32>
    %c107_i32_67 = arith.constant 107 : i32
    %895 = tpu.dynamic_rotate %776 by %c107_i32_67 dim 1 : vector<8x128xf32>, i32 -> vector<8x128xf32>
    %c52 = arith.constant 52 : index
    %896 = memref.load %arg1[%c52] : memref<234xf32, #tpu.memory_space<smem>>
    %897 = vector.broadcast %896 : f32 to vector<8x128xf32>
    %898 = arith.mulf %897, %895 : vector<8x128xf32>
    %899 = arith.addf %882, %898 : vector<8x128xf32>
    %c106 = arith.constant 106 : index
    %900 = memref.load %arg1[%c106] : memref<234xf32, #tpu.memory_space<smem>>
    %901 = vector.broadcast %900 : f32 to vector<8x128xf32>
    %902 = arith.mulf %901, %895 : vector<8x128xf32>
    %903 = arith.addf %886, %902 : vector<8x128xf32>
    %c160 = arith.constant 160 : index
    %904 = memref.load %arg1[%c160] : memref<234xf32, #tpu.memory_space<smem>>
    %905 = vector.broadcast %904 : f32 to vector<8x128xf32>
    %906 = arith.mulf %905, %895 : vector<8x128xf32>
    %907 = arith.addf %890, %906 : vector<8x128xf32>
    %c214 = arith.constant 214 : index
    %908 = memref.load %arg1[%c214] : memref<234xf32, #tpu.memory_space<smem>>
    %909 = vector.broadcast %908 : f32 to vector<8x128xf32>
    %910 = arith.mulf %909, %895 : vector<8x128xf32>
    %911 = arith.addf %894, %910 : vector<8x128xf32>
    %c106_i32_68 = arith.constant 106 : i32
    %912 = tpu.dynamic_rotate %776 by %c106_i32_68 dim 1 : vector<8x128xf32>, i32 -> vector<8x128xf32>
    %c53 = arith.constant 53 : index
    %913 = memref.load %arg1[%c53] : memref<234xf32, #tpu.memory_space<smem>>
    %914 = vector.broadcast %913 : f32 to vector<8x128xf32>
    %915 = arith.mulf %914, %912 : vector<8x128xf32>
    %916 = arith.addf %899, %915 : vector<8x128xf32>
    %c107 = arith.constant 107 : index
    %917 = memref.load %arg1[%c107] : memref<234xf32, #tpu.memory_space<smem>>
    %918 = vector.broadcast %917 : f32 to vector<8x128xf32>
    %919 = arith.mulf %918, %912 : vector<8x128xf32>
    %920 = arith.addf %903, %919 : vector<8x128xf32>
    %c161 = arith.constant 161 : index
    %921 = memref.load %arg1[%c161] : memref<234xf32, #tpu.memory_space<smem>>
    %922 = vector.broadcast %921 : f32 to vector<8x128xf32>
    %923 = arith.mulf %922, %912 : vector<8x128xf32>
    %924 = arith.addf %907, %923 : vector<8x128xf32>
    %c215 = arith.constant 215 : index
    %925 = memref.load %arg1[%c215] : memref<234xf32, #tpu.memory_space<smem>>
    %926 = vector.broadcast %925 : f32 to vector<8x128xf32>
    %927 = arith.mulf %926, %912 : vector<8x128xf32>
    %928 = arith.addf %911, %927 : vector<8x128xf32>
    %929 = vector.broadcast %0 : vector<1x128xf32> to vector<8x128xf32>
    %930 = arith.mulf %916, %929 : vector<8x128xf32>
    %931 = vector.shape_cast %930 : vector<8x128xf32> to vector<1x8x128xf32>
    %cst_69 = arith.constant dense<0.000000e+00> : vector<1xf32>
    %932 = vector.multi_reduction <add>, %931, %cst_69 [1, 2] : vector<1x8x128xf32> to vector<1xf32>
    %933 = vector.shape_cast %932 : vector<1xf32> to vector<1x1x1xf32>
    %934 = vector.extract %933[0, 0, 0] : f32 from vector<1x1x1xf32>
    %cst_70 = arith.constant 0.001953125 : f32
    %935 = arith.mulf %934, %cst_70 : f32
    %936 = vector.broadcast %935 : f32 to vector<8x128xf32>
    %937 = arith.subf %916, %936 : vector<8x128xf32>
    %938 = vector.broadcast %0 : vector<1x128xf32> to vector<8x128xf32>
    %939 = arith.mulf %937, %938 : vector<8x128xf32>
    %940 = arith.mulf %939, %939 : vector<8x128xf32>
    %941 = vector.shape_cast %940 : vector<8x128xf32> to vector<1x8x128xf32>
    %cst_71 = arith.constant dense<0.000000e+00> : vector<1xf32>
    %942 = vector.multi_reduction <add>, %941, %cst_71 [1, 2] : vector<1x8x128xf32> to vector<1xf32>
    %943 = vector.shape_cast %942 : vector<1xf32> to vector<1x1x1xf32>
    %944 = vector.extract %943[0, 0, 0] : f32 from vector<1x1x1xf32>
    %cst_72 = arith.constant 0.001953125 : f32
    %945 = arith.mulf %944, %cst_72 : f32
    %946 = vector.broadcast %935 : f32 to vector<8x128xf32>
    %947 = arith.subf %916, %946 : vector<8x128xf32>
    %cst_73 = arith.constant 9.99999974E-6 : f32
    %948 = arith.addf %945, %cst_73 : f32
    %949 = math.rsqrt %948 : f32
    %950 = vector.broadcast %949 : f32 to vector<8x128xf32>
    %951 = arith.mulf %947, %950 : vector<8x128xf32>
    %cst_74 = arith.constant 0.000000e+00 : f32
    %952 = vector.broadcast %cst_74 : f32 to vector<8x128xf32>
    %953 = arith.cmpf oge, %951, %952 : vector<8x128xf32>
    %cst_75 = arith.constant 0.00999999977 : f32
    %954 = vector.broadcast %cst_75 : f32 to vector<8x128xf32>
    %955 = arith.mulf %954, %951 : vector<8x128xf32>
    %956 = arith.select %953, %951, %955 : vector<8x128xi1>, vector<8x128xf32>
    %957 = vector.broadcast %0 : vector<1x128xf32> to vector<8x128xf32>
    %958 = arith.mulf %920, %957 : vector<8x128xf32>
    %959 = vector.shape_cast %958 : vector<8x128xf32> to vector<1x8x128xf32>
    %cst_76 = arith.constant dense<0.000000e+00> : vector<1xf32>
    %960 = vector.multi_reduction <add>, %959, %cst_76 [1, 2] : vector<1x8x128xf32> to vector<1xf32>
    %961 = vector.shape_cast %960 : vector<1xf32> to vector<1x1x1xf32>
    %962 = vector.extract %961[0, 0, 0] : f32 from vector<1x1x1xf32>
    %cst_77 = arith.constant 0.001953125 : f32
    %963 = arith.mulf %962, %cst_77 : f32
    %964 = vector.broadcast %963 : f32 to vector<8x128xf32>
    %965 = arith.subf %920, %964 : vector<8x128xf32>
    %966 = vector.broadcast %0 : vector<1x128xf32> to vector<8x128xf32>
    %967 = arith.mulf %965, %966 : vector<8x128xf32>
    %968 = arith.mulf %967, %967 : vector<8x128xf32>
    %969 = vector.shape_cast %968 : vector<8x128xf32> to vector<1x8x128xf32>
    %cst_78 = arith.constant dense<0.000000e+00> : vector<1xf32>
    %970 = vector.multi_reduction <add>, %969, %cst_78 [1, 2] : vector<1x8x128xf32> to vector<1xf32>
    %971 = vector.shape_cast %970 : vector<1xf32> to vector<1x1x1xf32>
    %972 = vector.extract %971[0, 0, 0] : f32 from vector<1x1x1xf32>
    %cst_79 = arith.constant 0.001953125 : f32
    %973 = arith.mulf %972, %cst_79 : f32
    %974 = vector.broadcast %963 : f32 to vector<8x128xf32>
    %975 = arith.subf %920, %974 : vector<8x128xf32>
    %cst_80 = arith.constant 9.99999974E-6 : f32
    %976 = arith.addf %973, %cst_80 : f32
    %977 = math.rsqrt %976 : f32
    %978 = vector.broadcast %977 : f32 to vector<8x128xf32>
    %979 = arith.mulf %975, %978 : vector<8x128xf32>
    %cst_81 = arith.constant 0.000000e+00 : f32
    %980 = vector.broadcast %cst_81 : f32 to vector<8x128xf32>
    %981 = arith.cmpf oge, %979, %980 : vector<8x128xf32>
    %cst_82 = arith.constant 0.00999999977 : f32
    %982 = vector.broadcast %cst_82 : f32 to vector<8x128xf32>
    %983 = arith.mulf %982, %979 : vector<8x128xf32>
    %984 = arith.select %981, %979, %983 : vector<8x128xi1>, vector<8x128xf32>
    %985 = vector.broadcast %0 : vector<1x128xf32> to vector<8x128xf32>
    %986 = arith.mulf %924, %985 : vector<8x128xf32>
    %987 = vector.shape_cast %986 : vector<8x128xf32> to vector<1x8x128xf32>
    %cst_83 = arith.constant dense<0.000000e+00> : vector<1xf32>
    %988 = vector.multi_reduction <add>, %987, %cst_83 [1, 2] : vector<1x8x128xf32> to vector<1xf32>
    %989 = vector.shape_cast %988 : vector<1xf32> to vector<1x1x1xf32>
    %990 = vector.extract %989[0, 0, 0] : f32 from vector<1x1x1xf32>
    %cst_84 = arith.constant 0.001953125 : f32
    %991 = arith.mulf %990, %cst_84 : f32
    %992 = vector.broadcast %991 : f32 to vector<8x128xf32>
    %993 = arith.subf %924, %992 : vector<8x128xf32>
    %994 = vector.broadcast %0 : vector<1x128xf32> to vector<8x128xf32>
    %995 = arith.mulf %993, %994 : vector<8x128xf32>
    %996 = arith.mulf %995, %995 : vector<8x128xf32>
    %997 = vector.shape_cast %996 : vector<8x128xf32> to vector<1x8x128xf32>
    %cst_85 = arith.constant dense<0.000000e+00> : vector<1xf32>
    %998 = vector.multi_reduction <add>, %997, %cst_85 [1, 2] : vector<1x8x128xf32> to vector<1xf32>
    %999 = vector.shape_cast %998 : vector<1xf32> to vector<1x1x1xf32>
    %1000 = vector.extract %999[0, 0, 0] : f32 from vector<1x1x1xf32>
    %cst_86 = arith.constant 0.001953125 : f32
    %1001 = arith.mulf %1000, %cst_86 : f32
    %1002 = vector.broadcast %991 : f32 to vector<8x128xf32>
    %1003 = arith.subf %924, %1002 : vector<8x128xf32>
    %cst_87 = arith.constant 9.99999974E-6 : f32
    %1004 = arith.addf %1001, %cst_87 : f32
    %1005 = math.rsqrt %1004 : f32
    %1006 = vector.broadcast %1005 : f32 to vector<8x128xf32>
    %1007 = arith.mulf %1003, %1006 : vector<8x128xf32>
    %cst_88 = arith.constant 0.000000e+00 : f32
    %1008 = vector.broadcast %cst_88 : f32 to vector<8x128xf32>
    %1009 = arith.cmpf oge, %1007, %1008 : vector<8x128xf32>
    %cst_89 = arith.constant 0.00999999977 : f32
    %1010 = vector.broadcast %cst_89 : f32 to vector<8x128xf32>
    %1011 = arith.mulf %1010, %1007 : vector<8x128xf32>
    %1012 = arith.select %1009, %1007, %1011 : vector<8x128xi1>, vector<8x128xf32>
    %1013 = vector.broadcast %0 : vector<1x128xf32> to vector<8x128xf32>
    %1014 = arith.mulf %928, %1013 : vector<8x128xf32>
    %1015 = vector.shape_cast %1014 : vector<8x128xf32> to vector<1x8x128xf32>
    %cst_90 = arith.constant dense<0.000000e+00> : vector<1xf32>
    %1016 = vector.multi_reduction <add>, %1015, %cst_90 [1, 2] : vector<1x8x128xf32> to vector<1xf32>
    %1017 = vector.shape_cast %1016 : vector<1xf32> to vector<1x1x1xf32>
    %1018 = vector.extract %1017[0, 0, 0] : f32 from vector<1x1x1xf32>
    %cst_91 = arith.constant 0.001953125 : f32
    %1019 = arith.mulf %1018, %cst_91 : f32
    %1020 = vector.broadcast %1019 : f32 to vector<8x128xf32>
    %1021 = arith.subf %928, %1020 : vector<8x128xf32>
    %1022 = vector.broadcast %0 : vector<1x128xf32> to vector<8x128xf32>
    %1023 = arith.mulf %1021, %1022 : vector<8x128xf32>
    %1024 = arith.mulf %1023, %1023 : vector<8x128xf32>
    %1025 = vector.shape_cast %1024 : vector<8x128xf32> to vector<1x8x128xf32>
    %cst_92 = arith.constant dense<0.000000e+00> : vector<1xf32>
    %1026 = vector.multi_reduction <add>, %1025, %cst_92 [1, 2] : vector<1x8x128xf32> to vector<1xf32>
    %1027 = vector.shape_cast %1026 : vector<1xf32> to vector<1x1x1xf32>
    %1028 = vector.extract %1027[0, 0, 0] : f32 from vector<1x1x1xf32>
    %cst_93 = arith.constant 0.001953125 : f32
    %1029 = arith.mulf %1028, %cst_93 : f32
    %1030 = vector.broadcast %1019 : f32 to vector<8x128xf32>
    %1031 = arith.subf %928, %1030 : vector<8x128xf32>
    %cst_94 = arith.constant 9.99999974E-6 : f32
    %1032 = arith.addf %1029, %cst_94 : f32
    %1033 = math.rsqrt %1032 : f32
    %1034 = vector.broadcast %1033 : f32 to vector<8x128xf32>
    %1035 = arith.mulf %1031, %1034 : vector<8x128xf32>
    %cst_95 = arith.constant 0.000000e+00 : f32
    %1036 = vector.broadcast %cst_95 : f32 to vector<8x128xf32>
    %1037 = arith.cmpf oge, %1035, %1036 : vector<8x128xf32>
    %cst_96 = arith.constant 0.00999999977 : f32
    %1038 = vector.broadcast %cst_96 : f32 to vector<8x128xf32>
    %1039 = arith.mulf %1038, %1035 : vector<8x128xf32>
    %1040 = arith.select %1037, %1035, %1039 : vector<8x128xi1>, vector<8x128xf32>
    %cst_97 = arith.constant 0.000000e+00 : f32
    %1041 = vector.broadcast %cst_97 : f32 to vector<8x128xf32>
    %cst_98 = arith.constant 0.000000e+00 : f32
    %1042 = vector.broadcast %cst_98 : f32 to vector<8x128xf32>
    %c216 = arith.constant 216 : index
    %1043 = memref.load %arg1[%c216] : memref<234xf32, #tpu.memory_space<smem>>
    %1044 = vector.broadcast %1043 : f32 to vector<8x128xf32>
    %1045 = arith.mulf %1044, %956 : vector<8x128xf32>
    %1046 = arith.addf %1041, %1045 : vector<8x128xf32>
    %c220 = arith.constant 220 : index
    %1047 = memref.load %arg1[%c220] : memref<234xf32, #tpu.memory_space<smem>>
    %1048 = vector.broadcast %1047 : f32 to vector<8x128xf32>
    %1049 = arith.mulf %1048, %956 : vector<8x128xf32>
    %1050 = arith.addf %1042, %1049 : vector<8x128xf32>
    %c217 = arith.constant 217 : index
    %1051 = memref.load %arg1[%c217] : memref<234xf32, #tpu.memory_space<smem>>
    %1052 = vector.broadcast %1051 : f32 to vector<8x128xf32>
    %1053 = arith.mulf %1052, %984 : vector<8x128xf32>
    %1054 = arith.addf %1046, %1053 : vector<8x128xf32>
    %c221 = arith.constant 221 : index
    %1055 = memref.load %arg1[%c221] : memref<234xf32, #tpu.memory_space<smem>>
    %1056 = vector.broadcast %1055 : f32 to vector<8x128xf32>
    %1057 = arith.mulf %1056, %984 : vector<8x128xf32>
    %1058 = arith.addf %1050, %1057 : vector<8x128xf32>
    %c218 = arith.constant 218 : index
    %1059 = memref.load %arg1[%c218] : memref<234xf32, #tpu.memory_space<smem>>
    %1060 = vector.broadcast %1059 : f32 to vector<8x128xf32>
    %1061 = arith.mulf %1060, %1012 : vector<8x128xf32>
    %1062 = arith.addf %1054, %1061 : vector<8x128xf32>
    %c222 = arith.constant 222 : index
    %1063 = memref.load %arg1[%c222] : memref<234xf32, #tpu.memory_space<smem>>
    %1064 = vector.broadcast %1063 : f32 to vector<8x128xf32>
    %1065 = arith.mulf %1064, %1012 : vector<8x128xf32>
    %1066 = arith.addf %1058, %1065 : vector<8x128xf32>
    %c219 = arith.constant 219 : index
    %1067 = memref.load %arg1[%c219] : memref<234xf32, #tpu.memory_space<smem>>
    %1068 = vector.broadcast %1067 : f32 to vector<8x128xf32>
    %1069 = arith.mulf %1068, %1040 : vector<8x128xf32>
    %1070 = arith.addf %1062, %1069 : vector<8x128xf32>
    %c223 = arith.constant 223 : index
    %1071 = memref.load %arg1[%c223] : memref<234xf32, #tpu.memory_space<smem>>
    %1072 = vector.broadcast %1071 : f32 to vector<8x128xf32>
    %1073 = arith.mulf %1072, %1040 : vector<8x128xf32>
    %1074 = arith.addf %1066, %1073 : vector<8x128xf32>
    %1075 = arith.negf %1070 : vector<8x128xf32>
    %1076 = math.exp %1075 : vector<8x128xf32>
    %cst_99 = arith.constant 1.000000e+00 : f32
    %1077 = vector.broadcast %cst_99 : f32 to vector<8x128xf32>
    %1078 = arith.addf %1077, %1076 : vector<8x128xf32>
    %1079 = arith.divf %1077, %1078 : vector<8x128xf32>
    %1080 = arith.mulf %1079, %1074 : vector<8x128xf32>
    %1081 = arith.negf %1080 : vector<8x128xf32>
    %1082 = math.exp %1081 : vector<8x128xf32>
    %cst_100 = arith.constant 1.000000e+00 : f32
    %1083 = vector.broadcast %cst_100 : f32 to vector<8x128xf32>
    %1084 = arith.addf %1083, %1082 : vector<8x128xf32>
    %1085 = arith.divf %1083, %1084 : vector<8x128xf32>
    %1086 = arith.mulf %1079, %1085 : vector<8x128xf32>
    %1087 = arith.mulf %956, %1086 : vector<8x128xf32>
    %c0_101 = arith.constant 0 : index
    %c0_102 = arith.constant 0 : index
    %c0_103 = arith.constant 0 : index
    %c0_104 = arith.constant 0 : index
    %1088 = vector.load %arg4[%c0_101, %c0_102, %c0_103, %c0_104] : memref<1x4x8x128xf32, #tpu.memory_space<vmem>>, vector<1x1x8x128xf32>
    %1089 = vector.shape_cast %1088 : vector<1x1x8x128xf32> to vector<8x128xf32>
    %1090 = vector.shape_cast %1087 : vector<8x128xf32> to vector<1x1x8x128xf32>
    tpu.vector_store %arg4[%c0_101, %c0_102, %c0_103, %c0_104], %1090 {strides = array<i32>} : memref<1x4x8x128xf32, #tpu.memory_space<vmem>>, vector<1x1x8x128xf32>,
    %1091 = arith.mulf %984, %1086 : vector<8x128xf32>
    %c0_105 = arith.constant 0 : index
    %c1_106 = arith.constant 1 : index
    %c0_107 = arith.constant 0 : index
    %c0_108 = arith.constant 0 : index
    %1092 = vector.load %arg4[%c0_105, %c1_106, %c0_107, %c0_108] : memref<1x4x8x128xf32, #tpu.memory_space<vmem>>, vector<1x1x8x128xf32>
    %1093 = vector.shape_cast %1092 : vector<1x1x8x128xf32> to vector<8x128xf32>
    %1094 = vector.shape_cast %1091 : vector<8x128xf32> to vector<1x1x8x128xf32>
    tpu.vector_store %arg4[%c0_105, %c1_106, %c0_107, %c0_108], %1094 {strides = array<i32>} : memref<1x4x8x128xf32, #tpu.memory_space<vmem>>, vector<1x1x8x128xf32>,
    %1095 = arith.mulf %1012, %1086 : vector<8x128xf32>
    %c0_109 = arith.constant 0 : index
    %c2_110 = arith.constant 2 : index
    %c0_111 = arith.constant 0 : index
    %c0_112 = arith.constant 0 : index
    %1096 = vector.load %arg4[%c0_109, %c2_110, %c0_111, %c0_112] : memref<1x4x8x128xf32, #tpu.memory_space<vmem>>, vector<1x1x8x128xf32>
    %1097 = vector.shape_cast %1096 : vector<1x1x8x128xf32> to vector<8x128xf32>
    %1098 = vector.shape_cast %1095 : vector<8x128xf32> to vector<1x1x8x128xf32>
    tpu.vector_store %arg4[%c0_109, %c2_110, %c0_111, %c0_112], %1098 {strides = array<i32>} : memref<1x4x8x128xf32, #tpu.memory_space<vmem>>, vector<1x1x8x128xf32>,
    %1099 = arith.mulf %1040, %1086 : vector<8x128xf32>
    %c0_113 = arith.constant 0 : index
    %c3_114 = arith.constant 3 : index
    %c0_115 = arith.constant 0 : index
    %c0_116 = arith.constant 0 : index
    %1100 = vector.load %arg4[%c0_113, %c3_114, %c0_115, %c0_116] : memref<1x4x8x128xf32, #tpu.memory_space<vmem>>, vector<1x1x8x128xf32>
    %1101 = vector.shape_cast %1100 : vector<1x1x8x128xf32> to vector<8x128xf32>
    %1102 = vector.shape_cast %1099 : vector<8x128xf32> to vector<1x1x8x128xf32>
    tpu.vector_store %arg4[%c0_113, %c3_114, %c0_115, %c0_116], %1102 {strides = array<i32>} : memref<1x4x8x128xf32, #tpu.memory_space<vmem>>, vector<1x1x8x128xf32>,
    %cst_117 = arith.constant 0.000000e+00 : f32
    %1103 = vector.broadcast %cst_117 : f32 to vector<8x128xf32>
    %c232 = arith.constant 232 : index
    %1104 = memref.load %arg1[%c232] : memref<234xf32, #tpu.memory_space<smem>>
    %1105 = vector.broadcast %1104 : f32 to vector<8x128xf32>
    %1106 = arith.addf %1103, %1105 : vector<8x128xf32>
    %c224 = arith.constant 224 : index
    %1107 = memref.load %arg1[%c224] : memref<234xf32, #tpu.memory_space<smem>>
    %1108 = vector.broadcast %1107 : f32 to vector<8x128xf32>
    %1109 = arith.mulf %1108, %1087 : vector<8x128xf32>
    %1110 = arith.addf %1106, %1109 : vector<8x128xf32>
    %c225 = arith.constant 225 : index
    %1111 = memref.load %arg1[%c225] : memref<234xf32, #tpu.memory_space<smem>>
    %1112 = vector.broadcast %1111 : f32 to vector<8x128xf32>
    %1113 = arith.mulf %1112, %1091 : vector<8x128xf32>
    %1114 = arith.addf %1110, %1113 : vector<8x128xf32>
    %c226 = arith.constant 226 : index
    %1115 = memref.load %arg1[%c226] : memref<234xf32, #tpu.memory_space<smem>>
    %1116 = vector.broadcast %1115 : f32 to vector<8x128xf32>
    %1117 = arith.mulf %1116, %1095 : vector<8x128xf32>
    %1118 = arith.addf %1114, %1117 : vector<8x128xf32>
    %c227 = arith.constant 227 : index
    %1119 = memref.load %arg1[%c227] : memref<234xf32, #tpu.memory_space<smem>>
    %1120 = vector.broadcast %1119 : f32 to vector<8x128xf32>
    %1121 = arith.mulf %1120, %1099 : vector<8x128xf32>
    %1122 = arith.addf %1118, %1121 : vector<8x128xf32>
    %c0_118 = arith.constant 0 : index
    %c0_119 = arith.constant 0 : index
    %c0_120 = arith.constant 0 : index
    %c0_121 = arith.constant 0 : index
    %1123 = vector.load %arg5[%c0_118, %c0_119, %c0_120, %c0_121] : memref<1x2x8x128xf32, #tpu.memory_space<vmem>>, vector<1x1x8x128xf32>
    %1124 = vector.shape_cast %1123 : vector<1x1x8x128xf32> to vector<8x128xf32>
    %1125 = vector.shape_cast %1122 : vector<8x128xf32> to vector<1x1x8x128xf32>
    tpu.vector_store %arg5[%c0_118, %c0_119, %c0_120, %c0_121], %1125 {strides = array<i32>} : memref<1x2x8x128xf32, #tpu.memory_space<vmem>>, vector<1x1x8x128xf32>,
    %cst_122 = arith.constant 0.000000e+00 : f32
    %1126 = vector.broadcast %cst_122 : f32 to vector<8x128xf32>
    %c233 = arith.constant 233 : index
    %1127 = memref.load %arg1[%c233] : memref<234xf32, #tpu.memory_space<smem>>
    %1128 = vector.broadcast %1127 : f32 to vector<8x128xf32>
    %1129 = arith.addf %1126, %1128 : vector<8x128xf32>
    %c228 = arith.constant 228 : index
    %1130 = memref.load %arg1[%c228] : memref<234xf32, #tpu.memory_space<smem>>
    %1131 = vector.broadcast %1130 : f32 to vector<8x128xf32>
    %1132 = arith.mulf %1131, %1087 : vector<8x128xf32>
    %1133 = arith.addf %1129, %1132 : vector<8x128xf32>
    %c229 = arith.constant 229 : index
    %1134 = memref.load %arg1[%c229] : memref<234xf32, #tpu.memory_space<smem>>
    %1135 = vector.broadcast %1134 : f32 to vector<8x128xf32>
    %1136 = arith.mulf %1135, %1091 : vector<8x128xf32>
    %1137 = arith.addf %1133, %1136 : vector<8x128xf32>
    %c230 = arith.constant 230 : index
    %1138 = memref.load %arg1[%c230] : memref<234xf32, #tpu.memory_space<smem>>
    %1139 = vector.broadcast %1138 : f32 to vector<8x128xf32>
    %1140 = arith.mulf %1139, %1095 : vector<8x128xf32>
    %1141 = arith.addf %1137, %1140 : vector<8x128xf32>
    %c231 = arith.constant 231 : index
    %1142 = memref.load %arg1[%c231] : memref<234xf32, #tpu.memory_space<smem>>
    %1143 = vector.broadcast %1142 : f32 to vector<8x128xf32>
    %1144 = arith.mulf %1143, %1099 : vector<8x128xf32>
    %1145 = arith.addf %1141, %1144 : vector<8x128xf32>
    %c0_123 = arith.constant 0 : index
    %c1_124 = arith.constant 1 : index
    %c0_125 = arith.constant 0 : index
    %c0_126 = arith.constant 0 : index
    %1146 = vector.load %arg5[%c0_123, %c1_124, %c0_125, %c0_126] : memref<1x2x8x128xf32, #tpu.memory_space<vmem>>, vector<1x1x8x128xf32>
    %1147 = vector.shape_cast %1146 : vector<1x1x8x128xf32> to vector<8x128xf32>
    %1148 = vector.shape_cast %1145 : vector<8x128xf32> to vector<1x1x8x128xf32>
    tpu.vector_store %arg5[%c0_123, %c1_124, %c0_125, %c0_126], %1148 {strides = array<i32>} : memref<1x2x8x128xf32, #tpu.memory_space<vmem>>, vector<1x1x8x128xf32>,
    return
  }
  func.func @transform_0(%arg0: i32) -> i32 {
    %c0_i32 = arith.constant 0 : i32
    %c0_i32_0 = arith.constant 0 : i32
    return %c0_i32 : i32
  }
  func.func @transform_1(%arg0: i32) -> (i32, i32) {
    %c0_i32 = arith.constant 0 : i32
    %c0_i32_0 = arith.constant 0 : i32
    %c0_i32_1 = arith.constant 0 : i32
    return %c0_i32, %c0_i32_0 : i32, i32
  }
  func.func @transform_2(%arg0: i32) -> (i32, i32, i32, i32) {
    %c0_i32 = arith.constant 0 : i32
    %c0_i32_0 = arith.constant 0 : i32
    %c0_i32_1 = arith.constant 0 : i32
    %c0_i32_2 = arith.constant 0 : i32
    return %arg0, %c0_i32, %c0_i32_0, %c0_i32_1 : i32, i32, i32, i32
  }
  func.func @transform_3(%arg0: i32) -> (i32, i32, i32, i32) {
    %c0_i32 = arith.constant 0 : i32
    %c0_i32_0 = arith.constant 0 : i32
    %c0_i32_1 = arith.constant 0 : i32
    %c0_i32_2 = arith.constant 0 : i32
    return %arg0, %c0_i32, %c0_i32_0, %c0_i32_1 : i32, i32, i32, i32
  }
  func.func @transform_4(%arg0: i32) -> (i32, i32, i32, i32) {
    %c0_i32 = arith.constant 0 : i32
    %c0_i32_0 = arith.constant 0 : i32
    %c0_i32_1 = arith.constant 0 : i32
    %c0_i32_2 = arith.constant 0 : i32
    return %arg0, %c0_i32, %c0_i32_0, %c0_i32_1 : i32, i32, i32, i32
  }
}

</mosaic_0001>

<llo_original>
// kernel: tpu_custom_call.1
$region0: #{tpu_custom_call.1}
  #allocation0 [shape = 'u32[]', space=smem, size = 0x4, offset = 0x4, fixed_abs, tag = 'smem constant byte address 0x4 - core index']
  #allocation1 [shape = 'u32[144,128]{1,0:T(1,128)}', space=vmem, size = 0x12000, scoped, tag = 'internal scratch']
  %s0 = inlined_call_operand.vmem [shape: f32[234], index: 0, kind: input, shape index: {}]
  %s1 = inlined_call_operand.vmem [shape: f32[1,128], index: 1, kind: input, shape index: {}]
  %s2 = inlined_call_operand.vmem [shape: f32[2,2,10,128], index: 2, kind: input, shape index: {}]
  %s3 = inlined_call_operand.hbm [shape: f32[2,4,8,128], index: 3, kind: output, shape index: {0}]
  %s4 = inlined_call_operand.hbm [shape: f32[2,2,8,128], index: 4, kind: output, shape index: {1}]
  %5 = xla_tuple %s3, %s4
  %s6 = sld [smem:[#allocation0]]
  $region57: #{tpu_custom_call.1} parent=0
    _
  %s8 = ssub.s32 1, %s6
  %s9 = scalar_select 0, %s8, %s6
  $region1: #{tpu_custom_call.1} parent=0
    #allocation2 [shape = 'u8[1024]{0}', space=smem, size = 0x400, scoped, tag = 'input window, operand 0, single buffered']
    #allocation3 [shape = 's32[2]{0}', space=sflag, size = 0x8, scoped, tag = 'scoped memory for tpu_custom_call.1']
    #allocation4 [shape = 's32[2]{0}', space=sflag, size = 0x8, scoped, tag = 'scoped memory for tpu_custom_call.1']
    #allocation5 [shape = 'u8[32768]{0}', space=vmem, size = 0x8000, scoped, tag = 'output window, operand 0']
    #allocation6 [shape = 'u8[16384]{0}', space=vmem, size = 0x4000, scoped, tag = 'output window, operand 1']
    #allocation7 [shape = 's32[2]{0}', space=sflag, size = 0x8, scoped, tag = 'scoped memory for tpu_custom_call.1']
    %10 = vsyncpa [#allocation4], 0
    %11 = vsyncpa [#allocation3], 0
    %s12 = scalar_lea.sflag [#allocation3], 1
    %13 = vsyncpa %s12, 0
    %14 = vsyncpa [#allocation7], 0
    %s15 = scalar_lea.sflag [#allocation7], 1
    %16 = vsyncpa %s15, 0
    loop: start=0, step=1, limit=4
    $region2: #{tpu_custom_call.1} parent=1 // loop_pre_header
      _
    $region3: #{tpu_custom_call.1} parent=1 // loop_header
      %s18 = sphi 0, %s22
      %p19 = scmp.ge.s32.totalorder %s18, 4
      %s26 = sphi 0, %s26
      %s28 = sphi 0, %s26
      %s29 = sphi 0, %s28
      %s43 = sphi 0, %s29
      %s47 = sphi 0, %s47
      %s49 = sphi 0, %s47
      %s50 = sphi 0, %s49
      %s64 = sphi 0, %s50
      %s70 = sphi 0, %s72
      %s73 = sphi 0, %s70
      %s74 = sphi 0, %s73
      %s90 = sphi 0, %s74
      %s96 = sphi 0, %s98
      %s99 = sphi 0, %s96
      %s100 = sphi 0, %s99
      %s116 = sphi 0, %s100
      %s122 = sphi 0, %s124
      %s125 = sphi 0, %s122
      %s126 = sphi 0, %s125
      %s142 = sphi 0, %s126
    $region4: #{tpu_custom_call.1} parent=1 // loop_header_branch
      %21 = sbr.rel (%p19) target = $region8
    $region5: #{tpu_custom_call.1} parent=1 // loop_body
      %s23 = ssub.s32 %s18, 1
      %s24 = ssub.s32 %s18, 2
      %s25 = sadd.s32 %s18, 1
      %s27 = sadd.s32 %s26, 1
      %p30 = scmp.eq.s32.totalorder %s18, 1
      %p31 = scmp.ne.s32.totalorder %s26, %s28
      %p32 = scmp.eq.s32.totalorder %s18, 0
      %p33 = por %p31, %p32
      %p34 = scmp.ne.s32.totalorder %s26, %s28
      %p35 = scmp.eq.s32.totalorder %s23, 1
      %p36 = por %p34, %p35
      %p37 = scmp.ne.s32.totalorder %s28, %s29
      %p38 = scmp.eq.s32.totalorder %s23, 0
      %p39 = por %p37, %p38
      %p40 = scmp.ne.s32.totalorder %s28, %s29
      %p41 = scmp.eq.s32.totalorder %s24, 1
      %p42 = por %p40, %p41
      %p44 = scmp.ne.s32.totalorder %s29, %s43
      %p45 = scmp.eq.s32.totalorder %s24, 0
      %p46 = por %p44, %p45
      %s48 = sadd.s32 %s47, 1
      %p51 = scmp.eq.s32.totalorder %s18, 1
      %p52 = scmp.ne.s32.totalorder %s47, %s49
      %p53 = scmp.eq.s32.totalorder %s18, 0
      %p54 = por %p52, %p53
      %p55 = scmp.ne.s32.totalorder %s47, %s49
      %p56 = scmp.eq.s32.totalorder %s23, 1
      %p57 = por %p55, %p56
      %p58 = scmp.ne.s32.totalorder %s49, %s50
      %p59 = scmp.eq.s32.totalorder %s23, 0
      %p60 = por %p58, %p59
      %p61 = scmp.ne.s32.totalorder %s49, %s50
      %p62 = scmp.eq.s32.totalorder %s24, 1
      %p63 = por %p61, %p62
      %p65 = scmp.ne.s32.totalorder %s50, %s64
      %p66 = scmp.eq.s32.totalorder %s24, 0
      %p67 = por %p65, %p66
      %s68 = ssub.s32 %s18, %s25
      %p69 = scmp.eq.s32.totalorder %s68, 0
      %s71 = sadd.s32 %s70, 1
      %s72 = scalar_select %p69, %s70, %s71
      %p75 = pneg %p69
      %p76 = scmp.eq.s32.totalorder %s18, 1
      %p77 = por %p75, %p76
      %p78 = scmp.ne.s32.totalorder %s70, %s73
      %p79 = scmp.eq.s32.totalorder %s18, 0
      %p80 = por %p78, %p79
      %p81 = scmp.ne.s32.totalorder %s70, %s73
      %p82 = scmp.eq.s32.totalorder %s23, 1
      %p83 = por %p81, %p82
      %p84 = scmp.ne.s32.totalorder %s73, %s74
      %p85 = scmp.eq.s32.totalorder %s23, 0
      %p86 = por %p84, %p85
      %p87 = scmp.ne.s32.totalorder %s73, %s74
      %p88 = scmp.eq.s32.totalorder %s24, 1
      %p89 = por %p87, %p88
      %p91 = scmp.ne.s32.totalorder %s74, %s90
      %p92 = scmp.eq.s32.totalorder %s24, 0
      %p93 = por %p91, %p92
      %s94 = ssub.s32 %s18, %s25
      %p95 = scmp.eq.s32.totalorder %s94, 0
      %s97 = sadd.s32 %s96, 1
      %s98 = scalar_select %p95, %s96, %s97
      %p101 = pneg %p95
      %p102 = scmp.eq.s32.totalorder %s18, 1
      %p103 = por %p101, %p102
      %p104 = scmp.ne.s32.totalorder %s96, %s99
      %p105 = scmp.eq.s32.totalorder %s18, 0
      %p106 = por %p104, %p105
      %p107 = scmp.ne.s32.totalorder %s96, %s99
      %p108 = scmp.eq.s32.totalorder %s23, 1
      %p109 = por %p107, %p108
      %p110 = scmp.ne.s32.totalorder %s99, %s100
      %p111 = scmp.eq.s32.totalorder %s23, 0
      %p112 = por %p110, %p111
      %p113 = scmp.ne.s32.totalorder %s99, %s100
      %p114 = scmp.eq.s32.totalorder %s24, 1
      %p115 = por %p113, %p114
      %p117 = scmp.ne.s32.totalorder %s100, %s116
      %p118 = scmp.eq.s32.totalorder %s24, 0
      %p119 = por %p117, %p118
      %s120 = ssub.s32 %s18, %s25
      %p121 = scmp.eq.s32.totalorder %s120, 0
      %s123 = sadd.s32 %s122, 1
      %s124 = scalar_select %p121, %s122, %s123
      %p127 = pneg %p121
      %p128 = scmp.eq.s32.totalorder %s18, 1
      %p129 = por %p127, %p128
      %p130 = scmp.ne.s32.totalorder %s122, %s125
      %p131 = scmp.eq.s32.totalorder %s18, 0
      %p132 = por %p130, %p131
      %p133 = scmp.ne.s32.totalorder %s122, %s125
      %p134 = scmp.eq.s32.totalorder %s23, 1
      %p135 = por %p133, %p134
      %p136 = scmp.ne.s32.totalorder %s125, %s126
      %p137 = scmp.eq.s32.totalorder %s23, 0
      %p138 = por %p136, %p137
      %p139 = scmp.ne.s32.totalorder %s125, %s126
      %p140 = scmp.eq.s32.totalorder %s24, 1
      %p141 = por %p139, %p140
      %p143 = scmp.ne.s32.totalorder %s126, %s142
      %p144 = scmp.eq.s32.totalorder %s24, 0
      %p145 = por %p143, %p144
      %p146 = scmp.le.s32.totalorder 1, %s18
      %p147 = scmp.lt.s32.totalorder %s18, 3
      %p148 = pnand %p146, %p147
      %p149 = pneg %p148
      // Predicated region
      $region9: #{tpu_custom_call.1} parent=5 // pred_check
        _
      $region10: #{tpu_custom_call.1} parent=5 // pred_check_branch
        %151 = sbr.rel (%p148) target = $region12
      $region11: #{tpu_custom_call.1} parent=5 // pred_region
        %s152 = ssub.s32 %s18, 1
        // Predicated region
        $region13: #{tpu_custom_call.1} parent=11 // pred_check
          %p153 = pneg %p39
        $region14: #{tpu_custom_call.1} parent=11 // pred_check_branch
          %155 = sbr.rel (%p153) target = $region16
        $region15: #{tpu_custom_call.1} parent=11 // pred_region
          %s157 = ssub.s32 32, 32
          %158 = vsyncadd [#allocation4], %s157
          %s160 = sshll.u32 %s0, 4
          %s161 = int_to_ptr.vmem [resolvable:$true] %s160
          %163 = dma.vmem_to_smem %s161, 32, [#allocation2], [#allocation4]
        $region16: #{tpu_custom_call.1} parent=11 // pred_fallthru
          _
        // Predicated region
        $region17: #{tpu_custom_call.1} parent=11 // pred_check
          %p164 = pneg %p60
        $region18: #{tpu_custom_call.1} parent=11 // pred_check_branch
          %166 = sbr.rel (%p164) target = $region20
        $region19: #{tpu_custom_call.1} parent=11 // pred_region
          _
        $region20: #{tpu_custom_call.1} parent=11 // pred_fallthru
          _
      $region12: #{tpu_custom_call.1} parent=5 // pred_fallthru
        _
      %p167 = scmp.lt.s32.totalorder %s18, 2
      // Predicated region
      $region21: #{tpu_custom_call.1} parent=5 // pred_check
        %p168 = pneg %p167
      $region22: #{tpu_custom_call.1} parent=5 // pred_check_branch
        %170 = sbr.rel (%p168) target = $region24
      $region23: #{tpu_custom_call.1} parent=5 // pred_region
        // Predicated region
        $region25: #{tpu_custom_call.1} parent=23 // pred_check
          %p171 = pneg %p80
        $region26: #{tpu_custom_call.1} parent=23 // pred_check_branch
          %173 = sbr.rel (%p171) target = $region28
        $region27: #{tpu_custom_call.1} parent=23 // pred_region
          %p174 = scmp.lt.s32.totalorder %s18, 1
          %s175 = scalar_select %p174, %s18, 1
          %s176 = smul.addr %s175, 4
          %s177 = smul.addr %s176, 8
          %s178 = scalar_lea.vmem %s2, %s177
        $region28: #{tpu_custom_call.1} parent=23 // pred_fallthru
          _
      $region24: #{tpu_custom_call.1} parent=5 // pred_fallthru
        _
      %p179 = scmp.le.s32.totalorder 1, %s18
      %p180 = scmp.lt.s32.totalorder %s18, 3
      %p181 = pnand %p179, %p180
      %p182 = pneg %p181
      // Predicated region
      $region29: #{tpu_custom_call.1} parent=5 // pred_check
        _
      $region30: #{tpu_custom_call.1} parent=5 // pred_check_branch
        %184 = sbr.rel (%p181) target = $region32
      $region31: #{tpu_custom_call.1} parent=5 // pred_region
        %s185 = ssub.s32 %s18, 1
        // Predicated region
        $region33: #{tpu_custom_call.1} parent=31 // pred_check
          %p186 = pneg %p39
        $region34: #{tpu_custom_call.1} parent=31 // pred_check_branch
          %188 = sbr.rel (%p186) target = $region36
        $region35: #{tpu_custom_call.1} parent=31 // pred_region
          %189 = dma.done [#allocation4], 32
        $region36: #{tpu_custom_call.1} parent=31 // pred_fallthru
          _
        %190 = sfence
        %p191 = pneg %p39
        %p192 = pneg %p36
        %p193 = pneg %p60
        %p194 = pneg %p57
        %p195 = scmp.lt.s32.totalorder %s23, 1
        %s196 = scalar_select %p195, %s23, 1
        %s197 = smul.addr %s196, 4
        %s198 = smul.addr %s197, 8
        %s199 = scalar_lea.vmem %s2, %s198
        %p200 = pneg %p86
        %p201 = pneg %p83
        %p202 = pneg %p112
        %p203 = pneg %p109
        %s204 = sand.u32 %s99, 1
        %s205 = scalar_lea.sflag [#allocation3], %s204
        %s206 = sand.u32 %s99, 1
        %s207 = smul.addr %s206, 32
        %s208 = scalar_lea.vmem [#allocation5], %s207
        %p209 = pneg %p138
        %p210 = pneg %p135
        %s211 = sand.u32 %s125, 1
        %s212 = scalar_lea.sflag [#allocation7], %s211
        %s213 = sand.u32 %s125, 1
        %s214 = smul.addr %s213, 16
        %s215 = scalar_lea.vmem [#allocation6], %s214
        %p216 = scmp.lt.s32.totalorder %s23, 1
        %s217 = scalar_select %p216, %s23, 1
        %s218 = smul.addr %s217, 4
        %s219 = smul.addr %s218, 8
        %s220 = scalar_lea.vmem %s2, %s219
        %v221 = vld [vmem:[%s1] sm:$0x1]
        %v222 = vld [vmem:[%s220] sm:$0xff]
        %s223 = sld [smem:[#allocation2]]
        %v224 = vstv %s223
        %v225 = vmul.f32 %v224, %v222
        %v226 = vadd.f32 %v225, 0.0
        %s227 = sld [smem:[#allocation2 + $0x36]]
        %v228 = vstv %s227
        %v229 = vmul.f32 %v228, %v222
        %v230 = vadd.f32 %v229, 0.0
        %s231 = sld [smem:[#allocation2 + $0x6c]]
        %v232 = vstv %s231
        %v233 = vmul.f32 %v232, %v222
        %v234 = vadd.f32 %v233, 0.0
        %s235 = sld [smem:[#allocation2 + $0xa2]]
        %v236 = vstv %s235
        %v237 = vmul.f32 %v236, %v222
        %v238 = vadd.f32 %v237, 0.0
        %239 = vrot.lane.b32.xlu0 %v222, 127
        %v240 = vpop.permute.xlu0 %239
        %s241 = sld [smem:[#allocation2 + $0x1]]
        %v242 = vstv %s241
        %v243 = vmul.f32 %v242, %v240
        %v244 = vadd.f32 %v226, %v243
        %s245 = sld [smem:[#allocation2 + $0x37]]
        %v246 = vstv %s245
        %v247 = vmul.f32 %v246, %v240
        %v248 = vadd.f32 %v230, %v247
        %s249 = sld [smem:[#allocation2 + $0x6d]]
        %v250 = vstv %s249
        %v251 = vmul.f32 %v250, %v240
        %v252 = vadd.f32 %v234, %v251
        %s253 = sld [smem:[#allocation2 + $0xa3]]
        %v254 = vstv %s253
        %v255 = vmul.f32 %v254, %v240
        %v256 = vadd.f32 %v238, %v255
        %257 = vrot.lane.b32.xlu0 %v222, 126
        %v258 = vpop.permute.xlu0 %257
        %s259 = sld [smem:[#allocation2 + $0x2]]
        %v260 = vstv %s259
        %v261 = vmul.f32 %v260, %v258
        %v262 = vadd.f32 %v244, %v261
        %s263 = sld [smem:[#allocation2 + $0x38]]
        %v264 = vstv %s263
        %v265 = vmul.f32 %v264, %v258
        %v266 = vadd.f32 %v248, %v265
        %s267 = sld [smem:[#allocation2 + $0x6e]]
        %v268 = vstv %s267
        %v269 = vmul.f32 %v268, %v258
        %v270 = vadd.f32 %v252, %v269
        %s271 = sld [smem:[#allocation2 + $0xa4]]
        %v272 = vstv %s271
        %v273 = vmul.f32 %v272, %v258
        %v274 = vadd.f32 %v256, %v273
        %275 = vrot.lane.b32.xlu0 %v222, 118
        %v276 = vpop.permute.xlu0 %275
        %s277 = sld [smem:[#allocation2 + $0x3]]
        %v278 = vstv %s277
        %v279 = vmul.f32 %v278, %v276
        %v280 = vadd.f32 %v262, %v279
        %s281 = sld [smem:[#allocation2 + $0x39]]
        %v282 = vstv %s281
        %v283 = vmul.f32 %v282, %v276
        %v284 = vadd.f32 %v266, %v283
        %s285 = sld [smem:[#allocation2 + $0x6f]]
        %v286 = vstv %s285
        %v287 = vmul.f32 %v286, %v276
        %v288 = vadd.f32 %v270, %v287
        %s289 = sld [smem:[#allocation2 + $0xa5]]
        %v290 = vstv %s289
        %v291 = vmul.f32 %v290, %v276
        %v292 = vadd.f32 %v274, %v291
        %293 = vrot.lane.b32.xlu0 %v222, 117
        %v294 = vpop.permute.xlu0 %293
        %s295 = sld [smem:[#allocation2 + $0x4]]
        %v296 = vstv %s295
        %v297 = vmul.f32 %v296, %v294
        %v298 = vadd.f32 %v280, %v297
        %s299 = sld [smem:[#allocation2 + $0x3a]]
        %v300 = vstv %s299
        %v301 = vmul.f32 %v300, %v294
        %v302 = vadd.f32 %v284, %v301
        %s303 = sld [smem:[#allocation2 + $0x70]]
        %v304 = vstv %s303
        %v305 = vmul.f32 %v304, %v294
        %v306 = vadd.f32 %v288, %v305
        %s307 = sld [smem:[#allocation2 + $0xa6]]
        %v308 = vstv %s307
        %v309 = vmul.f32 %v308, %v294
        %v310 = vadd.f32 %v292, %v309
        %311 = vrot.lane.b32.xlu0 %v222, 116
        %v312 = vpop.permute.xlu0 %311
        %s313 = sld [smem:[#allocation2 + $0x5]]
        %v314 = vstv %s313
        %v315 = vmul.f32 %v314, %v312
        %v316 = vadd.f32 %v298, %v315
        %s317 = sld [smem:[#allocation2 + $0x3b]]
        %v318 = vstv %s317
        %v319 = vmul.f32 %v318, %v312
        %v320 = vadd.f32 %v302, %v319
        %s321 = sld [smem:[#allocation2 + $0x71]]
        %v322 = vstv %s321
        %v323 = vmul.f32 %v322, %v312
        %v324 = vadd.f32 %v306, %v323
        %s325 = sld [smem:[#allocation2 + $0xa7]]
        %v326 = vstv %s325
        %v327 = vmul.f32 %v326, %v312
        %v328 = vadd.f32 %v310, %v327
        %329 = vrot.lane.b32.xlu0 %v222, 108
        %v330 = vpop.permute.xlu0 %329
        %s331 = sld [smem:[#allocation2 + $0x6]]
        %v332 = vstv %s331
        %v333 = vmul.f32 %v332, %v330
        %v334 = vadd.f32 %v316, %v333
        %s335 = sld [smem:[#allocation2 + $0x3c]]
        %v336 = vstv %s335
        %v337 = vmul.f32 %v336, %v330
        %v338 = vadd.f32 %v320, %v337
        %s339 = sld [smem:[#allocation2 + $0x72]]
        %v340 = vstv %s339
        %v341 = vmul.f32 %v340, %v330
        %v342 = vadd.f32 %v324, %v341
        %s343 = sld [smem:[#allocation2 + $0xa8]]
        %v344 = vstv %s343
        %v345 = vmul.f32 %v344, %v330
        %v346 = vadd.f32 %v328, %v345
        %347 = vrot.lane.b32.xlu0 %v222, 107
        %v348 = vpop.permute.xlu0 %347
        %s349 = sld [smem:[#allocation2 + $0x7]]
        %v350 = vstv %s349
        %v351 = vmul.f32 %v350, %v348
        %v352 = vadd.f32 %v334, %v351
        %s353 = sld [smem:[#allocation2 + $0x3d]]
        %v354 = vstv %s353
        %v355 = vmul.f32 %v354, %v348
        %v356 = vadd.f32 %v338, %v355
        %s357 = sld [smem:[#allocation2 + $0x73]]
        %v358 = vstv %s357
        %v359 = vmul.f32 %v358, %v348
        %v360 = vadd.f32 %v342, %v359
        %s361 = sld [smem:[#allocation2 + $0xa9]]
        %v362 = vstv %s361
        %v363 = vmul.f32 %v362, %v348
        %v364 = vadd.f32 %v346, %v363
        %365 = vrot.lane.b32.xlu0 %v222, 106
        %v366 = vpop.permute.xlu0 %365
        %s367 = sld [smem:[#allocation2 + $0x8]]
        %v368 = vstv %s367
        %v369 = vmul.f32 %v368, %v366
        %v370 = vadd.f32 %v352, %v369
        %s371 = sld [smem:[#allocation2 + $0x3e]]
        %v372 = vstv %s371
        %v373 = vmul.f32 %v372, %v366
        %v374 = vadd.f32 %v356, %v373
        %s375 = sld [smem:[#allocation2 + $0x74]]
        %v376 = vstv %s375
        %v377 = vmul.f32 %v376, %v366
        %v378 = vadd.f32 %v360, %v377
        %s379 = sld [smem:[#allocation2 + $0xaa]]
        %v380 = vstv %s379
        %v381 = vmul.f32 %v380, %v366
        %v382 = vadd.f32 %v364, %v381
        %v383 = vld [vmem:[%s220 + $0x1] sm:$0xff]
        %s384 = sld [smem:[#allocation2 + $0x9]]
        %v385 = vstv %s384
        %v386 = vmul.f32 %v385, %v383
        %v387 = vadd.f32 %v370, %v386
        %s388 = sld [smem:[#allocation2 + $0x3f]]
        %v389 = vstv %s388
        %v390 = vmul.f32 %v389, %v383
        %v391 = vadd.f32 %v374, %v390
        %s392 = sld [smem:[#allocation2 + $0x75]]
        %v393 = vstv %s392
        %v394 = vmul.f32 %v393, %v383
        %v395 = vadd.f32 %v378, %v394
        %s396 = sld [smem:[#allocation2 + $0xab]]
        %v397 = vstv %s396
        %v398 = vmul.f32 %v397, %v383
        %v399 = vadd.f32 %v382, %v398
        %400 = vrot.lane.b32.xlu0 %v383, 127
        %v401 = vpop.permute.xlu0 %400
        %s402 = sld [smem:[#allocation2 + $0xa]]
        %v403 = vstv %s402
        %v404 = vmul.f32 %v403, %v401
        %v405 = vadd.f32 %v387, %v404
        %s406 = sld [smem:[#allocation2 + $0x40]]
        %v407 = vstv %s406
        %v408 = vmul.f32 %v407, %v401
        %v409 = vadd.f32 %v391, %v408
        %s410 = sld [smem:[#allocation2 + $0x76]]
        %v411 = vstv %s410
        %v412 = vmul.f32 %v411, %v401
        %v413 = vadd.f32 %v395, %v412
        %s414 = sld [smem:[#allocation2 + $0xac]]
        %v415 = vstv %s414
        %v416 = vmul.f32 %v415, %v401
        %v417 = vadd.f32 %v399, %v416
        %418 = vrot.lane.b32.xlu0 %v383, 126
        %v419 = vpop.permute.xlu0 %418
        %s420 = sld [smem:[#allocation2 + $0xb]]
        %v421 = vstv %s420
        %v422 = vmul.f32 %v421, %v419
        %v423 = vadd.f32 %v405, %v422
        %s424 = sld [smem:[#allocation2 + $0x41]]
        %v425 = vstv %s424
        %v426 = vmul.f32 %v425, %v419
        %v427 = vadd.f32 %v409, %v426
        %s428 = sld [smem:[#allocation2 + $0x77]]
        %v429 = vstv %s428
        %v430 = vmul.f32 %v429, %v419
        %v431 = vadd.f32 %v413, %v430
        %s432 = sld [smem:[#allocation2 + $0xad]]
        %v433 = vstv %s432
        %v434 = vmul.f32 %v433, %v419
        %v435 = vadd.f32 %v417, %v434
        %436 = vrot.lane.b32.xlu0 %v383, 118
        %v437 = vpop.permute.xlu0 %436
        %s438 = sld [smem:[#allocation2 + $0xc]]
        %v439 = vstv %s438
        %v440 = vmul.f32 %v439, %v437
        %v441 = vadd.f32 %v423, %v440
        %s442 = sld [smem:[#allocation2 + $0x42]]
        %v443 = vstv %s442
        %v444 = vmul.f32 %v443, %v437
        %v445 = vadd.f32 %v427, %v444
        %s446 = sld [smem:[#allocation2 + $0x78]]
        %v447 = vstv %s446
        %v448 = vmul.f32 %v447, %v437
        %v449 = vadd.f32 %v431, %v448
        %s450 = sld [smem:[#allocation2 + $0xae]]
        %v451 = vstv %s450
        %v452 = vmul.f32 %v451, %v437
        %v453 = vadd.f32 %v435, %v452
        %454 = vrot.lane.b32.xlu0 %v383, 117
        %v455 = vpop.permute.xlu0 %454
        %s456 = sld [smem:[#allocation2 + $0xd]]
        %v457 = vstv %s456
        %v458 = vmul.f32 %v457, %v455
        %v459 = vadd.f32 %v441, %v458
        %s460 = sld [smem:[#allocation2 + $0x43]]
        %v461 = vstv %s460
        %v462 = vmul.f32 %v461, %v455
        %v463 = vadd.f32 %v445, %v462
        %s464 = sld [smem:[#allocation2 + $0x79]]
        %v465 = vstv %s464
        %v466 = vmul.f32 %v465, %v455
        %v467 = vadd.f32 %v449, %v466
        %s468 = sld [smem:[#allocation2 + $0xaf]]
        %v469 = vstv %s468
        %v470 = vmul.f32 %v469, %v455
        %v471 = vadd.f32 %v453, %v470
        %472 = vrot.lane.b32.xlu0 %v383, 116
        %v473 = vpop.permute.xlu0 %472
        %s474 = sld [smem:[#allocation2 + $0xe]]
        %v475 = vstv %s474
        %v476 = vmul.f32 %v475, %v473
        %v477 = vadd.f32 %v459, %v476
        %s478 = sld [smem:[#allocation2 + $0x44]]
        %v479 = vstv %s478
        %v480 = vmul.f32 %v479, %v473
        %v481 = vadd.f32 %v463, %v480
        %s482 = sld [smem:[#allocation2 + $0x7a]]
        %v483 = vstv %s482
        %v484 = vmul.f32 %v483, %v473
        %v485 = vadd.f32 %v467, %v484
        %s486 = sld [smem:[#allocation2 + $0xb0]]
        %v487 = vstv %s486
        %v488 = vmul.f32 %v487, %v473
        %v489 = vadd.f32 %v471, %v488
        %490 = vrot.lane.b32.xlu0 %v383, 108
        %v491 = vpop.permute.xlu0 %490
        %s492 = sld [smem:[#allocation2 + $0xf]]
        %v493 = vstv %s492
        %v494 = vmul.f32 %v493, %v491
        %v495 = vadd.f32 %v477, %v494
        %s496 = sld [smem:[#allocation2 + $0x45]]
        %v497 = vstv %s496
        %v498 = vmul.f32 %v497, %v491
        %v499 = vadd.f32 %v481, %v498
        %s500 = sld [smem:[#allocation2 + $0x7b]]
        %v501 = vstv %s500
        %v502 = vmul.f32 %v501, %v491
        %v503 = vadd.f32 %v485, %v502
        %s504 = sld [smem:[#allocation2 + $0xb1]]
        %v505 = vstv %s504
        %v506 = vmul.f32 %v505, %v491
        %v507 = vadd.f32 %v489, %v506
        %508 = vrot.lane.b32.xlu0 %v383, 107
        %v509 = vpop.permute.xlu0 %508
        %s510 = sld [smem:[#allocation2 + $0x10]]
        %v511 = vstv %s510
        %v512 = vmul.f32 %v511, %v509
        %v513 = vadd.f32 %v495, %v512
        %s514 = sld [smem:[#allocation2 + $0x46]]
        %v515 = vstv %s514
        %v516 = vmul.f32 %v515, %v509
        %v517 = vadd.f32 %v499, %v516
        %s518 = sld [smem:[#allocation2 + $0x7c]]
        %v519 = vstv %s518
        %v520 = vmul.f32 %v519, %v509
        %v521 = vadd.f32 %v503, %v520
        %s522 = sld [smem:[#allocation2 + $0xb2]]
        %v523 = vstv %s522
        %v524 = vmul.f32 %v523, %v509
        %v525 = vadd.f32 %v507, %v524
        %526 = vrot.lane.b32.xlu0 %v383, 106
        %v527 = vpop.permute.xlu0 %526
        %s528 = sld [smem:[#allocation2 + $0x11]]
        %v529 = vstv %s528
        %v530 = vmul.f32 %v529, %v527
        %v531 = vadd.f32 %v513, %v530
        %s532 = sld [smem:[#allocation2 + $0x47]]
        %v533 = vstv %s532
        %v534 = vmul.f32 %v533, %v527
        %v535 = vadd.f32 %v517, %v534
        %s536 = sld [smem:[#allocation2 + $0x7d]]
        %v537 = vstv %s536
        %v538 = vmul.f32 %v537, %v527
        %v539 = vadd.f32 %v521, %v538
        %s540 = sld [smem:[#allocation2 + $0xb3]]
        %v541 = vstv %s540
        %v542 = vmul.f32 %v541, %v527
        %v543 = vadd.f32 %v525, %v542
        %v544 = vld [vmem:[%s220 + $0x2] sm:$0xff]
        %s545 = sld [smem:[#allocation2 + $0x12]]
        %v546 = vstv %s545
        %v547 = vmul.f32 %v546, %v544
        %v548 = vadd.f32 %v531, %v547
        %s549 = sld [smem:[#allocation2 + $0x48]]
        %v550 = vstv %s549
        %v551 = vmul.f32 %v550, %v544
        %v552 = vadd.f32 %v535, %v551
        %s553 = sld [smem:[#allocation2 + $0x7e]]
        %v554 = vstv %s553
        %v555 = vmul.f32 %v554, %v544
        %v556 = vadd.f32 %v539, %v555
        %s557 = sld [smem:[#allocation2 + $0xb4]]
        %v558 = vstv %s557
        %v559 = vmul.f32 %v558, %v544
        %v560 = vadd.f32 %v543, %v559
        %561 = vrot.lane.b32.xlu0 %v544, 127
        %v562 = vpop.permute.xlu0 %561
        %s563 = sld [smem:[#allocation2 + $0x13]]
        %v564 = vstv %s563
        %v565 = vmul.f32 %v564, %v562
        %v566 = vadd.f32 %v548, %v565
        %s567 = sld [smem:[#allocation2 + $0x49]]
        %v568 = vstv %s567
        %v569 = vmul.f32 %v568, %v562
        %v570 = vadd.f32 %v552, %v569
        %s571 = sld [smem:[#allocation2 + $0x7f]]
        %v572 = vstv %s571
        %v573 = vmul.f32 %v572, %v562
        %v574 = vadd.f32 %v556, %v573
        %s575 = sld [smem:[#allocation2 + $0xb5]]
        %v576 = vstv %s575
        %v577 = vmul.f32 %v576, %v562
        %v578 = vadd.f32 %v560, %v577
        %579 = vrot.lane.b32.xlu0 %v544, 126
        %v580 = vpop.permute.xlu0 %579
        %s581 = sld [smem:[#allocation2 + $0x14]]
        %v582 = vstv %s581
        %v583 = vmul.f32 %v582, %v580
        %v584 = vadd.f32 %v566, %v583
        %s585 = sld [smem:[#allocation2 + $0x4a]]
        %v586 = vstv %s585
        %v587 = vmul.f32 %v586, %v580
        %v588 = vadd.f32 %v570, %v587
        %s589 = sld [smem:[#allocation2 + $0x80]]
        %v590 = vstv %s589
        %v591 = vmul.f32 %v590, %v580
        %v592 = vadd.f32 %v574, %v591
        %s593 = sld [smem:[#allocation2 + $0xb6]]
        %v594 = vstv %s593
        %v595 = vmul.f32 %v594, %v580
        %v596 = vadd.f32 %v578, %v595
        %597 = vrot.lane.b32.xlu0 %v544, 118
        %v598 = vpop.permute.xlu0 %597
        %s599 = sld [smem:[#allocation2 + $0x15]]
        %v600 = vstv %s599
        %v601 = vmul.f32 %v600, %v598
        %v602 = vadd.f32 %v584, %v601
        %s603 = sld [smem:[#allocation2 + $0x4b]]
        %v604 = vstv %s603
        %v605 = vmul.f32 %v604, %v598
        %v606 = vadd.f32 %v588, %v605
        %s607 = sld [smem:[#allocation2 + $0x81]]
        %v608 = vstv %s607
        %v609 = vmul.f32 %v608, %v598
        %v610 = vadd.f32 %v592, %v609
        %s611 = sld [smem:[#allocation2 + $0xb7]]
        %v612 = vstv %s611
        %v613 = vmul.f32 %v612, %v598
        %v614 = vadd.f32 %v596, %v613
        %615 = vrot.lane.b32.xlu0 %v544, 117
        %v616 = vpop.permute.xlu0 %615
        %s617 = sld [smem:[#allocation2 + $0x16]]
        %v618 = vstv %s617
        %v619 = vmul.f32 %v618, %v616
        %v620 = vadd.f32 %v602, %v619
        %s621 = sld [smem:[#allocation2 + $0x4c]]
        %v622 = vstv %s621
        %v623 = vmul.f32 %v622, %v616
        %v624 = vadd.f32 %v606, %v623
        %s625 = sld [smem:[#allocation2 + $0x82]]
        %v626 = vstv %s625
        %v627 = vmul.f32 %v626, %v616
        %v628 = vadd.f32 %v610, %v627
        %s629 = sld [smem:[#allocation2 + $0xb8]]
        %v630 = vstv %s629
        %v631 = vmul.f32 %v630, %v616
        %v632 = vadd.f32 %v614, %v631
        %633 = vrot.lane.b32.xlu0 %v544, 116
        %v634 = vpop.permute.xlu0 %633
        %s635 = sld [smem:[#allocation2 + $0x17]]
        %v636 = vstv %s635
        %v637 = vmul.f32 %v636, %v634
        %v638 = vadd.f32 %v620, %v637
        %s639 = sld [smem:[#allocation2 + $0x4d]]
        %v640 = vstv %s639
        %v641 = vmul.f32 %v640, %v634
        %v642 = vadd.f32 %v624, %v641
        %s643 = sld [smem:[#allocation2 + $0x83]]
        %v644 = vstv %s643
        %v645 = vmul.f32 %v644, %v634
        %v646 = vadd.f32 %v628, %v645
        %s647 = sld [smem:[#allocation2 + $0xb9]]
        %v648 = vstv %s647
        %v649 = vmul.f32 %v648, %v634
        %v650 = vadd.f32 %v632, %v649
        %651 = vrot.lane.b32.xlu0 %v544, 108
        %v652 = vpop.permute.xlu0 %651
        %s653 = sld [smem:[#allocation2 + $0x18]]
        %v654 = vstv %s653
        %v655 = vmul.f32 %v654, %v652
        %v656 = vadd.f32 %v638, %v655
        %s657 = sld [smem:[#allocation2 + $0x4e]]
        %v658 = vstv %s657
        %v659 = vmul.f32 %v658, %v652
        %v660 = vadd.f32 %v642, %v659
        %s661 = sld [smem:[#allocation2 + $0x84]]
        %v662 = vstv %s661
        %v663 = vmul.f32 %v662, %v652
        %v664 = vadd.f32 %v646, %v663
        %s665 = sld [smem:[#allocation2 + $0xba]]
        %v666 = vstv %s665
        %v667 = vmul.f32 %v666, %v652
        %v668 = vadd.f32 %v650, %v667
        %669 = vrot.lane.b32.xlu0 %v544, 107
        %v670 = vpop.permute.xlu0 %669
        %s671 = sld [smem:[#allocation2 + $0x19]]
        %v672 = vstv %s671
        %v673 = vmul.f32 %v672, %v670
        %v674 = vadd.f32 %v656, %v673
        %s675 = sld [smem:[#allocation2 + $0x4f]]
        %v676 = vstv %s675
        %v677 = vmul.f32 %v676, %v670
        %v678 = vadd.f32 %v660, %v677
        %s679 = sld [smem:[#allocation2 + $0x85]]
        %v680 = vstv %s679
        %v681 = vmul.f32 %v680, %v670
        %v682 = vadd.f32 %v664, %v681
        %s683 = sld [smem:[#allocation2 + $0xbb]]
        %v684 = vstv %s683
        %v685 = vmul.f32 %v684, %v670
        %v686 = vadd.f32 %v668, %v685
        %687 = vrot.lane.b32.xlu0 %v544, 106
        %v688 = vpop.permute.xlu0 %687
        %s689 = sld [smem:[#allocation2 + $0x1a]]
        %v690 = vstv %s689
        %v691 = vmul.f32 %v690, %v688
        %v692 = vadd.f32 %v674, %v691
        %s693 = sld [smem:[#allocation2 + $0x50]]
        %v694 = vstv %s693
        %v695 = vmul.f32 %v694, %v688
        %v696 = vadd.f32 %v678, %v695
        %s697 = sld [smem:[#allocation2 + $0x86]]
        %v698 = vstv %s697
        %v699 = vmul.f32 %v698, %v688
        %v700 = vadd.f32 %v682, %v699
        %s701 = sld [smem:[#allocation2 + $0xbc]]
        %v702 = vstv %s701
        %v703 = vmul.f32 %v702, %v688
        %v704 = vadd.f32 %v686, %v703
        %s705 = scalar_lea.vmem %s220, 16
        %v706 = vld [vmem:[%s705] sm:$0xff]
        %s707 = sld [smem:[#allocation2 + $0x1b]]
        %v708 = vstv %s707
        %v709 = vmul.f32 %v708, %v706
        %v710 = vadd.f32 %v692, %v709
        %s711 = sld [smem:[#allocation2 + $0x51]]
        %v712 = vstv %s711
        %v713 = vmul.f32 %v712, %v706
        %v714 = vadd.f32 %v696, %v713
        %s715 = sld [smem:[#allocation2 + $0x87]]
        %v716 = vstv %s715
        %v717 = vmul.f32 %v716, %v706
        %v718 = vadd.f32 %v700, %v717
        %s719 = sld [smem:[#allocation2 + $0xbd]]
        %v720 = vstv %s719
        %v721 = vmul.f32 %v720, %v706
        %v722 = vadd.f32 %v704, %v721
        %723 = vrot.lane.b32.xlu0 %v706, 127
        %v724 = vpop.permute.xlu0 %723
        %s725 = sld [smem:[#allocation2 + $0x1c]]
        %v726 = vstv %s725
        %v727 = vmul.f32 %v726, %v724
        %v728 = vadd.f32 %v710, %v727
        %s729 = sld [smem:[#allocation2 + $0x52]]
        %v730 = vstv %s729
        %v731 = vmul.f32 %v730, %v724
        %v732 = vadd.f32 %v714, %v731
        %s733 = sld [smem:[#allocation2 + $0x88]]
        %v734 = vstv %s733
        %v735 = vmul.f32 %v734, %v724
        %v736 = vadd.f32 %v718, %v735
        %s737 = sld [smem:[#allocation2 + $0xbe]]
        %v738 = vstv %s737
        %v739 = vmul.f32 %v738, %v724
        %v740 = vadd.f32 %v722, %v739
        %741 = vrot.lane.b32.xlu0 %v706, 126
        %v742 = vpop.permute.xlu0 %741
        %s743 = sld [smem:[#allocation2 + $0x1d]]
        %v744 = vstv %s743
        %v745 = vmul.f32 %v744, %v742
        %v746 = vadd.f32 %v728, %v745
        %s747 = sld [smem:[#allocation2 + $0x53]]
        %v748 = vstv %s747
        %v749 = vmul.f32 %v748, %v742
        %v750 = vadd.f32 %v732, %v749
        %s751 = sld [smem:[#allocation2 + $0x89]]
        %v752 = vstv %s751
        %v753 = vmul.f32 %v752, %v742
        %v754 = vadd.f32 %v736, %v753
        %s755 = sld [smem:[#allocation2 + $0xbf]]
        %v756 = vstv %s755
        %v757 = vmul.f32 %v756, %v742
        %v758 = vadd.f32 %v740, %v757
        %759 = vrot.lane.b32.xlu0 %v706, 118
        %v760 = vpop.permute.xlu0 %759
        %s761 = sld [smem:[#allocation2 + $0x1e]]
        %v762 = vstv %s761
        %v763 = vmul.f32 %v762, %v760
        %v764 = vadd.f32 %v746, %v763
        %s765 = sld [smem:[#allocation2 + $0x54]]
        %v766 = vstv %s765
        %v767 = vmul.f32 %v766, %v760
        %v768 = vadd.f32 %v750, %v767
        %s769 = sld [smem:[#allocation2 + $0x8a]]
        %v770 = vstv %s769
        %v771 = vmul.f32 %v770, %v760
        %v772 = vadd.f32 %v754, %v771
        %s773 = sld [smem:[#allocation2 + $0xc0]]
        %v774 = vstv %s773
        %v775 = vmul.f32 %v774, %v760
        %v776 = vadd.f32 %v758, %v775
        %777 = vrot.lane.b32.xlu0 %v706, 117
        %v778 = vpop.permute.xlu0 %777
        %s779 = sld [smem:[#allocation2 + $0x1f]]
        %v780 = vstv %s779
        %v781 = vmul.f32 %v780, %v778
        %v782 = vadd.f32 %v764, %v781
        %s783 = sld [smem:[#allocation2 + $0x55]]
        %v784 = vstv %s783
        %v785 = vmul.f32 %v784, %v778
        %v786 = vadd.f32 %v768, %v785
        %s787 = sld [smem:[#allocation2 + $0x8b]]
        %v788 = vstv %s787
        %v789 = vmul.f32 %v788, %v778
        %v790 = vadd.f32 %v772, %v789
        %s791 = sld [smem:[#allocation2 + $0xc1]]
        %v792 = vstv %s791
        %v793 = vmul.f32 %v792, %v778
        %v794 = vadd.f32 %v776, %v793
        %795 = vrot.lane.b32.xlu0 %v706, 116
        %v796 = vpop.permute.xlu0 %795
        %s797 = sld [smem:[#allocation2 + $0x20]]
        %v798 = vstv %s797
        %v799 = vmul.f32 %v798, %v796
        %v800 = vadd.f32 %v782, %v799
        %s801 = sld [smem:[#allocation2 + $0x56]]
        %v802 = vstv %s801
        %v803 = vmul.f32 %v802, %v796
        %v804 = vadd.f32 %v786, %v803
        %s805 = sld [smem:[#allocation2 + $0x8c]]
        %v806 = vstv %s805
        %v807 = vmul.f32 %v806, %v796
        %v808 = vadd.f32 %v790, %v807
        %s809 = sld [smem:[#allocation2 + $0xc2]]
        %v810 = vstv %s809
        %v811 = vmul.f32 %v810, %v796
        %v812 = vadd.f32 %v794, %v811
        %813 = vrot.lane.b32.xlu0 %v706, 108
        %v814 = vpop.permute.xlu0 %813
        %s815 = sld [smem:[#allocation2 + $0x21]]
        %v816 = vstv %s815
        %v817 = vmul.f32 %v816, %v814
        %v818 = vadd.f32 %v800, %v817
        %s819 = sld [smem:[#allocation2 + $0x57]]
        %v820 = vstv %s819
        %v821 = vmul.f32 %v820, %v814
        %v822 = vadd.f32 %v804, %v821
        %s823 = sld [smem:[#allocation2 + $0x8d]]
        %v824 = vstv %s823
        %v825 = vmul.f32 %v824, %v814
        %v826 = vadd.f32 %v808, %v825
        %s827 = sld [smem:[#allocation2 + $0xc3]]
        %v828 = vstv %s827
        %v829 = vmul.f32 %v828, %v814
        %v830 = vadd.f32 %v812, %v829
        %831 = vrot.lane.b32.xlu0 %v706, 107
        %v832 = vpop.permute.xlu0 %831
        %s833 = sld [smem:[#allocation2 + $0x22]]
        %v834 = vstv %s833
        %v835 = vmul.f32 %v834, %v832
        %v836 = vadd.f32 %v818, %v835
        %s837 = sld [smem:[#allocation2 + $0x58]]
        %v838 = vstv %s837
        %v839 = vmul.f32 %v838, %v832
        %v840 = vadd.f32 %v822, %v839
        %s841 = sld [smem:[#allocation2 + $0x8e]]
        %v842 = vstv %s841
        %v843 = vmul.f32 %v842, %v832
        %v844 = vadd.f32 %v826, %v843
        %s845 = sld [smem:[#allocation2 + $0xc4]]
        %v846 = vstv %s845
        %v847 = vmul.f32 %v846, %v832
        %v848 = vadd.f32 %v830, %v847
        %849 = vrot.lane.b32.xlu0 %v706, 106
        %v850 = vpop.permute.xlu0 %849
        %s851 = sld [smem:[#allocation2 + $0x23]]
        %v852 = vstv %s851
        %v853 = vmul.f32 %v852, %v850
        %v854 = vadd.f32 %v836, %v853
        %s855 = sld [smem:[#allocation2 + $0x59]]
        %v856 = vstv %s855
        %v857 = vmul.f32 %v856, %v850
        %v858 = vadd.f32 %v840, %v857
        %s859 = sld [smem:[#allocation2 + $0x8f]]
        %v860 = vstv %s859
        %v861 = vmul.f32 %v860, %v850
        %v862 = vadd.f32 %v844, %v861
        %s863 = sld [smem:[#allocation2 + $0xc5]]
        %v864 = vstv %s863
        %v865 = vmul.f32 %v864, %v850
        %v866 = vadd.f32 %v848, %v865
        %v867 = vld [vmem:[%s705 + $0x1] sm:$0xff]
        %s868 = sld [smem:[#allocation2 + $0x24]]
        %v869 = vstv %s868
        %v870 = vmul.f32 %v869, %v867
        %v871 = vadd.f32 %v854, %v870
        %s872 = sld [smem:[#allocation2 + $0x5a]]
        %v873 = vstv %s872
        %v874 = vmul.f32 %v873, %v867
        %v875 = vadd.f32 %v858, %v874
        %s876 = sld [smem:[#allocation2 + $0x90]]
        %v877 = vstv %s876
        %v878 = vmul.f32 %v877, %v867
        %v879 = vadd.f32 %v862, %v878
        %s880 = sld [smem:[#allocation2 + $0xc6]]
        %v881 = vstv %s880
        %v882 = vmul.f32 %v881, %v867
        %v883 = vadd.f32 %v866, %v882
        %884 = vrot.lane.b32.xlu0 %v867, 127
        %v885 = vpop.permute.xlu0 %884
        %s886 = sld [smem:[#allocation2 + $0x25]]
        %v887 = vstv %s886
        %v888 = vmul.f32 %v887, %v885
        %v889 = vadd.f32 %v871, %v888
        %s890 = sld [smem:[#allocation2 + $0x5b]]
        %v891 = vstv %s890
        %v892 = vmul.f32 %v891, %v885
        %v893 = vadd.f32 %v875, %v892
        %s894 = sld [smem:[#allocation2 + $0x91]]
        %v895 = vstv %s894
        %v896 = vmul.f32 %v895, %v885
        %v897 = vadd.f32 %v879, %v896
        %s898 = sld [smem:[#allocation2 + $0xc7]]
        %v899 = vstv %s898
        %v900 = vmul.f32 %v899, %v885
        %v901 = vadd.f32 %v883, %v900
        %902 = vrot.lane.b32.xlu0 %v867, 126
        %v903 = vpop.permute.xlu0 %902
        %s904 = sld [smem:[#allocation2 + $0x26]]
        %v905 = vstv %s904
        %v906 = vmul.f32 %v905, %v903
        %v907 = vadd.f32 %v889, %v906
        %s908 = sld [smem:[#allocation2 + $0x5c]]
        %v909 = vstv %s908
        %v910 = vmul.f32 %v909, %v903
        %v911 = vadd.f32 %v893, %v910
        %s912 = sld [smem:[#allocation2 + $0x92]]
        %v913 = vstv %s912
        %v914 = vmul.f32 %v913, %v903
        %v915 = vadd.f32 %v897, %v914
        %s916 = sld [smem:[#allocation2 + $0xc8]]
        %v917 = vstv %s916
        %v918 = vmul.f32 %v917, %v903
        %v919 = vadd.f32 %v901, %v918
        %920 = vrot.lane.b32.xlu0 %v867, 118
        %v921 = vpop.permute.xlu0 %920
        %s922 = sld [smem:[#allocation2 + $0x27]]
        %v923 = vstv %s922
        %v924 = vmul.f32 %v923, %v921
        %v925 = vadd.f32 %v907, %v924
        %s926 = sld [smem:[#allocation2 + $0x5d]]
        %v927 = vstv %s926
        %v928 = vmul.f32 %v927, %v921
        %v929 = vadd.f32 %v911, %v928
        %s930 = sld [smem:[#allocation2 + $0x93]]
        %v931 = vstv %s930
        %v932 = vmul.f32 %v931, %v921
        %v933 = vadd.f32 %v915, %v932
        %s934 = sld [smem:[#allocation2 + $0xc9]]
        %v935 = vstv %s934
        %v936 = vmul.f32 %v935, %v921
        %v937 = vadd.f32 %v919, %v936
        %938 = vrot.lane.b32.xlu0 %v867, 117
        %v939 = vpop.permute.xlu0 %938
        %s940 = sld [smem:[#allocation2 + $0x28]]
        %v941 = vstv %s940
        %v942 = vmul.f32 %v941, %v939
        %v943 = vadd.f32 %v925, %v942
        %s944 = sld [smem:[#allocation2 + $0x5e]]
        %v945 = vstv %s944
        %v946 = vmul.f32 %v945, %v939
        %v947 = vadd.f32 %v929, %v946
        %s948 = sld [smem:[#allocation2 + $0x94]]
        %v949 = vstv %s948
        %v950 = vmul.f32 %v949, %v939
        %v951 = vadd.f32 %v933, %v950
        %s952 = sld [smem:[#allocation2 + $0xca]]
        %v953 = vstv %s952
        %v954 = vmul.f32 %v953, %v939
        %v955 = vadd.f32 %v937, %v954
        %956 = vrot.lane.b32.xlu0 %v867, 116
        %v957 = vpop.permute.xlu0 %956
        %s958 = sld [smem:[#allocation2 + $0x29]]
        %v959 = vstv %s958
        %v960 = vmul.f32 %v959, %v957
        %v961 = vadd.f32 %v943, %v960
        %s962 = sld [smem:[#allocation2 + $0x5f]]
        %v963 = vstv %s962
        %v964 = vmul.f32 %v963, %v957
        %v965 = vadd.f32 %v947, %v964
        %s966 = sld [smem:[#allocation2 + $0x95]]
        %v967 = vstv %s966
        %v968 = vmul.f32 %v967, %v957
        %v969 = vadd.f32 %v951, %v968
        %s970 = sld [smem:[#allocation2 + $0xcb]]
        %v971 = vstv %s970
        %v972 = vmul.f32 %v971, %v957
        %v973 = vadd.f32 %v955, %v972
        %974 = vrot.lane.b32.xlu0 %v867, 108
        %v975 = vpop.permute.xlu0 %974
        %s976 = sld [smem:[#allocation2 + $0x2a]]
        %v977 = vstv %s976
        %v978 = vmul.f32 %v977, %v975
        %v979 = vadd.f32 %v961, %v978
        %s980 = sld [smem:[#allocation2 + $0x60]]
        %v981 = vstv %s980
        %v982 = vmul.f32 %v981, %v975
        %v983 = vadd.f32 %v965, %v982
        %s984 = sld [smem:[#allocation2 + $0x96]]
        %v985 = vstv %s984
        %v986 = vmul.f32 %v985, %v975
        %v987 = vadd.f32 %v969, %v986
        %s988 = sld [smem:[#allocation2 + $0xcc]]
        %v989 = vstv %s988
        %v990 = vmul.f32 %v989, %v975
        %v991 = vadd.f32 %v973, %v990
        %992 = vrot.lane.b32.xlu0 %v867, 107
        %v993 = vpop.permute.xlu0 %992
        %s994 = sld [smem:[#allocation2 + $0x2b]]
        %v995 = vstv %s994
        %v996 = vmul.f32 %v995, %v993
        %v997 = vadd.f32 %v979, %v996
        %s998 = sld [smem:[#allocation2 + $0x61]]
        %v999 = vstv %s998
        %v1000 = vmul.f32 %v999, %v993
        %v1001 = vadd.f32 %v983, %v1000
        %s1002 = sld [smem:[#allocation2 + $0x97]]
        %v1003 = vstv %s1002
        %v1004 = vmul.f32 %v1003, %v993
        %v1005 = vadd.f32 %v987, %v1004
        %s1006 = sld [smem:[#allocation2 + $0xcd]]
        %v1007 = vstv %s1006
        %v1008 = vmul.f32 %v1007, %v993
        %v1009 = vadd.f32 %v991, %v1008
        %1010 = vrot.lane.b32.xlu0 %v867, 106
        %v1011 = vpop.permute.xlu0 %1010
        %s1012 = sld [smem:[#allocation2 + $0x2c]]
        %v1013 = vstv %s1012
        %v1014 = vmul.f32 %v1013, %v1011
        %v1015 = vadd.f32 %v997, %v1014
        %s1016 = sld [smem:[#allocation2 + $0x62]]
        %v1017 = vstv %s1016
        %v1018 = vmul.f32 %v1017, %v1011
        %v1019 = vadd.f32 %v1001, %v1018
        %s1020 = sld [smem:[#allocation2 + $0x98]]
        %v1021 = vstv %s1020
        %v1022 = vmul.f32 %v1021, %v1011
        %v1023 = vadd.f32 %v1005, %v1022
        %s1024 = sld [smem:[#allocation2 + $0xce]]
        %v1025 = vstv %s1024
        %v1026 = vmul.f32 %v1025, %v1011
        %v1027 = vadd.f32 %v1009, %v1026
        %v1028 = vld [vmem:[%s705 + $0x2] sm:$0xff]
        %s1029 = sld [smem:[#allocation2 + $0x2d]]
        %v1030 = vstv %s1029
        %v1031 = vmul.f32 %v1030, %v1028
        %v1032 = vadd.f32 %v1015, %v1031
        %s1033 = sld [smem:[#allocation2 + $0x63]]
        %v1034 = vstv %s1033
        %v1035 = vmul.f32 %v1034, %v1028
        %v1036 = vadd.f32 %v1019, %v1035
        %s1037 = sld [smem:[#allocation2 + $0x99]]
        %v1038 = vstv %s1037
        %v1039 = vmul.f32 %v1038, %v1028
        %v1040 = vadd.f32 %v1023, %v1039
        %s1041 = sld [smem:[#allocation2 + $0xcf]]
        %v1042 = vstv %s1041
        %v1043 = vmul.f32 %v1042, %v1028
        %v1044 = vadd.f32 %v1027, %v1043
        %1045 = vrot.lane.b32.xlu0 %v1028, 127
        %v1046 = vpop.permute.xlu0 %1045
        %s1047 = sld [smem:[#allocation2 + $0x2e]]
        %v1048 = vstv %s1047
        %v1049 = vmul.f32 %v1048, %v1046
        %v1050 = vadd.f32 %v1032, %v1049
        %s1051 = sld [smem:[#allocation2 + $0x64]]
        %v1052 = vstv %s1051
        %v1053 = vmul.f32 %v1052, %v1046
        %v1054 = vadd.f32 %v1036, %v1053
        %s1055 = sld [smem:[#allocation2 + $0x9a]]
        %v1056 = vstv %s1055
        %v1057 = vmul.f32 %v1056, %v1046
        %v1058 = vadd.f32 %v1040, %v1057
        %s1059 = sld [smem:[#allocation2 + $0xd0]]
        %v1060 = vstv %s1059
        %v1061 = vmul.f32 %v1060, %v1046
        %v1062 = vadd.f32 %v1044, %v1061
        %1063 = vrot.lane.b32.xlu0 %v1028, 126
        %v1064 = vpop.permute.xlu0 %1063
        %s1065 = sld [smem:[#allocation2 + $0x2f]]
        %v1066 = vstv %s1065
        %v1067 = vmul.f32 %v1066, %v1064
        %v1068 = vadd.f32 %v1050, %v1067
        %s1069 = sld [smem:[#allocation2 + $0x65]]
        %v1070 = vstv %s1069
        %v1071 = vmul.f32 %v1070, %v1064
        %v1072 = vadd.f32 %v1054, %v1071
        %s1073 = sld [smem:[#allocation2 + $0x9b]]
        %v1074 = vstv %s1073
        %v1075 = vmul.f32 %v1074, %v1064
        %v1076 = vadd.f32 %v1058, %v1075
        %s1077 = sld [smem:[#allocation2 + $0xd1]]
        %v1078 = vstv %s1077
        %v1079 = vmul.f32 %v1078, %v1064
        %v1080 = vadd.f32 %v1062, %v1079
        %1081 = vrot.lane.b32.xlu0 %v1028, 118
        %v1082 = vpop.permute.xlu0 %1081
        %s1083 = sld [smem:[#allocation2 + $0x30]]
        %v1084 = vstv %s1083
        %v1085 = vmul.f32 %v1084, %v1082
        %v1086 = vadd.f32 %v1068, %v1085
        %s1087 = sld [smem:[#allocation2 + $0x66]]
        %v1088 = vstv %s1087
        %v1089 = vmul.f32 %v1088, %v1082
        %v1090 = vadd.f32 %v1072, %v1089
        %s1091 = sld [smem:[#allocation2 + $0x9c]]
        %v1092 = vstv %s1091
        %v1093 = vmul.f32 %v1092, %v1082
        %v1094 = vadd.f32 %v1076, %v1093
        %s1095 = sld [smem:[#allocation2 + $0xd2]]
        %v1096 = vstv %s1095
        %v1097 = vmul.f32 %v1096, %v1082
        %v1098 = vadd.f32 %v1080, %v1097
        %1099 = vrot.lane.b32.xlu0 %v1028, 117
        %v1100 = vpop.permute.xlu0 %1099
        %s1101 = sld [smem:[#allocation2 + $0x31]]
        %v1102 = vstv %s1101
        %v1103 = vmul.f32 %v1102, %v1100
        %v1104 = vadd.f32 %v1086, %v1103
        %s1105 = sld [smem:[#allocation2 + $0x67]]
        %v1106 = vstv %s1105
        %v1107 = vmul.f32 %v1106, %v1100
        %v1108 = vadd.f32 %v1090, %v1107
        %s1109 = sld [smem:[#allocation2 + $0x9d]]
        %v1110 = vstv %s1109
        %v1111 = vmul.f32 %v1110, %v1100
        %v1112 = vadd.f32 %v1094, %v1111
        %s1113 = sld [smem:[#allocation2 + $0xd3]]
        %v1114 = vstv %s1113
        %v1115 = vmul.f32 %v1114, %v1100
        %v1116 = vadd.f32 %v1098, %v1115
        %1117 = vrot.lane.b32.xlu0 %v1028, 116
        %v1118 = vpop.permute.xlu0 %1117
        %s1119 = sld [smem:[#allocation2 + $0x32]]
        %v1120 = vstv %s1119
        %v1121 = vmul.f32 %v1120, %v1118
        %v1122 = vadd.f32 %v1104, %v1121
        %s1123 = sld [smem:[#allocation2 + $0x68]]
        %v1124 = vstv %s1123
        %v1125 = vmul.f32 %v1124, %v1118
        %v1126 = vadd.f32 %v1108, %v1125
        %s1127 = sld [smem:[#allocation2 + $0x9e]]
        %v1128 = vstv %s1127
        %v1129 = vmul.f32 %v1128, %v1118
        %v1130 = vadd.f32 %v1112, %v1129
        %s1131 = sld [smem:[#allocation2 + $0xd4]]
        %v1132 = vstv %s1131
        %v1133 = vmul.f32 %v1132, %v1118
        %v1134 = vadd.f32 %v1116, %v1133
        %1135 = vrot.lane.b32.xlu0 %v1028, 108
        %v1136 = vpop.permute.xlu0 %1135
        %s1137 = sld [smem:[#allocation2 + $0x33]]
        %v1138 = vstv %s1137
        %v1139 = vmul.f32 %v1138, %v1136
        %v1140 = vadd.f32 %v1122, %v1139
        %s1141 = sld [smem:[#allocation2 + $0x69]]
        %v1142 = vstv %s1141
        %v1143 = vmul.f32 %v1142, %v1136
        %v1144 = vadd.f32 %v1126, %v1143
        %s1145 = sld [smem:[#allocation2 + $0x9f]]
        %v1146 = vstv %s1145
        %v1147 = vmul.f32 %v1146, %v1136
        %v1148 = vadd.f32 %v1130, %v1147
        %s1149 = sld [smem:[#allocation2 + $0xd5]]
        %v1150 = vstv %s1149
        %v1151 = vmul.f32 %v1150, %v1136
        %v1152 = vadd.f32 %v1134, %v1151
        %1153 = vrot.lane.b32.xlu0 %v1028, 107
        %v1154 = vpop.permute.xlu0 %1153
        %s1155 = sld [smem:[#allocation2 + $0x34]]
        %v1156 = vstv %s1155
        %v1157 = vmul.f32 %v1156, %v1154
        %v1158 = vadd.f32 %v1140, %v1157
        %s1159 = sld [smem:[#allocation2 + $0x6a]]
        %v1160 = vstv %s1159
        %v1161 = vmul.f32 %v1160, %v1154
        %v1162 = vadd.f32 %v1144, %v1161
        %s1163 = sld [smem:[#allocation2 + $0xa0]]
        %v1164 = vstv %s1163
        %v1165 = vmul.f32 %v1164, %v1154
        %v1166 = vadd.f32 %v1148, %v1165
        %s1167 = sld [smem:[#allocation2 + $0xd6]]
        %v1168 = vstv %s1167
        %v1169 = vmul.f32 %v1168, %v1154
        %v1170 = vadd.f32 %v1152, %v1169
        %1171 = vrot.lane.b32.xlu0 %v1028, 106
        %v1172 = vpop.permute.xlu0 %1171
        %s1173 = sld [smem:[#allocation2 + $0x35]]
        %v1174 = vstv %s1173
        %v1175 = vmul.f32 %v1174, %v1172
        %v1176 = vadd.f32 %v1158, %v1175
        %s1177 = sld [smem:[#allocation2 + $0x6b]]
        %v1178 = vstv %s1177
        %v1179 = vmul.f32 %v1178, %v1172
        %v1180 = vadd.f32 %v1162, %v1179
        %s1181 = sld [smem:[#allocation2 + $0xa1]]
        %v1182 = vstv %s1181
        %v1183 = vmul.f32 %v1182, %v1172
        %v1184 = vadd.f32 %v1166, %v1183
        %s1185 = sld [smem:[#allocation2 + $0xd7]]
        %v1186 = vstv %s1185
        %v1187 = vmul.f32 %v1186, %v1172
        %v1188 = vadd.f32 %v1170, %v1187
        %v1190 = vlaneseq
        %v1191 = vshrl.u32 %v1190, 7
        %v1192 = vsub.s32 0, %v1191
        %v1193 = vrot.slane %v221, %v1192
        %v1195 = vmul.f32 %v1176, %v1193
        %1196 = vadd.xlane.f32.xlu0 %v1195
        %v1197 = vpop.xlane.xlu0 %1196
        %v1198 = vrot.slane %v1197, 4
        %v1199 = vadd.f32 %v1197, %v1198
        %v1200 = vrot.slane %v1199, 2
        %v1201 = vadd.f32 %v1199, %v1200
        %v1202 = vrot.slane %v1201, 1
        %v1203 = vadd.f32 %v1201, %v1202
        %s1204 = vtos %v1203
        %s1205 = smul.f32 %s1204, 0.001953125
        %v1206 = vstv %s1205
        %v1207 = vsub.f32 %v1176, %v1206
        %v1208 = vmul.f32 %v1207, %v1193
        %v1209 = vmul.f32 %v1208, %v1208
        %1210 = vadd.xlane.f32.xlu0 %v1209
        %v1211 = vpop.xlane.xlu0 %1210
        %v1212 = vrot.slane %v1211, 4
        %v1213 = vadd.f32 %v1211, %v1212
        %v1214 = vrot.slane %v1213, 2
        %v1215 = vadd.f32 %v1213, %v1214
        %v1216 = vrot.slane %v1215, 1
        %v1217 = vadd.f32 %v1215, %v1216
        %s1218 = vtos %v1217
        %s1219 = smul.f32 %s1218, 0.001953125
        %s1220 = sadd.f32 %s1219, 1e-05
        %v1221 = vstv %s1220
        %v1222 = vrsqrt.pop %v1221
        %s1223 = vtos %v1222
        %v1224 = vstv %s1223
        %v1225 = vmul.f32 %v1207, %v1224
        %vm1226 = vcmp.ge.f32.partialorder %v1225, 0.0
        %v1227 = vmul.f32 %v1225, 0.01
        %v1228 = vsel %vm1226, %v1225, %v1227
        %v1229 = vmul.f32 %v1180, %v1193
        %1230 = vadd.xlane.f32.xlu0 %v1229
        %v1231 = vpop.xlane.xlu0 %1230
        %v1232 = vrot.slane %v1231, 4
        %v1233 = vadd.f32 %v1231, %v1232
        %v1234 = vrot.slane %v1233, 2
        %v1235 = vadd.f32 %v1233, %v1234
        %v1236 = vrot.slane %v1235, 1
        %v1237 = vadd.f32 %v1235, %v1236
        %s1238 = vtos %v1237
        %s1239 = smul.f32 %s1238, 0.001953125
        %v1240 = vstv %s1239
        %v1241 = vsub.f32 %v1180, %v1240
        %v1242 = vmul.f32 %v1241, %v1193
        %v1243 = vmul.f32 %v1242, %v1242
        %1244 = vadd.xlane.f32.xlu0 %v1243
        %v1245 = vpop.xlane.xlu0 %1244
        %v1246 = vrot.slane %v1245, 4
        %v1247 = vadd.f32 %v1245, %v1246
        %v1248 = vrot.slane %v1247, 2
        %v1249 = vadd.f32 %v1247, %v1248
        %v1250 = vrot.slane %v1249, 1
        %v1251 = vadd.f32 %v1249, %v1250
        %s1252 = vtos %v1251
        %s1253 = smul.f32 %s1252, 0.001953125
        %s1254 = sadd.f32 %s1253, 1e-05
        %v1255 = vstv %s1254
        %v1256 = vrsqrt.pop %v1255
        %s1257 = vtos %v1256
        %v1258 = vstv %s1257
        %v1259 = vmul.f32 %v1241, %v1258
        %vm1260 = vcmp.ge.f32.partialorder %v1259, 0.0
        %v1261 = vmul.f32 %v1259, 0.01
        %v1262 = vsel %vm1260, %v1259, %v1261
        %v1263 = vmul.f32 %v1184, %v1193
        %1264 = vadd.xlane.f32.xlu0 %v1263
        %v1265 = vpop.xlane.xlu0 %1264
        %v1266 = vrot.slane %v1265, 4
        %v1267 = vadd.f32 %v1265, %v1266
        %v1268 = vrot.slane %v1267, 2
        %v1269 = vadd.f32 %v1267, %v1268
        %v1270 = vrot.slane %v1269, 1
        %v1271 = vadd.f32 %v1269, %v1270
        %s1272 = vtos %v1271
        %s1273 = smul.f32 %s1272, 0.001953125
        %v1274 = vstv %s1273
        %v1275 = vsub.f32 %v1184, %v1274
        %v1276 = vmul.f32 %v1275, %v1193
        %v1277 = vmul.f32 %v1276, %v1276
        %1278 = vadd.xlane.f32.xlu0 %v1277
        %v1279 = vpop.xlane.xlu0 %1278
        %v1280 = vrot.slane %v1279, 4
        %v1281 = vadd.f32 %v1279, %v1280
        %v1282 = vrot.slane %v1281, 2
        %v1283 = vadd.f32 %v1281, %v1282
        %v1284 = vrot.slane %v1283, 1
        %v1285 = vadd.f32 %v1283, %v1284
        %s1286 = vtos %v1285
        %s1287 = smul.f32 %s1286, 0.001953125
        %s1288 = sadd.f32 %s1287, 1e-05
        %v1289 = vstv %s1288
        %v1290 = vrsqrt.pop %v1289
        %s1291 = vtos %v1290
        %v1292 = vstv %s1291
        %v1293 = vmul.f32 %v1275, %v1292
        %vm1294 = vcmp.ge.f32.partialorder %v1293, 0.0
        %v1295 = vmul.f32 %v1293, 0.01
        %v1296 = vsel %vm1294, %v1293, %v1295
        %v1297 = vmul.f32 %v1188, %v1193
        %1298 = vadd.xlane.f32.xlu0 %v1297
        %v1299 = vpop.xlane.xlu0 %1298
        %v1300 = vrot.slane %v1299, 4
        %v1301 = vadd.f32 %v1299, %v1300
        %v1302 = vrot.slane %v1301, 2
        %v1303 = vadd.f32 %v1301, %v1302
        %v1304 = vrot.slane %v1303, 1
        %v1305 = vadd.f32 %v1303, %v1304
        %s1306 = vtos %v1305
        %s1307 = smul.f32 %s1306, 0.001953125
        %v1308 = vstv %s1307
        %v1309 = vsub.f32 %v1188, %v1308
        %v1310 = vmul.f32 %v1309, %v1193
        %v1311 = vmul.f32 %v1310, %v1310
        %1312 = vadd.xlane.f32.xlu0 %v1311
        %v1313 = vpop.xlane.xlu0 %1312
        %v1314 = vrot.slane %v1313, 4
        %v1315 = vadd.f32 %v1313, %v1314
        %v1316 = vrot.slane %v1315, 2
        %v1317 = vadd.f32 %v1315, %v1316
        %v1318 = vrot.slane %v1317, 1
        %v1319 = vadd.f32 %v1317, %v1318
        %s1320 = vtos %v1319
        %s1321 = smul.f32 %s1320, 0.001953125
        %s1322 = sadd.f32 %s1321, 1e-05
        %v1323 = vstv %s1322
        %v1324 = vrsqrt.pop %v1323
        %s1325 = vtos %v1324
        %v1326 = vstv %s1325
        %v1327 = vmul.f32 %v1309, %v1326
        %vm1328 = vcmp.ge.f32.partialorder %v1327, 0.0
        %v1329 = vmul.f32 %v1327, 0.01
        %v1330 = vsel %vm1328, %v1327, %v1329
        %s1331 = sld [smem:[#allocation2 + $0xd8]]
        %v1332 = vstv %s1331
        %v1333 = vmul.f32 %v1332, %v1228
        %v1334 = vadd.f32 %v1333, 0.0
        %s1335 = sld [smem:[#allocation2 + $0xdc]]
        %v1336 = vstv %s1335
        %v1337 = vmul.f32 %v1336, %v1228
        %v1338 = vadd.f32 %v1337, 0.0
        %s1339 = sld [smem:[#allocation2 + $0xd9]]
        %v1340 = vstv %s1339
        %v1341 = vmul.f32 %v1340, %v1262
        %v1342 = vadd.f32 %v1334, %v1341
        %s1343 = sld [smem:[#allocation2 + $0xdd]]
        %v1344 = vstv %s1343
        %v1345 = vmul.f32 %v1344, %v1262
        %v1346 = vadd.f32 %v1338, %v1345
        %s1347 = sld [smem:[#allocation2 + $0xda]]
        %v1348 = vstv %s1347
        %v1349 = vmul.f32 %v1348, %v1296
        %v1350 = vadd.f32 %v1342, %v1349
        %s1351 = sld [smem:[#allocation2 + $0xde]]
        %v1352 = vstv %s1351
        %v1353 = vmul.f32 %v1352, %v1296
        %v1354 = vadd.f32 %v1346, %v1353
        %s1355 = sld [smem:[#allocation2 + $0xdb]]
        %v1356 = vstv %s1355
        %v1357 = vmul.f32 %v1356, %v1330
        %v1358 = vadd.f32 %v1350, %v1357
        %s1359 = sld [smem:[#allocation2 + $0xdf]]
        %v1360 = vstv %s1359
        %v1361 = vmul.f32 %v1360, %v1330
        %v1362 = vadd.f32 %v1354, %v1361
        %v1363 = vxor.u32 %v1358, 2147483648
        %v1364 = vmul.f32 %v1363, 1.442695
        %v1365 = vpow.pop %v1364
        %v1366 = vadd.f32 %v1365, 1.0
        %v1367 = vrcp.pop %v1366
        %v1368 = vmul.f32 1.0, %v1367
        %v1369 = vmul.f32 %v1368, %v1362
        %v1370 = vxor.u32 %v1369, 2147483648
        %v1371 = vmul.f32 %v1370, 1.442695
        %v1372 = vpow.pop %v1371
        %v1373 = vadd.f32 %v1372, 1.0
        %v1374 = vrcp.pop %v1373
        %v1375 = vmul.f32 1.0, %v1374
        %v1376 = vmul.f32 %v1368, %v1375
        %v1377 = vmul.f32 %v1228, %v1376
        %1378 = vst [vmem:[%s208] sm:$0xff] %v1377
        %v1379 = vmul.f32 %v1262, %v1376
        %s1380 = scalar_lea.vmem %s208, 8 [#allocation5]
        %1381 = vst [vmem:[%s1380] sm:$0xff] %v1379
        %v1382 = vmul.f32 %v1296, %v1376
        %s1383 = scalar_lea.vmem %s208, 16 [#allocation5]
        %1384 = vst [vmem:[%s1383] sm:$0xff] %v1382
        %v1385 = vmul.f32 %v1330, %v1376
        %s1386 = scalar_lea.vmem %s208, 24 [#allocation5]
        %1387 = vst [vmem:[%s1386] sm:$0xff] %v1385
        %s1388 = sld [smem:[#allocation2 + $0xe8]]
        %v1389 = vstv %s1388
        %v1390 = vadd.f32 %v1389, 0.0
        %s1391 = sld [smem:[#allocation2 + $0xe0]]
        %v1392 = vstv %s1391
        %v1393 = vmul.f32 %v1392, %v1377
        %v1394 = vadd.f32 %v1390, %v1393
        %s1395 = sld [smem:[#allocation2 + $0xe1]]
        %v1396 = vstv %s1395
        %v1397 = vmul.f32 %v1396, %v1379
        %v1398 = vadd.f32 %v1394, %v1397
        %s1399 = sld [smem:[#allocation2 + $0xe2]]
        %v1400 = vstv %s1399
        %v1401 = vmul.f32 %v1400, %v1382
        %v1402 = vadd.f32 %v1398, %v1401
        %s1403 = sld [smem:[#allocation2 + $0xe3]]
        %v1404 = vstv %s1403
        %v1405 = vmul.f32 %v1404, %v1385
        %v1406 = vadd.f32 %v1402, %v1405
        %1407 = vst [vmem:[%s215] sm:$0xff] %v1406
        %s1408 = sld [smem:[#allocation2 + $0xe9]]
        %v1409 = vstv %s1408
        %v1410 = vadd.f32 %v1409, 0.0
        %s1411 = sld [smem:[#allocation2 + $0xe4]]
        %v1412 = vstv %s1411
        %v1413 = vmul.f32 %v1412, %v1377
        %v1414 = vadd.f32 %v1410, %v1413
        %s1415 = sld [smem:[#allocation2 + $0xe5]]
        %v1416 = vstv %s1415
        %v1417 = vmul.f32 %v1416, %v1379
        %v1418 = vadd.f32 %v1414, %v1417
        %s1419 = sld [smem:[#allocation2 + $0xe6]]
        %v1420 = vstv %s1419
        %v1421 = vmul.f32 %v1420, %v1382
        %v1422 = vadd.f32 %v1418, %v1421
        %s1423 = sld [smem:[#allocation2 + $0xe7]]
        %v1424 = vstv %s1423
        %v1425 = vmul.f32 %v1424, %v1385
        %v1426 = vadd.f32 %v1422, %v1425
        %s1427 = scalar_lea.vmem %s215, 8 [#allocation6]
        %1428 = vst [vmem:[%s1427] sm:$0xff] %v1426
        %s1429 = sand.u32 %s99, 1
        %s1430 = scalar_lea.sflag [#allocation3], %s1429
        %s1431 = sand.u32 %s99, 1
        %s1432 = smul.addr %s1431, 32
        %s1433 = scalar_lea.vmem [#allocation5], %s1432
        %s1434 = sand.u32 %s125, 1
        %s1435 = scalar_lea.sflag [#allocation7], %s1434
        %s1436 = sand.u32 %s125, 1
        %s1437 = smul.addr %s1436, 16
        %s1438 = scalar_lea.vmem [#allocation6], %s1437
        // Predicated region
        $region37: #{tpu_custom_call.1} parent=31 // pred_check
          %p1439 = pneg %p109
        $region38: #{tpu_custom_call.1} parent=31 // pred_check_branch
          %1441 = sbr.rel (%p1439) target = $region40
        $region39: #{tpu_custom_call.1} parent=31 // pred_region
          %s1443 = ssub.s32 512, 512
          %1444 = vsyncadd %s1430, %s1443
          %s1445 = smul.addr %s23, 4
          %s1446 = smul.addr %s1445, 128
          %s1447 = scalar_lea.hbm %s3, %s1446
          %s1448 = sshll.u32 %s1433, 4
          %s1449 = int_to_ptr.vmem [resolvable:$true] %s1448
          %1454 = dma.vmem_to_hbm [thread:$0]  %s1449, 512, %s1447, %s1430, 128, 128, 8
        $region40: #{tpu_custom_call.1} parent=31 // pred_fallthru
          _
        // Predicated region
        $region41: #{tpu_custom_call.1} parent=31 // pred_check
          %p1455 = pneg %p135
        $region42: #{tpu_custom_call.1} parent=31 // pred_check_branch
          %1457 = sbr.rel (%p1455) target = $region44
        $region43: #{tpu_custom_call.1} parent=31 // pred_region
          %s1459 = ssub.s32 256, 256
          %1460 = vsyncadd %s1435, %s1459
          %s1461 = smul.addr %s23, 2
          %s1462 = smul.addr %s1461, 128
          %s1463 = scalar_lea.hbm %s4, %s1462
          %s1464 = sshll.u32 %s1438, 4
          %s1465 = int_to_ptr.vmem [resolvable:$true] %s1464
          %1470 = dma.vmem_to_hbm [thread:$0]  %s1465, 256, %s1463, %s1435, 128, 128, 8
        $region44: #{tpu_custom_call.1} parent=31 // pred_fallthru
          _
      $region32: #{tpu_custom_call.1} parent=5 // pred_fallthru
        _
      %p1471 = scmp.le.s32.totalorder 2, %s18
      // Predicated region
      $region45: #{tpu_custom_call.1} parent=5 // pred_check
        %p1472 = pneg %p1471
      $region46: #{tpu_custom_call.1} parent=5 // pred_check_branch
        %1474 = sbr.rel (%p1472) target = $region48
      $region47: #{tpu_custom_call.1} parent=5 // pred_region
        %s1475 = ssub.s32 %s18, 2
        // Predicated region
        $region49: #{tpu_custom_call.1} parent=47 // pred_check
          %p1476 = pneg %p115
        $region50: #{tpu_custom_call.1} parent=47 // pred_check_branch
          %1478 = sbr.rel (%p1476) target = $region52
        $region51: #{tpu_custom_call.1} parent=47 // pred_region
          %s1479 = sand.u32 %s100, 1
          %s1480 = scalar_lea.sflag [#allocation3], %s1479
          %s1481 = sand.u32 %s100, 1
          %s1482 = smul.addr %s1481, 32
          %s1483 = scalar_lea.vmem [#allocation5], %s1482
          %1484 = dma.done %s1480, 512
        $region52: #{tpu_custom_call.1} parent=47 // pred_fallthru
          _
        // Predicated region
        $region53: #{tpu_custom_call.1} parent=47 // pred_check
          %p1485 = pneg %p141
        $region54: #{tpu_custom_call.1} parent=47 // pred_check_branch
          %1487 = sbr.rel (%p1485) target = $region56
        $region55: #{tpu_custom_call.1} parent=47 // pred_region
          %s1488 = sand.u32 %s126, 1
          %s1489 = scalar_lea.sflag [#allocation7], %s1488
          %s1490 = sand.u32 %s126, 1
          %s1491 = smul.addr %s1490, 16
          %s1492 = scalar_lea.vmem [#allocation6], %s1491
          %1493 = dma.done %s1489, 256
        $region56: #{tpu_custom_call.1} parent=47 // pred_fallthru
          _
      $region48: #{tpu_custom_call.1} parent=5 // pred_fallthru
        _
    $region6: #{tpu_custom_call.1} parent=1 // loop_footer
      %s22 = sadd.s32 1, %s18
    $region7: #{tpu_custom_call.1} parent=1 // loop_footer_branch
      %17 = sbr.rel target = $region3
    $region8: #{tpu_custom_call.1} parent=1 // loop_exit
      _
    %1494 = vsyncpa [#allocation3], 1
    %s1495 = scalar_lea.sflag [#allocation3], 1
    %1496 = vsyncpa %s1495, 1
    %1497 = vsyncpa [#allocation7], 1
    %s1498 = scalar_lea.sflag [#allocation7], 1
    %1499 = vsyncpa %s1498, 1
    %1500 = vsyncpa [#allocation4], 1
    %s1501 = scalar_lea.sflag [#allocation4], 1
    %1502 = vsyncpa %s1501, 1

</llo_original>
